<compile_context>
chip_gen: v7x
topology: tpu7x:2x2x1
jax: 0.10.0
libtpu: 0.0.40
codegen_flags: <defaults>
</compile_context>

<pallas_src>
import functools

import jax
import jax.numpy as jnp
from jax.experimental import pallas as pl
from jax.experimental.pallas import tpu as pltpu

# circle-loss hyper-parameters (defaults of the PyTorch module)
LOG_SCALE = 16.0
POS_OPT = 0.1
NEG_OPT = 1.4
POS_MARGIN = 0.1
NEG_MARGIN = 1.4


# ---------------------------------------------------------------- helpers (used in-kernel and in reference)
def _softplus(x):
    # matches torch.nn.functional.softplus (beta=1, threshold=20)
    return jnp.where(x > 20.0, x, jnp.log1p(jnp.exp(jnp.minimum(x, 20.0))))


def _lse(x, axis):
    m = jnp.max(x, axis=axis, keepdims=True)
    return m + jnp.log(jnp.sum(jnp.exp(x - m), axis=axis, keepdims=True))


def _pack_lanes(values):
    """Pack a handful of scalars into lanes 0..len(values)-1 of an aligned (8,128) f32 slab."""
    lane = jax.lax.broadcasted_iota(jnp.int32, (8, 128), 1)
    packed = jnp.zeros((8, 128), jnp.float32)
    for i, v in enumerate(values):
        packed = jnp.where(lane == i, v, packed)
    return packed


# ---------------------------------------------------------------- coarse kernel (circle loss + euclid recall)
# grid = (B, N // TM).  Per batch b the row tiles are visited in order; column-direction
# statistics are carried in `col_acc` (VMEM), row-direction scalars in `acc_s` (SMEM).
def _coarse_kernel(src_ref, tgt_ref, pos_ref, neg_ref, out_ref, col_acc, acc_s):
    nt = pl.program_id(1)
    n_tiles = pl.num_programs(1)

    TM, Mm = pos_ref.shape  # block is (TM, M) after the squeezed batch dim
    zero = jnp.float32(0.0)

    @pl.when(nt == 0)
    def _init():
        acc_s[0] = zero   # sum(loss_row * row_sel)
        acc_s[1] = zero   # sum(row_sel)
        acc_s[2] = zero   # pred_true
        acc_s[3] = zero   # total (rows with any positive)
        col_acc[...] = jnp.zeros_like(col_acc)
        neg_big = jnp.full((1, Mm), -1e30, jnp.float32)
        col_acc[0:1, :] = neg_big   # running column max of x_pos
        col_acc[2:3, :] = neg_big   # running column max of x_neg

    s = src_ref[...]                          # (TM, F) f32
    t = tgt_ref[...]                          # (M,  F) f32
    pos = pos_ref[...].astype(jnp.float32)    # (TM, M)  (bf16 in HBM, exact for binary masks)
    neg = neg_ref[...].astype(jnp.float32)

    # squared pairwise distances; HIGHEST precision so kernel & reference argmin/loss agree
    ssq = jnp.sum(s * s, axis=-1, keepdims=True)              # (TM, 1)
    tsq = jnp.sum(t * t, axis=-1)                             # (M,)
    st = jax.lax.dot_general(s, t, (((1,), (1,)), ((), ())),
                             preferred_element_type=jnp.float32,
                             precision=jax.lax.Precision.HIGHEST)   # (TM, M)
    d2 = jnp.maximum(ssq + tsq[None, :] - 2.0 * st, 1e-12)
    feats_dist = jnp.sqrt(d2)

    pos_f = (pos > 0.0).astype(jnp.float32)
    neg_f = (neg > 0.0).astype(jnp.float32)

    pos_weight = jnp.maximum(feats_dist - 1e5 * (1.0 - pos_f) - POS_OPT, 0.0) * pos
    neg_weight = jnp.maximum(NEG_OPT - (feats_dist + 1e5 * (1.0 - neg_f)), 0.0)

    x_pos = LOG_SCALE * (feats_dist - POS_MARGIN) * pos_weight
    x_neg = LOG_SCALE * (NEG_MARGIN - feats_dist) * neg_weight

    ones_m = jnp.ones((Mm, 1), jnp.float32)

    def _rowsum(x):  # lane-axis reduction offloaded to the (otherwise idle) MXU
        return jax.lax.dot_general(x, ones_m, (((1,), (0,)), ((), ())),
                                   preferred_element_type=jnp.float32)

    # ---- row direction (local to this row tile) --------------------------------
    rmax_p = jnp.max(x_pos, axis=-1, keepdims=True)           # (TM, 1)
    e_p = jnp.exp(x_pos - rmax_p)                             # single EUP pass, reused below
    lse_p_row = rmax_p + jnp.log(_rowsum(e_p))

    rmax_n = jnp.max(x_neg, axis=-1, keepdims=True)
    e_n = jnp.exp(x_neg - rmax_n)
    lse_n_row = rmax_n + jnp.log(_rowsum(e_n))

    row_pos = _rowsum(pos_f)                                  # exact (integer) counts
    row_neg = _rowsum(neg_f)
    row_sel = ((row_pos > 0.0) & (row_neg > 0.0)).astype(jnp.float32)

    loss_row = _softplus(lse_p_row + lse_n_row) / LOG_SCALE

    # euclid recall (full M is present in every row tile)
    iota_m = jax.lax.broadcasted_iota(jnp.int32, d2.shape, 1)
    min_d = jnp.min(d2, axis=-1, keepdims=True)
    sel = jnp.min(jnp.where(d2 == min_d, iota_m, Mm), axis=-1, keepdims=True)  # first-index argmin
    pred_true = jnp.sum(pos_f * (iota_m == sel).astype(jnp.float32))
    total = jnp.sum((row_pos > 0.0).astype(jnp.float32))

    acc_s[0] = acc_s[0] + jnp.sum(loss_row * row_sel)
    acc_s[1] = acc_s[1] + jnp.sum(row_sel)
    acc_s[2] = acc_s[2] + pred_true
    acc_s[3] = acc_s[3] + total

    # ---- column direction: online LSE accumulated across row tiles -------------
    # Tile contribution with per-column shift m*:  sum_n exp(x[n,m]-m*[m])
    #   = (w^T e)[m] * exp(G - m*[m]),  w[n] = exp(rowmax[n]-G),  G = max_n rowmax[n].
    # Reuses e_p / e_n (only ~TM extra transcendentals); exact as long as the spread of x
    # within a tile stays << 80 (always true for normalized descriptors: feats_dist <= 2).
    def _col_update(x, e, rmax, m_row, s_row):
        g = jnp.max(rmax)
        w = jnp.exp(rmax - g)                                               # (TM, 1)
        csum = jax.lax.dot_general(w, e, (((0,), (0,)), ((), ())),
                                   preferred_element_type=jnp.float32)      # (1, M)
        cmax = jnp.max(x, axis=0, keepdims=True)                            # (1, M)
        m_old = col_acc[m_row:m_row + 1, :]
        s_old = col_acc[s_row:s_row + 1, :]
        m_new = jnp.maximum(m_old, cmax)
        s_new = s_old * jnp.exp(m_old - m_new) + csum * jnp.exp(g - m_new)
        col_acc[m_row:m_row + 1, :] = m_new
        col_acc[s_row:s_row + 1, :] = s_new

    _col_update(x_pos, e_p, rmax_p, 0, 1)
    _col_update(x_neg, e_n, rmax_n, 2, 3)

    col_acc[4:5, :] = col_acc[4:5, :] + jnp.sum(pos_f, axis=0, keepdims=True)
    col_acc[5:6, :] = col_acc[5:6, :] + jnp.sum(neg_f, axis=0, keepdims=True)

    # ---- finalize: write this batch's 6 partials once, at the last row tile ----
    @pl.when(nt == n_tiles - 1)
    def _finalize():
        lse_p_col = col_acc[0:1, :] + jnp.log(col_acc[1:2, :])
        lse_n_col = col_acc[2:3, :] + jnp.log(col_acc[3:4, :])
        col_sel = ((col_acc[4:5, :] > 0.0) & (col_acc[5:6, :] > 0.0)).astype(jnp.float32)
        loss_col = _softplus(lse_p_col + lse_n_col) / LOG_SCALE
        out_ref[...] = _pack_lanes((acc_s[0], acc_s[1],
                                    jnp.sum(loss_col * col_sel), jnp.sum(col_sel),
                                    acc_s[2], acc_s[3]))


# ---------------------------------------------------------------- fine kernel (matching loss + recall)
# grid = (B, P // TP).  Lane-dense layout: scores/gt are (K+1, L+1, TP), masks (K+1, TP)/(L+1, TP)
# with the slack row/col of ones already folded in.  All statistics are simple sums over p, so
# they are accumulated in SMEM scratch and written once at the last P tile.
def _fine_kernel(score_ref, gt_ref, smpad_ref, tmpad_ref, out_ref, acc_s):
    pt = pl.program_id(1)
    n_tiles = pl.num_programs(1)
    zero = jnp.float32(0.0)

    @pl.when(pt == 0)
    def _init():
        for i in range(6):
            acc_s[i] = zero

    score = score_ref[...]        # (K1, L1, TP)
    gt = gt_ref[...]              # (K1, L1, TP)
    smp = smpad_ref[...]          # (K1, TP)  last row == 1 (slack)
    tmp = tmpad_ref[...]          # (L1, TP)  last row == 1 (slack)
    K1, L1, TP = score.shape

    # masked ground truth (== the in-place mask multiplication in the torch code)
    mask = gt * smp[:, None, :] * tmp[None, :, :]

    acc_s[0] = acc_s[0] + jnp.sum(score * mask)   # negated outside: loss numerator
    acc_s[1] = acc_s[1] + jnp.sum(mask)

    # src -> tgt: first-index argmax over l (sublane axis) of score[:K], gather masked gt
    sc_src = score[:K1 - 1, :, :]                 # (K, L1, TP)
    gt_src = mask[:K1 - 1, :, :]
    iota_l = jax.lax.broadcasted_iota(jnp.int32, sc_src.shape, 1)
    mx = jnp.max(sc_src, axis=1, keepdims=True)
    sel = jnp.min(jnp.where(sc_src == mx, iota_l, L1), axis=1, keepdims=True)
    acc_s[2] = acc_s[2] + jnp.sum(gt_src * (iota_l == sel).astype(jnp.float32))

    # tgt -> src: first-index argmax over k (leading axis) of score[:, :L].
    # K1 is small & static, so an unrolled elementwise scan over the leading axis is cheap
    # (slab slicing is free) and keeps torch's first-index tie-breaking.
    sc_tgt = score[:, :L1 - 1, :]                 # (K1, L, TP)
    gt_tgt = mask[:, :L1 - 1, :]
    best = sc_tgt[0]
    gath = gt_tgt[0]
    for k in range(1, K1):
        better = sc_tgt[k] > best
        best = jnp.where(better, sc_tgt[k], best)
        gath = jnp.where(better, gt_tgt[k], gath)
    acc_s[3] = acc_s[3] + jnp.sum(gath)

    acc_s[4] = acc_s[4] + (jnp.sum(smp) - float(TP))   # = sum(src_mask) for this tile
    acc_s[5] = acc_s[5] + (jnp.sum(tmp) - float(TP))   # = sum(tgt_mask)

    @pl.when(pt == n_tiles - 1)
    def _finalize():
        out_ref[...] = _pack_lanes(tuple(acc_s[i] for i in range(6)))


# ---------------------------------------------------------------- tiling / vmem helpers
def _pick_row_tile(n, max_tile=256):
    if n <= max_tile:
        return n
    t = (max_tile // 16) * 16          # multiple of 16 -> valid for bf16 mask blocks
    while t >= 16:
        if n % t == 0:
            return t
        t -= 16
    return n


def _pick_lane_tile(p, max_tile=512):
    if p <= max_tile:
        return p
    t = (max_tile // 128) * 128
    while t >= 128:
        if p % t == 0:
            return t
        t -= 128
    return p


def _padded_bytes(shape, itemsize):
    s = list(shape)
    s[-1] = -(-s[-1] // 128) * 128
    if len(s) >= 2:
        s[-2] = -(-s[-2] // 8) * 8
    n = itemsize
    for d in s:
        n *= d
    return n


def _vmem_limit(block_bytes):
    # double-buffered blocks + headroom for in-kernel temporaries, clamped to
    # [32 MiB (>= default scoped limit), 56 MiB (< v7x physical 64 MiB)]
    return int(min(56 << 20, max(32 << 20, 6 * block_bytes)))


# ---------------------------------------------------------------- wrapper
@functools.partial(jax.jit, static_argnames=("row_tile", "p_tile"))
def metric_loss_forward(src_desc, tgt_desc, pos_mask, neg_mask,
                        matching_scores, matching_gt, src_mask, tgt_mask,
                        row_tile=None, p_tile=None):
    B, N, F = src_desc.shape
    M = tgt_desc.shape[1]
    _, P, K1, L1 = matching_gt.shape

    tm = _pick_row_tile(N) if row_tile is None else int(row_tile)
    tp = _pick_lane_tile(P) if p_tile is None else int(p_tile)
    assert N % tm == 0 and P % tp == 0, "tile sizes must divide N / P"

    # ---- coarse: circle loss + euclid recall, row-tiled over N -----------------
    src32 = src_desc.astype(jnp.float32)
    tgt32 = tgt_desc.astype(jnp.float32)
    # binary masks are exact in bf16 -> halves the dominant HBM streams of this kernel
    pos_bf = pos_mask.astype(jnp.bfloat16)
    neg_bf = neg_mask.astype(jnp.bfloat16)

    coarse_blk = (_padded_bytes((tm, F), 4) + _padded_bytes((M, F), 4)
                  + 2 * _padded_bytes((tm, M), 2) + _padded_bytes((8, M), 4))

    coarse_raw = pl.pallas_call(
        _coarse_kernel,
        out_shape=jax.ShapeDtypeStruct((B, 8, 128), jnp.float32),
        grid=(B, N // tm),
        in_specs=[
            pl.BlockSpec((None, tm, F), lambda b, nt: (b, nt, 0)),
            pl.BlockSpec((None, M, F), lambda b, nt: (b, 0, 0)),
            pl.BlockSpec((None, tm, M), lambda b, nt: (b, nt, 0)),
            pl.BlockSpec((None, tm, M), lambda b, nt: (b, nt, 0)),
        ],
        # per-batch output block (aligned (8,128) slab) -> batch axis can be "parallel"
        out_specs=pl.BlockSpec((None, 8, 128), lambda b, nt: (b, 0, 0)),
        scratch_shapes=[pltpu.VMEM((8, M), jnp.float32),
                        pltpu.SMEM((8,), jnp.float32)],
        compiler_params=pltpu.CompilerParams(
            dimension_semantics=("parallel", "arbitrary"),
            vmem_limit_bytes=_vmem_limit(coarse_blk)),
    )(src32, tgt32, pos_bf, neg_bf)

    # ---- fine: lane-dense relayout (P -> lanes), tiled over P -------------------
    ones = jnp.ones((B, P, 1), jnp.float32)
    # slack row/col of ones folded into the same relayout transpose
    sm_pad_t = jnp.concatenate([src_mask.astype(jnp.float32), ones], axis=-1).transpose(0, 2, 1)  # (B,K1,P)
    tm_pad_t = jnp.concatenate([tgt_mask.astype(jnp.float32), ones], axis=-1).transpose(0, 2, 1)  # (B,L1,P)
    score_t = jnp.transpose(matching_scores.astype(jnp.float32), (0, 2, 3, 1))   # (B,K1,L1,P)
    gt_t = jnp.transpose(matching_gt.astype(jnp.float32), (0, 2, 3, 1))          # (B,K1,L1,P)

    fine_blk = (2 * _padded_bytes((K1, L1, tp), 4)
                + _padded_bytes((K1, tp), 4) + _padded_bytes((L1, tp), 4))

    fine_raw = pl.pallas_call(
        _fine_kernel,
        out_shape=jax.ShapeDtypeStruct((B, 8, 128), jnp.float32),
        grid=(B, P // tp),
        in_specs=[
            pl.BlockSpec((None, K1, L1, tp), lambda b, pt: (b, 0, 0, pt)),
            pl.BlockSpec((None, K1, L1, tp), lambda b, pt: (b, 0, 0, pt)),
            pl.BlockSpec((None, K1, tp), lambda b, pt: (b, 0, pt)),
            pl.BlockSpec((None, L1, tp), lambda b, pt: (b, 0, pt)),
        ],
        out_specs=pl.BlockSpec((None, 8, 128), lambda b, pt: (b, 0, 0)),
        scratch_shapes=[pltpu.SMEM((8,), jnp.float32)],
        compiler_params=pltpu.CompilerParams(
            dimension_semantics=("parallel", "arbitrary"),
            vmem_limit_bytes=_vmem_limit(fine_blk)),
    )(score_t, gt_t, sm_pad_t, tm_pad_t)

    cs = jnp.sum(coarse_raw[:, 0, :6], axis=0)
    fs = jnp.sum(fine_raw[:, 0, :6], axis=0)

    stats = {
        "coarse_loss": 0.5 * (cs[0] / cs[1] + cs[2] / cs[3]),
        "coarse_matching_recall": cs[4] / cs[5],
        "fine_loss": -fs[0] / fs[1],
        "fine_matching_recall": (fs[2] + fs[3]) / (fs[4] + fs[5]),
    }
    return stats


# ---------------------------------------------------------------- pure-JAX reference (mirrors the torch code)
def _square_distance_ref(a, b):
    d = -2.0 * jnp.einsum("bnf,bmf->bnm", a, b, precision=jax.lax.Precision.HIGHEST)
    d = d + jnp.sum(a * a, -1)[:, :, None] + jnp.sum(b * b, -1)[:, None, :]
    return jnp.maximum(d, 1e-12)


def reference_forward(src_desc, tgt_desc, pos_mask, neg_mask,
                      matching_scores, matching_gt, src_mask, tgt_mask):
    # circle loss
    fd = jnp.sqrt(_square_distance_ref(src_desc, tgt_desc))
    pb = pos_mask > 0
    nb = neg_mask > 0
    row_sel = (jnp.sum(pb, -1) > 0) & (jnp.sum(nb, -1) > 0)
    col_sel = (jnp.sum(pb, -2) > 0) & (jnp.sum(nb, -2) > 0)
    pw = jnp.maximum(fd - 1e5 * (~pb).astype(jnp.float32) - POS_OPT, 0.0) * pos_mask
    nw = jnp.maximum(NEG_OPT - (fd + 1e5 * (~nb).astype(jnp.float32)), 0.0)
    lpr = _lse(LOG_SCALE * (fd - POS_MARGIN) * pw, -1)[..., 0]
    lpc = _lse(LOG_SCALE * (fd - POS_MARGIN) * pw, -2)[:, 0, :]
    lnr = _lse(LOG_SCALE * (NEG_MARGIN - fd) * nw, -1)[..., 0]
    lnc = _lse(LOG_SCALE * (NEG_MARGIN - fd) * nw, -2)[:, 0, :]
    loss_row = _softplus(lpr + lnr) / LOG_SCALE
    loss_col = _softplus(lpc + lnc) / LOG_SCALE
    circle = 0.5 * (jnp.sum(loss_row * row_sel) / jnp.sum(row_sel)
                    + jnp.sum(loss_col * col_sel) / jnp.sum(col_sel))
    # euclid recall
    pf = (pos_mask > 0).astype(jnp.float32)
    total = jnp.sum((jnp.sum(pf, -1) > 0).astype(jnp.float32))
    sel = jnp.argmin(_square_distance_ref(src_desc, tgt_desc), axis=-1)
    pred = jnp.sum(jnp.take_along_axis(pf, sel[..., None], axis=-1))
    recall = pred / total
    # fine loss
    B, P, K1, L1 = matching_gt.shape
    mask = matching_gt
    mask = mask.at[:, :, :K1 - 1, :].multiply(src_mask[..., None])
    mask = mask.at[:, :, :, :L1 - 1].multiply(tgt_mask[:, :, None, :])
    fine_loss = jnp.sum(-matching_scores * mask) / jnp.sum(mask)
    # fine recall
    gt2 = mask
    si = jnp.argmax(matching_scores[:, :, :K1 - 1, :], axis=-1)[..., None]
    src_gt = jnp.take_along_axis(gt2[:, :, :K1 - 1, :], si, axis=-1)
    ti = jnp.argmax(matching_scores[:, :, :, :L1 - 1], axis=-2)[:, :, None, :]
    tgt_gt = jnp.take_along_axis(gt2[:, :, :, :L1 - 1], ti, axis=-2)
    fine_recall = (src_gt.sum() + tgt_gt.sum()) / (src_mask.sum() + tgt_mask.sum())
    return {
        "coarse_loss": circle,
        "coarse_matching_recall": recall,
        "fine_loss": fine_loss,
        "fine_matching_recall": fine_recall,
    }


# ---------------------------------------------------------------- main
if __name__ == "__main__":
    B, N, M, F = 2, 32, 16, 32
    P, K, L = 256, 8, 8

    key = jax.random.PRNGKey(0)
    k = jax.random.split(key, 8)

    src_desc = jax.random.normal(k[0], (B, N, F), jnp.float32)
    src_desc = src_desc / jnp.linalg.norm(src_desc, axis=-1, keepdims=True)
    tgt_desc = jax.random.normal(k[1], (B, M, F), jnp.float32)
    tgt_desc = tgt_desc / jnp.linalg.norm(tgt_desc, axis=-1, keepdims=True)

    eye = jnp.broadcast_to(jnp.eye(N, M, dtype=jnp.float32), (B, N, M))
    pos_mask = jnp.maximum(eye, (jax.random.uniform(k[2], (B, N, M)) < 0.2).astype(jnp.float32))
    neg_mask = (jax.random.uniform(k[3], (B, N, M)) < 0.6).astype(jnp.float32) * (1.0 - pos_mask)

    matching_scores = jax.nn.log_softmax(
        jax.random.normal(k[4], (B, P, K + 1, L + 1), jnp.float32), axis=-1)
    matching_gt = (jax.random.uniform(k[5], (B, P, K + 1, L + 1)) < 0.3).astype(jnp.float32)
    src_mask = (jax.random.uniform(k[6], (B, P, K)) < 0.7).astype(jnp.float32)
    tgt_mask = (jax.random.uniform(k[7], (B, P, L)) < 0.7).astype(jnp.float32)

    # row_tile / p_tile chosen so that both multi-tile accumulation paths are exercised
    # (coarse: 2 row tiles per batch, fine: 2 P tiles per batch).
    stats = metric_loss_forward(src_desc, tgt_desc, pos_mask, neg_mask,
                                matching_scores, matching_gt, src_mask, tgt_mask,
                                row_tile=16, p_tile=128)
    stats = jax.tree_util.tree_map(jax.block_until_ready, stats)

    ref = reference_forward(src_desc, tgt_desc, pos_mask, neg_mask,
                            matching_scores, matching_gt, src_mask, tgt_mask)

    for name in ("coarse_loss", "coarse_matching_recall", "fine_loss", "fine_matching_recall"):
        a = jnp.asarray(stats[name])
        b = jnp.asarray(ref[name])
        assert bool(jnp.isfinite(a)), name
        assert bool(jnp.allclose(a, b, rtol=2e-3, atol=2e-3)), (name, float(a), float(b))

    print("KERNEL_OK")
</pallas_src>

<mosaic_0001>
module attributes {stable_mosaic.version = 11 : i64} {
  func.func @_fine_kernel(%arg0: i32, %arg1: i32, %arg2: memref<1x9x9x128xf32, #tpu.memory_space<vmem>>, %arg3: memref<1x9x9x128xf32, #tpu.memory_space<vmem>>, %arg4: memref<1x9x128xf32, #tpu.memory_space<vmem>>, %arg5: memref<1x9x128xf32, #tpu.memory_space<vmem>>, %arg6: memref<1x8x128xf32, #tpu.memory_space<vmem>>, %arg7: memref<8xf32, #tpu.memory_space<smem>>) attributes {dimension_semantics = [#tpu.dimension_semantics<parallel>, #tpu.dimension_semantics<arbitrary>], iteration_bounds = array<i64: 2, 2>, scalar_prefetch = 0 : i64, scratch_operands = 1 : i64, tpu.core_type = #tpu.core_type<tc>, window_params = [{transform_indices = @transform_0, window_bounds = array<i64: 1, 9, 9, 128>}, {transform_indices = @transform_1, window_bounds = array<i64: 1, 9, 9, 128>}, {transform_indices = @transform_2, window_bounds = array<i64: 1, 9, 128>}, {transform_indices = @transform_3, window_bounds = array<i64: 1, 9, 128>}, {transform_indices = @transform_4, window_bounds = array<i64: 1, 8, 128>}]} {
    %c0_i32 = arith.constant 0 : i32
    %0 = arith.cmpi eq, %arg1, %c0_i32 : i32
    %1 = arith.extui %0 : i1 to i32
    %cst = arith.constant 0.000000e+00 : f32
    %c0_i32_0 = arith.constant 0 : i32
    %2 = arith.cmpi ne, %1, %c0_i32_0 : i32
    scf.if %2 {
      %c0_32 = arith.constant 0 : index
      %156 = memref.load %arg7[%c0_32] : memref<8xf32, #tpu.memory_space<smem>>
      memref.store %cst, %arg7[%c0_32] : memref<8xf32, #tpu.memory_space<smem>>
      %c1_33 = arith.constant 1 : index
      %157 = memref.load %arg7[%c1_33] : memref<8xf32, #tpu.memory_space<smem>>
      memref.store %cst, %arg7[%c1_33] : memref<8xf32, #tpu.memory_space<smem>>
      %c2_34 = arith.constant 2 : index
      %158 = memref.load %arg7[%c2_34] : memref<8xf32, #tpu.memory_space<smem>>
      memref.store %cst, %arg7[%c2_34] : memref<8xf32, #tpu.memory_space<smem>>
      %c3_35 = arith.constant 3 : index
      %159 = memref.load %arg7[%c3_35] : memref<8xf32, #tpu.memory_space<smem>>
      memref.store %cst, %arg7[%c3_35] : memref<8xf32, #tpu.memory_space<smem>>
      %c4_36 = arith.constant 4 : index
      %160 = memref.load %arg7[%c4_36] : memref<8xf32, #tpu.memory_space<smem>>
      memref.store %cst, %arg7[%c4_36] : memref<8xf32, #tpu.memory_space<smem>>
      %c5_37 = arith.constant 5 : index
      %161 = memref.load %arg7[%c5_37] : memref<8xf32, #tpu.memory_space<smem>>
      memref.store %cst, %arg7[%c5_37] : memref<8xf32, #tpu.memory_space<smem>>
    } else {
    }
    %c0 = arith.constant 0 : index
    %c0_1 = arith.constant 0 : index
    %c0_2 = arith.constant 0 : index
    %c0_3 = arith.constant 0 : index
    %3 = vector.load %arg2[%c0, %c0_1, %c0_2, %c0_3] : memref<1x9x9x128xf32, #tpu.memory_space<vmem>>, vector<1x9x9x128xf32>
    %4 = vector.shape_cast %3 : vector<1x9x9x128xf32> to vector<9x9x128xf32>
    %c0_4 = arith.constant 0 : index
    %c0_5 = arith.constant 0 : index
    %c0_6 = arith.constant 0 : index
    %c0_7 = arith.constant 0 : index
    %5 = vector.load %arg3[%c0_4, %c0_5, %c0_6, %c0_7] : memref<1x9x9x128xf32, #tpu.memory_space<vmem>>, vector<1x9x9x128xf32>
    %6 = vector.shape_cast %5 : vector<1x9x9x128xf32> to vector<9x9x128xf32>
    %c0_8 = arith.constant 0 : index
    %c0_9 = arith.constant 0 : index
    %c0_10 = arith.constant 0 : index
    %7 = vector.load %arg4[%c0_8, %c0_9, %c0_10] : memref<1x9x128xf32, #tpu.memory_space<vmem>>, vector<1x9x128xf32>
    %8 = vector.shape_cast %7 : vector<1x9x128xf32> to vector<9x128xf32>
    %c0_11 = arith.constant 0 : index
    %c0_12 = arith.constant 0 : index
    %c0_13 = arith.constant 0 : index
    %9 = vector.load %arg5[%c0_11, %c0_12, %c0_13] : memref<1x9x128xf32, #tpu.memory_space<vmem>>, vector<1x9x128xf32>
    %10 = vector.shape_cast %9 : vector<1x9x128xf32> to vector<9x128xf32>
    %11 = vector.shape_cast %8 : vector<9x128xf32> to vector<9x1x128xf32>
    %12 = vector.broadcast %11 : vector<9x1x128xf32> to vector<9x9x128xf32>
    %13 = arith.mulf %6, %12 : vector<9x9x128xf32>
    %14 = vector.shape_cast %10 : vector<9x128xf32> to vector<1x9x128xf32>
    %15 = vector.broadcast %14 : vector<1x9x128xf32> to vector<9x9x128xf32>
    %16 = arith.mulf %13, %15 : vector<9x9x128xf32>
    %c0_14 = arith.constant 0 : index
    %17 = memref.load %arg7[%c0_14] : memref<8xf32, #tpu.memory_space<smem>>
    %18 = arith.mulf %4, %16 : vector<9x9x128xf32>
    %19 = vector.shape_cast %18 : vector<9x9x128xf32> to vector<1x9x9x128xf32>
    %cst_15 = arith.constant dense<0.000000e+00> : vector<1xf32>
    %20 = vector.multi_reduction <add>, %19, %cst_15 [1, 2, 3] : vector<1x9x9x128xf32> to vector<1xf32>
    %21 = vector.shape_cast %20 : vector<1xf32> to vector<1x1x1x1xf32>
    %22 = vector.extract %21[0, 0, 0, 0] : f32 from vector<1x1x1x1xf32>
    %23 = arith.addf %17, %22 : f32
    %c0_16 = arith.constant 0 : index
    %24 = memref.load %arg7[%c0_16] : memref<8xf32, #tpu.memory_space<smem>>
    memref.store %23, %arg7[%c0_16] : memref<8xf32, #tpu.memory_space<smem>>
    %c1 = arith.constant 1 : index
    %25 = memref.load %arg7[%c1] : memref<8xf32, #tpu.memory_space<smem>>
    %26 = vector.shape_cast %16 : vector<9x9x128xf32> to vector<1x9x9x128xf32>
    %cst_17 = arith.constant dense<0.000000e+00> : vector<1xf32>
    %27 = vector.multi_reduction <add>, %26, %cst_17 [1, 2, 3] : vector<1x9x9x128xf32> to vector<1xf32>
    %28 = vector.shape_cast %27 : vector<1xf32> to vector<1x1x1x1xf32>
    %29 = vector.extract %28[0, 0, 0, 0] : f32 from vector<1x1x1x1xf32>
    %30 = arith.addf %25, %29 : f32
    %c1_18 = arith.constant 1 : index
    %31 = memref.load %arg7[%c1_18] : memref<8xf32, #tpu.memory_space<smem>>
    memref.store %30, %arg7[%c1_18] : memref<8xf32, #tpu.memory_space<smem>>
    %32 = vector.extract_strided_slice %4 {offsets = [0, 0, 0], sizes = [8, 9, 128], strides = [1, 1, 1]} : vector<9x9x128xf32> to vector<8x9x128xf32>
    %33 = vector.extract_strided_slice %16 {offsets = [0, 0, 0], sizes = [8, 9, 128], strides = [1, 1, 1]} : vector<9x9x128xf32> to vector<8x9x128xf32>
    %34 = tpu.iota {dimensions = array<i32: 1>} : vector<8x9x128xi32>
    %cst_19 = arith.constant dense<0xFF800000> : vector<8x128xf32>
    %35 = vector.multi_reduction <maximumf>, %32, %cst_19 [1] : vector<8x9x128xf32> to vector<8x128xf32>
    %36 = vector.shape_cast %35 : vector<8x128xf32> to vector<8x1x128xf32>
    %37 = vector.broadcast %36 : vector<8x1x128xf32> to vector<8x9x128xf32>
    %38 = arith.cmpf oeq, %32, %37 : vector<8x9x128xf32>
    %c9_i32 = arith.constant 9 : i32
    %39 = vector.broadcast %c9_i32 : i32 to vector<8x9x128xi32>
    %40 = arith.select %38, %34, %39 : vector<8x9x128xi1>, vector<8x9x128xi32>
    %cst_20 = arith.constant dense<2147483647> : vector<8x128xi32>
    %41 = vector.multi_reduction <minsi>, %40, %cst_20 [1] : vector<8x9x128xi32> to vector<8x128xi32>
    %42 = vector.shape_cast %41 : vector<8x128xi32> to vector<8x1x128xi32>
    %c2 = arith.constant 2 : index
    %43 = memref.load %arg7[%c2] : memref<8xf32, #tpu.memory_space<smem>>
    %44 = vector.broadcast %42 : vector<8x1x128xi32> to vector<8x9x128xi32>
    %45 = arith.cmpi eq, %34, %44 : vector<8x9x128xi32>
    %46 = arith.extui %45 : vector<8x9x128xi1> to vector<8x9x128xi32>
    %47 = arith.sitofp %46 : vector<8x9x128xi32> to vector<8x9x128xf32>
    %48 = arith.mulf %33, %47 : vector<8x9x128xf32>
    %49 = vector.shape_cast %48 : vector<8x9x128xf32> to vector<1x8x9x128xf32>
    %cst_21 = arith.constant dense<0.000000e+00> : vector<1xf32>
    %50 = vector.multi_reduction <add>, %49, %cst_21 [1, 2, 3] : vector<1x8x9x128xf32> to vector<1xf32>
    %51 = vector.shape_cast %50 : vector<1xf32> to vector<1x1x1x1xf32>
    %52 = vector.extract %51[0, 0, 0, 0] : f32 from vector<1x1x1x1xf32>
    %53 = arith.addf %43, %52 : f32
    %c2_22 = arith.constant 2 : index
    %54 = memref.load %arg7[%c2_22] : memref<8xf32, #tpu.memory_space<smem>>
    memref.store %53, %arg7[%c2_22] : memref<8xf32, #tpu.memory_space<smem>>
    %55 = vector.extract_strided_slice %4 {offsets = [0, 0, 0], sizes = [9, 8, 128], strides = [1, 1, 1]} : vector<9x9x128xf32> to vector<9x8x128xf32>
    %56 = vector.extract_strided_slice %16 {offsets = [0, 0, 0], sizes = [9, 8, 128], strides = [1, 1, 1]} : vector<9x9x128xf32> to vector<9x8x128xf32>
    %57 = vector.extract_strided_slice %55 {offsets = [0, 0, 0], sizes = [1, 8, 128], strides = [1, 1, 1]} : vector<9x8x128xf32> to vector<1x8x128xf32>
    %58 = vector.shape_cast %57 : vector<1x8x128xf32> to vector<8x128xf32>
    %59 = vector.extract_strided_slice %56 {offsets = [0, 0, 0], sizes = [1, 8, 128], strides = [1, 1, 1]} : vector<9x8x128xf32> to vector<1x8x128xf32>
    %60 = vector.shape_cast %59 : vector<1x8x128xf32> to vector<8x128xf32>
    %61 = vector.extract_strided_slice %55 {offsets = [1, 0, 0], sizes = [1, 8, 128], strides = [1, 1, 1]} : vector<9x8x128xf32> to vector<1x8x128xf32>
    %62 = vector.shape_cast %61 : vector<1x8x128xf32> to vector<8x128xf32>
    %63 = arith.cmpf ogt, %62, %58 : vector<8x128xf32>
    %64 = vector.extract_strided_slice %55 {offsets = [1, 0, 0], sizes = [1, 8, 128], strides = [1, 1, 1]} : vector<9x8x128xf32> to vector<1x8x128xf32>
    %65 = vector.shape_cast %64 : vector<1x8x128xf32> to vector<8x128xf32>
    %66 = arith.select %63, %65, %58 : vector<8x128xi1>, vector<8x128xf32>
    %67 = vector.extract_strided_slice %56 {offsets = [1, 0, 0], sizes = [1, 8, 128], strides = [1, 1, 1]} : vector<9x8x128xf32> to vector<1x8x128xf32>
    %68 = vector.shape_cast %67 : vector<1x8x128xf32> to vector<8x128xf32>
    %69 = arith.select %63, %68, %60 : vector<8x128xi1>, vector<8x128xf32>
    %70 = vector.extract_strided_slice %55 {offsets = [2, 0, 0], sizes = [1, 8, 128], strides = [1, 1, 1]} : vector<9x8x128xf32> to vector<1x8x128xf32>
    %71 = vector.shape_cast %70 : vector<1x8x128xf32> to vector<8x128xf32>
    %72 = arith.cmpf ogt, %71, %66 : vector<8x128xf32>
    %73 = vector.extract_strided_slice %55 {offsets = [2, 0, 0], sizes = [1, 8, 128], strides = [1, 1, 1]} : vector<9x8x128xf32> to vector<1x8x128xf32>
    %74 = vector.shape_cast %73 : vector<1x8x128xf32> to vector<8x128xf32>
    %75 = arith.select %72, %74, %66 : vector<8x128xi1>, vector<8x128xf32>
    %76 = vector.extract_strided_slice %56 {offsets = [2, 0, 0], sizes = [1, 8, 128], strides = [1, 1, 1]} : vector<9x8x128xf32> to vector<1x8x128xf32>
    %77 = vector.shape_cast %76 : vector<1x8x128xf32> to vector<8x128xf32>
    %78 = arith.select %72, %77, %69 : vector<8x128xi1>, vector<8x128xf32>
    %79 = vector.extract_strided_slice %55 {offsets = [3, 0, 0], sizes = [1, 8, 128], strides = [1, 1, 1]} : vector<9x8x128xf32> to vector<1x8x128xf32>
    %80 = vector.shape_cast %79 : vector<1x8x128xf32> to vector<8x128xf32>
    %81 = arith.cmpf ogt, %80, %75 : vector<8x128xf32>
    %82 = vector.extract_strided_slice %55 {offsets = [3, 0, 0], sizes = [1, 8, 128], strides = [1, 1, 1]} : vector<9x8x128xf32> to vector<1x8x128xf32>
    %83 = vector.shape_cast %82 : vector<1x8x128xf32> to vector<8x128xf32>
    %84 = arith.select %81, %83, %75 : vector<8x128xi1>, vector<8x128xf32>
    %85 = vector.extract_strided_slice %56 {offsets = [3, 0, 0], sizes = [1, 8, 128], strides = [1, 1, 1]} : vector<9x8x128xf32> to vector<1x8x128xf32>
    %86 = vector.shape_cast %85 : vector<1x8x128xf32> to vector<8x128xf32>
    %87 = arith.select %81, %86, %78 : vector<8x128xi1>, vector<8x128xf32>
    %88 = vector.extract_strided_slice %55 {offsets = [4, 0, 0], sizes = [1, 8, 128], strides = [1, 1, 1]} : vector<9x8x128xf32> to vector<1x8x128xf32>
    %89 = vector.shape_cast %88 : vector<1x8x128xf32> to vector<8x128xf32>
    %90 = arith.cmpf ogt, %89, %84 : vector<8x128xf32>
    %91 = vector.extract_strided_slice %55 {offsets = [4, 0, 0], sizes = [1, 8, 128], strides = [1, 1, 1]} : vector<9x8x128xf32> to vector<1x8x128xf32>
    %92 = vector.shape_cast %91 : vector<1x8x128xf32> to vector<8x128xf32>
    %93 = arith.select %90, %92, %84 : vector<8x128xi1>, vector<8x128xf32>
    %94 = vector.extract_strided_slice %56 {offsets = [4, 0, 0], sizes = [1, 8, 128], strides = [1, 1, 1]} : vector<9x8x128xf32> to vector<1x8x128xf32>
    %95 = vector.shape_cast %94 : vector<1x8x128xf32> to vector<8x128xf32>
    %96 = arith.select %90, %95, %87 : vector<8x128xi1>, vector<8x128xf32>
    %97 = vector.extract_strided_slice %55 {offsets = [5, 0, 0], sizes = [1, 8, 128], strides = [1, 1, 1]} : vector<9x8x128xf32> to vector<1x8x128xf32>
    %98 = vector.shape_cast %97 : vector<1x8x128xf32> to vector<8x128xf32>
    %99 = arith.cmpf ogt, %98, %93 : vector<8x128xf32>
    %100 = vector.extract_strided_slice %55 {offsets = [5, 0, 0], sizes = [1, 8, 128], strides = [1, 1, 1]} : vector<9x8x128xf32> to vector<1x8x128xf32>
    %101 = vector.shape_cast %100 : vector<1x8x128xf32> to vector<8x128xf32>
    %102 = arith.select %99, %101, %93 : vector<8x128xi1>, vector<8x128xf32>
    %103 = vector.extract_strided_slice %56 {offsets = [5, 0, 0], sizes = [1, 8, 128], strides = [1, 1, 1]} : vector<9x8x128xf32> to vector<1x8x128xf32>
    %104 = vector.shape_cast %103 : vector<1x8x128xf32> to vector<8x128xf32>
    %105 = arith.select %99, %104, %96 : vector<8x128xi1>, vector<8x128xf32>
    %106 = vector.extract_strided_slice %55 {offsets = [6, 0, 0], sizes = [1, 8, 128], strides = [1, 1, 1]} : vector<9x8x128xf32> to vector<1x8x128xf32>
    %107 = vector.shape_cast %106 : vector<1x8x128xf32> to vector<8x128xf32>
    %108 = arith.cmpf ogt, %107, %102 : vector<8x128xf32>
    %109 = vector.extract_strided_slice %55 {offsets = [6, 0, 0], sizes = [1, 8, 128], strides = [1, 1, 1]} : vector<9x8x128xf32> to vector<1x8x128xf32>
    %110 = vector.shape_cast %109 : vector<1x8x128xf32> to vector<8x128xf32>
    %111 = arith.select %108, %110, %102 : vector<8x128xi1>, vector<8x128xf32>
    %112 = vector.extract_strided_slice %56 {offsets = [6, 0, 0], sizes = [1, 8, 128], strides = [1, 1, 1]} : vector<9x8x128xf32> to vector<1x8x128xf32>
    %113 = vector.shape_cast %112 : vector<1x8x128xf32> to vector<8x128xf32>
    %114 = arith.select %108, %113, %105 : vector<8x128xi1>, vector<8x128xf32>
    %115 = vector.extract_strided_slice %55 {offsets = [7, 0, 0], sizes = [1, 8, 128], strides = [1, 1, 1]} : vector<9x8x128xf32> to vector<1x8x128xf32>
    %116 = vector.shape_cast %115 : vector<1x8x128xf32> to vector<8x128xf32>
    %117 = arith.cmpf ogt, %116, %111 : vector<8x128xf32>
    %118 = vector.extract_strided_slice %55 {offsets = [7, 0, 0], sizes = [1, 8, 128], strides = [1, 1, 1]} : vector<9x8x128xf32> to vector<1x8x128xf32>
    %119 = vector.shape_cast %118 : vector<1x8x128xf32> to vector<8x128xf32>
    %120 = arith.select %117, %119, %111 : vector<8x128xi1>, vector<8x128xf32>
    %121 = vector.extract_strided_slice %56 {offsets = [7, 0, 0], sizes = [1, 8, 128], strides = [1, 1, 1]} : vector<9x8x128xf32> to vector<1x8x128xf32>
    %122 = vector.shape_cast %121 : vector<1x8x128xf32> to vector<8x128xf32>
    %123 = arith.select %117, %122, %114 : vector<8x128xi1>, vector<8x128xf32>
    %124 = vector.extract_strided_slice %55 {offsets = [8, 0, 0], sizes = [1, 8, 128], strides = [1, 1, 1]} : vector<9x8x128xf32> to vector<1x8x128xf32>
    %125 = vector.shape_cast %124 : vector<1x8x128xf32> to vector<8x128xf32>
    %126 = arith.cmpf ogt, %125, %120 : vector<8x128xf32>
    %127 = vector.extract_strided_slice %56 {offsets = [8, 0, 0], sizes = [1, 8, 128], strides = [1, 1, 1]} : vector<9x8x128xf32> to vector<1x8x128xf32>
    %128 = vector.shape_cast %127 : vector<1x8x128xf32> to vector<8x128xf32>
    %129 = arith.select %126, %128, %123 : vector<8x128xi1>, vector<8x128xf32>
    %c3 = arith.constant 3 : index
    %130 = memref.load %arg7[%c3] : memref<8xf32, #tpu.memory_space<smem>>
    %131 = vector.shape_cast %129 : vector<8x128xf32> to vector<1x8x128xf32>
    %cst_23 = arith.constant dense<0.000000e+00> : vector<1xf32>
    %132 = vector.multi_reduction <add>, %131, %cst_23 [1, 2] : vector<1x8x128xf32> to vector<1xf32>
    %133 = vector.shape_cast %132 : vector<1xf32> to vector<1x1x1xf32>
    %134 = vector.extract %133[0, 0, 0] : f32 from vector<1x1x1xf32>
    %135 = arith.addf %130, %134 : f32
    %c3_24 = arith.constant 3 : index
    %136 = memref.load %arg7[%c3_24] : memref<8xf32, #tpu.memory_space<smem>>
    memref.store %135, %arg7[%c3_24] : memref<8xf32, #tpu.memory_space<smem>>
    %c4 = arith.constant 4 : index
    %137 = memref.load %arg7[%c4] : memref<8xf32, #tpu.memory_space<smem>>
    %138 = vector.shape_cast %8 : vector<9x128xf32> to vector<1x9x128xf32>
    %cst_25 = arith.constant dense<0.000000e+00> : vector<1xf32>
    %139 = vector.multi_reduction <add>, %138, %cst_25 [1, 2] : vector<1x9x128xf32> to vector<1xf32>
    %140 = vector.shape_cast %139 : vector<1xf32> to vector<1x1x1xf32>
    %141 = vector.extract %140[0, 0, 0] : f32 from vector<1x1x1xf32>
    %cst_26 = arith.constant 1.280000e+02 : f32
    %142 = arith.subf %141, %cst_26 : f32
    %143 = arith.addf %137, %142 : f32
    %c4_27 = arith.constant 4 : index
    %144 = memref.load %arg7[%c4_27] : memref<8xf32, #tpu.memory_space<smem>>
    memref.store %143, %arg7[%c4_27] : memref<8xf32, #tpu.memory_space<smem>>
    %c5 = arith.constant 5 : index
    %145 = memref.load %arg7[%c5] : memref<8xf32, #tpu.memory_space<smem>>
    %146 = vector.shape_cast %10 : vector<9x128xf32> to vector<1x9x128xf32>
    %cst_28 = arith.constant dense<0.000000e+00> : vector<1xf32>
    %147 = vector.multi_reduction <add>, %146, %cst_28 [1, 2] : vector<1x9x128xf32> to vector<1xf32>
    %148 = vector.shape_cast %147 : vector<1xf32> to vector<1x1x1xf32>
    %149 = vector.extract %148[0, 0, 0] : f32 from vector<1x1x1xf32>
    %cst_29 = arith.constant 1.280000e+02 : f32
    %150 = arith.subf %149, %cst_29 : f32
    %151 = arith.addf %145, %150 : f32
    %c5_30 = arith.constant 5 : index
    %152 = memref.load %arg7[%c5_30] : memref<8xf32, #tpu.memory_space<smem>>
    memref.store %151, %arg7[%c5_30] : memref<8xf32, #tpu.memory_space<smem>>
    %c1_i32 = arith.constant 1 : i32
    %153 = arith.cmpi eq, %arg1, %c1_i32 : i32
    %154 = arith.extui %153 : i1 to i32
    %c0_i32_31 = arith.constant 0 : i32
    %155 = arith.cmpi ne, %154, %c0_i32_31 : i32
    scf.if %155 {
      %c0_32 = arith.constant 0 : index
      %156 = memref.load %arg7[%c0_32] : memref<8xf32, #tpu.memory_space<smem>>
      %c1_33 = arith.constant 1 : index
      %157 = memref.load %arg7[%c1_33] : memref<8xf32, #tpu.memory_space<smem>>
      %c2_34 = arith.constant 2 : index
      %158 = memref.load %arg7[%c2_34] : memref<8xf32, #tpu.memory_space<smem>>
      %c3_35 = arith.constant 3 : index
      %159 = memref.load %arg7[%c3_35] : memref<8xf32, #tpu.memory_space<smem>>
      %c4_36 = arith.constant 4 : index
      %160 = memref.load %arg7[%c4_36] : memref<8xf32, #tpu.memory_space<smem>>
      %c5_37 = arith.constant 5 : index
      %161 = memref.load %arg7[%c5_37] : memref<8xf32, #tpu.memory_space<smem>>
      %162 = tpu.iota {dimensions = array<i32: 1>} : vector<8x128xi32>
      %cst_38 = arith.constant 0.000000e+00 : f32
      %163 = vector.broadcast %cst_38 : f32 to vector<8x128xf32>
      %c0_i32_39 = arith.constant 0 : i32
      %164 = vector.broadcast %c0_i32_39 : i32 to vector<8x128xi32>
      %165 = arith.cmpi eq, %162, %164 : vector<8x128xi32>
      %166 = vector.broadcast %156 : f32 to vector<8x128xf32>
      %167 = arith.select %165, %166, %163 : vector<8x128xi1>, vector<8x128xf32>
      %c1_i32_40 = arith.constant 1 : i32
      %168 = vector.broadcast %c1_i32_40 : i32 to vector<8x128xi32>
      %169 = arith.cmpi eq, %162, %168 : vector<8x128xi32>
      %170 = vector.broadcast %157 : f32 to vector<8x128xf32>
      %171 = arith.select %169, %170, %167 : vector<8x128xi1>, vector<8x128xf32>
      %c2_i32 = arith.constant 2 : i32
      %172 = vector.broadcast %c2_i32 : i32 to vector<8x128xi32>
      %173 = arith.cmpi eq, %162, %172 : vector<8x128xi32>
      %174 = vector.broadcast %158 : f32 to vector<8x128xf32>
      %175 = arith.select %173, %174, %171 : vector<8x128xi1>, vector<8x128xf32>
      %c3_i32 = arith.constant 3 : i32
      %176 = vector.broadcast %c3_i32 : i32 to vector<8x128xi32>
      %177 = arith.cmpi eq, %162, %176 : vector<8x128xi32>
      %178 = vector.broadcast %159 : f32 to vector<8x128xf32>
      %179 = arith.select %177, %178, %175 : vector<8x128xi1>, vector<8x128xf32>
      %c4_i32 = arith.constant 4 : i32
      %180 = vector.broadcast %c4_i32 : i32 to vector<8x128xi32>
      %181 = arith.cmpi eq, %162, %180 : vector<8x128xi32>
      %182 = vector.broadcast %160 : f32 to vector<8x128xf32>
      %183 = arith.select %181, %182, %179 : vector<8x128xi1>, vector<8x128xf32>
      %c5_i32 = arith.constant 5 : i32
      %184 = vector.broadcast %c5_i32 : i32 to vector<8x128xi32>
      %185 = arith.cmpi eq, %162, %184 : vector<8x128xi32>
      %186 = vector.broadcast %161 : f32 to vector<8x128xf32>
      %187 = arith.select %185, %186, %183 : vector<8x128xi1>, vector<8x128xf32>
      %c0_41 = arith.constant 0 : index
      %c0_42 = arith.constant 0 : index
      %c0_43 = arith.constant 0 : index
      %188 = vector.load %arg6[%c0_41, %c0_42, %c0_43] : memref<1x8x128xf32, #tpu.memory_space<vmem>>, vector<1x8x128xf32>
      %189 = vector.shape_cast %188 : vector<1x8x128xf32> to vector<8x128xf32>
      %190 = vector.shape_cast %187 : vector<8x128xf32> to vector<1x8x128xf32>
      tpu.vector_store %arg6[%c0_41, %c0_42, %c0_43], %190 {strides = array<i32>} : memref<1x8x128xf32, #tpu.memory_space<vmem>>, vector<1x8x128xf32>,
    } else {
    }
    return
  }
  func.func @transform_0(%arg0: i32, %arg1: i32) -> (i32, i32, i32, i32) {
    %c0_i32 = arith.constant 0 : i32
    %c0_i32_0 = arith.constant 0 : i32
    %c0_i32_1 = arith.constant 0 : i32
    return %arg0, %c0_i32, %c0_i32_0, %arg1 : i32, i32, i32, i32
  }
  func.func @transform_1(%arg0: i32, %arg1: i32) -> (i32, i32, i32, i32) {
    %c0_i32 = arith.constant 0 : i32
    %c0_i32_0 = arith.constant 0 : i32
    %c0_i32_1 = arith.constant 0 : i32
    return %arg0, %c0_i32, %c0_i32_0, %arg1 : i32, i32, i32, i32
  }
  func.func @transform_2(%arg0: i32, %arg1: i32) -> (i32, i32, i32) {
    %c0_i32 = arith.constant 0 : i32
    %c0_i32_0 = arith.constant 0 : i32
    return %arg0, %c0_i32, %arg1 : i32, i32, i32
  }
  func.func @transform_3(%arg0: i32, %arg1: i32) -> (i32, i32, i32) {
    %c0_i32 = arith.constant 0 : i32
    %c0_i32_0 = arith.constant 0 : i32
    return %arg0, %c0_i32, %arg1 : i32, i32, i32
  }
  func.func @transform_4(%arg0: i32, %arg1: i32) -> (i32, i32, i32) {
    %c0_i32 = arith.constant 0 : i32
    %c0_i32_0 = arith.constant 0 : i32
    %c0_i32_1 = arith.constant 0 : i32
    return %arg0, %c0_i32, %c0_i32_0 : i32, i32, i32
  }
}

module attributes {stable_mosaic.version = 11 : i64} {
  func.func @_coarse_kernel(%arg0: i32, %arg1: i32, %arg2: memref<1x16x32xf32, #tpu.memory_space<vmem>>, %arg3: memref<1x16x32xf32, #tpu.memory_space<vmem>>, %arg4: memref<1x16x16xbf16, #tpu.memory_space<vmem>>, %arg5: memref<1x16x16xbf16, #tpu.memory_space<vmem>>, %arg6: memref<1x8x128xf32, #tpu.memory_space<vmem>>, %arg7: memref<8x16xf32, #tpu.memory_space<vmem>>, %arg8: memref<8xf32, #tpu.memory_space<smem>>) attributes {dimension_semantics = [#tpu.dimension_semantics<parallel>, #tpu.dimension_semantics<arbitrary>], iteration_bounds = array<i64: 2, 2>, scalar_prefetch = 0 : i64, scratch_operands = 2 : i64, tpu.core_type = #tpu.core_type<tc>, window_params = [{transform_indices = @transform_0, window_bounds = array<i64: 1, 16, 32>}, {transform_indices = @transform_1, window_bounds = array<i64: 1, 16, 32>}, {transform_indices = @transform_2, window_bounds = array<i64: 1, 16, 16>}, {transform_indices = @transform_3, window_bounds = array<i64: 1, 16, 16>}, {transform_indices = @transform_4, window_bounds = array<i64: 1, 8, 128>}]} {
    %c0_i32 = arith.constant 0 : i32
    %0 = arith.cmpi eq, %arg1, %c0_i32 : i32
    %1 = arith.extui %0 : i1 to i32
    %cst = arith.constant 0.000000e+00 : f32
    %c0_i32_0 = arith.constant 0 : i32
    %2 = arith.cmpi ne, %1, %c0_i32_0 : i32
    scf.if %2 {
      %c0_86 = arith.constant 0 : index
      %208 = memref.load %arg8[%c0_86] : memref<8xf32, #tpu.memory_space<smem>>
      memref.store %cst, %arg8[%c0_86] : memref<8xf32, #tpu.memory_space<smem>>
      %c1_87 = arith.constant 1 : index
      %209 = memref.load %arg8[%c1_87] : memref<8xf32, #tpu.memory_space<smem>>
      memref.store %cst, %arg8[%c1_87] : memref<8xf32, #tpu.memory_space<smem>>
      %c2_88 = arith.constant 2 : index
      %210 = memref.load %arg8[%c2_88] : memref<8xf32, #tpu.memory_space<smem>>
      memref.store %cst, %arg8[%c2_88] : memref<8xf32, #tpu.memory_space<smem>>
      %c3_89 = arith.constant 3 : index
      %211 = memref.load %arg8[%c3_89] : memref<8xf32, #tpu.memory_space<smem>>
      memref.store %cst, %arg8[%c3_89] : memref<8xf32, #tpu.memory_space<smem>>
      %cst_90 = arith.constant 0.000000e+00 : f32
      %212 = vector.broadcast %cst_90 : f32 to vector<8x16xf32>
      %c0_91 = arith.constant 0 : index
      %c0_92 = arith.constant 0 : index
      %213 = vector.load %arg7[%c0_91, %c0_92] : memref<8x16xf32, #tpu.memory_space<vmem>>, vector<8x16xf32>
      tpu.vector_store %arg7[%c0_91, %c0_92], %212 {strides = array<i32>} : memref<8x16xf32, #tpu.memory_space<vmem>>, vector<8x16xf32>,
      %cst_93 = arith.constant -1.000000e+30 : f32
      %214 = vector.broadcast %cst_93 : f32 to vector<1x16xf32>
      %c0_94 = arith.constant 0 : index
      %c0_95 = arith.constant 0 : index
      %215 = vector.load %arg7[%c0_94, %c0_95] : memref<8x16xf32, #tpu.memory_space<vmem>>, vector<1x16xf32>
      tpu.vector_store %arg7[%c0_94, %c0_95], %214 {strides = array<i32>} : memref<8x16xf32, #tpu.memory_space<vmem>>, vector<1x16xf32>,
      %c2_96 = arith.constant 2 : index
      %c0_97 = arith.constant 0 : index
      %216 = vector.load %arg7[%c2_96, %c0_97] : memref<8x16xf32, #tpu.memory_space<vmem>>, vector<1x16xf32>
      tpu.vector_store %arg7[%c2_96, %c0_97], %214 {strides = array<i32>} : memref<8x16xf32, #tpu.memory_space<vmem>>, vector<1x16xf32>,
    } else {
    }
    %c0 = arith.constant 0 : index
    %c0_1 = arith.constant 0 : index
    %c0_2 = arith.constant 0 : index
    %3 = vector.load %arg2[%c0, %c0_1, %c0_2] : memref<1x16x32xf32, #tpu.memory_space<vmem>>, vector<1x16x32xf32>
    %4 = vector.shape_cast %3 : vector<1x16x32xf32> to vector<16x32xf32>
    %c0_3 = arith.constant 0 : index
    %c0_4 = arith.constant 0 : index
    %c0_5 = arith.constant 0 : index
    %5 = vector.load %arg3[%c0_3, %c0_4, %c0_5] : memref<1x16x32xf32, #tpu.memory_space<vmem>>, vector<1x16x32xf32>
    %6 = vector.shape_cast %5 : vector<1x16x32xf32> to vector<16x32xf32>
    %c0_6 = arith.constant 0 : index
    %c0_7 = arith.constant 0 : index
    %c0_8 = arith.constant 0 : index
    %7 = vector.load %arg4[%c0_6, %c0_7, %c0_8] : memref<1x16x16xbf16, #tpu.memory_space<vmem>>, vector<1x16x16xbf16>
    %8 = vector.shape_cast %7 : vector<1x16x16xbf16> to vector<16x16xbf16>
    %9 = arith.extf %8 : vector<16x16xbf16> to vector<16x16xf32>
    %c0_9 = arith.constant 0 : index
    %c0_10 = arith.constant 0 : index
    %c0_11 = arith.constant 0 : index
    %10 = vector.load %arg5[%c0_9, %c0_10, %c0_11] : memref<1x16x16xbf16, #tpu.memory_space<vmem>>, vector<1x16x16xbf16>
    %11 = vector.shape_cast %10 : vector<1x16x16xbf16> to vector<16x16xbf16>
    %12 = arith.extf %11 : vector<16x16xbf16> to vector<16x16xf32>
    %13 = arith.mulf %4, %4 : vector<16x32xf32>
    %cst_12 = arith.constant dense<0.000000e+00> : vector<16xf32>
    %14 = vector.multi_reduction <add>, %13, %cst_12 [1] : vector<16x32xf32> to vector<16xf32>
    %15 = vector.shape_cast %14 : vector<16xf32> to vector<16x1xf32>
    %16 = arith.mulf %6, %6 : vector<16x32xf32>
    %cst_13 = arith.constant dense<0.000000e+00> : vector<16xf32>
    %17 = vector.multi_reduction <add>, %16, %cst_13 [1] : vector<16x32xf32> to vector<16xf32>
    %cst_14 = arith.constant dense<0.000000e+00> : vector<16x16xf32>
    %18 = tpu.matmul %4, %6, %cst_14 {dimension_numbers = #tpu.dot_dimension_numbers<[1], [1], [0], [0], [0, 0, 1, 0], [], []>, precision = #tpu.contract_precision<fp32>} : vector<16x32xf32>, vector<16x32xf32>, vector<16x16xf32> -> vector<16x16xf32>
    %19 = vector.shape_cast %17 : vector<16xf32> to vector<1x16xf32>
    %20 = vector.broadcast %15 : vector<16x1xf32> to vector<16x16xf32>
    %21 = vector.broadcast %19 : vector<1x16xf32> to vector<16x16xf32>
    %22 = arith.addf %20, %21 : vector<16x16xf32>
    %cst_15 = arith.constant 2.000000e+00 : f32
    %23 = vector.broadcast %cst_15 : f32 to vector<16x16xf32>
    %24 = arith.mulf %23, %18 : vector<16x16xf32>
    %25 = arith.subf %22, %24 : vector<16x16xf32>
    %cst_16 = arith.constant 9.99999996E-13 : f32
    %26 = vector.broadcast %cst_16 : f32 to vector<16x16xf32>
    %27 = arith.maximumf %25, %26 : vector<16x16xf32>
    %28 = math.sqrt %27 : vector<16x16xf32>
    %cst_17 = arith.constant 0.000000e+00 : f32
    %29 = vector.broadcast %cst_17 : f32 to vector<16x16xf32>
    %30 = arith.cmpf ogt, %9, %29 : vector<16x16xf32>
    %31 = arith.extui %30 : vector<16x16xi1> to vector<16x16xi32>
    %32 = arith.sitofp %31 : vector<16x16xi32> to vector<16x16xf32>
    %cst_18 = arith.constant 0.000000e+00 : f32
    %33 = vector.broadcast %cst_18 : f32 to vector<16x16xf32>
    %34 = arith.cmpf ogt, %12, %33 : vector<16x16xf32>
    %35 = arith.extui %34 : vector<16x16xi1> to vector<16x16xi32>
    %36 = arith.sitofp %35 : vector<16x16xi32> to vector<16x16xf32>
    %cst_19 = arith.constant 1.000000e+00 : f32
    %37 = vector.broadcast %cst_19 : f32 to vector<16x16xf32>
    %38 = arith.subf %37, %32 : vector<16x16xf32>
    %cst_20 = arith.constant 1.000000e+05 : f32
    %39 = vector.broadcast %cst_20 : f32 to vector<16x16xf32>
    %40 = arith.mulf %39, %38 : vector<16x16xf32>
    %41 = arith.subf %28, %40 : vector<16x16xf32>
    %cst_21 = arith.constant 1.000000e-01 : f32
    %42 = vector.broadcast %cst_21 : f32 to vector<16x16xf32>
    %43 = arith.subf %41, %42 : vector<16x16xf32>
    %cst_22 = arith.constant 0.000000e+00 : f32
    %44 = vector.broadcast %cst_22 : f32 to vector<16x16xf32>
    %45 = arith.maximumf %43, %44 : vector<16x16xf32>
    %46 = arith.mulf %45, %9 : vector<16x16xf32>
    %cst_23 = arith.constant 1.000000e+00 : f32
    %47 = vector.broadcast %cst_23 : f32 to vector<16x16xf32>
    %48 = arith.subf %47, %36 : vector<16x16xf32>
    %cst_24 = arith.constant 1.000000e+05 : f32
    %49 = vector.broadcast %cst_24 : f32 to vector<16x16xf32>
    %50 = arith.mulf %49, %48 : vector<16x16xf32>
    %51 = arith.addf %28, %50 : vector<16x16xf32>
    %cst_25 = arith.constant 1.400000e+00 : f32
    %52 = vector.broadcast %cst_25 : f32 to vector<16x16xf32>
    %53 = arith.subf %52, %51 : vector<16x16xf32>
    %cst_26 = arith.constant 0.000000e+00 : f32
    %54 = vector.broadcast %cst_26 : f32 to vector<16x16xf32>
    %55 = arith.maximumf %53, %54 : vector<16x16xf32>
    %cst_27 = arith.constant 1.000000e-01 : f32
    %56 = vector.broadcast %cst_27 : f32 to vector<16x16xf32>
    %57 = arith.subf %28, %56 : vector<16x16xf32>
    %cst_28 = arith.constant 1.600000e+01 : f32
    %58 = vector.broadcast %cst_28 : f32 to vector<16x16xf32>
    %59 = arith.mulf %58, %57 : vector<16x16xf32>
    %60 = arith.mulf %59, %46 : vector<16x16xf32>
    %cst_29 = arith.constant 1.400000e+00 : f32
    %61 = vector.broadcast %cst_29 : f32 to vector<16x16xf32>
    %62 = arith.subf %61, %28 : vector<16x16xf32>
    %cst_30 = arith.constant 1.600000e+01 : f32
    %63 = vector.broadcast %cst_30 : f32 to vector<16x16xf32>
    %64 = arith.mulf %63, %62 : vector<16x16xf32>
    %65 = arith.mulf %64, %55 : vector<16x16xf32>
    %cst_31 = arith.constant 1.000000e+00 : f32
    %66 = vector.broadcast %cst_31 : f32 to vector<16x1xf32>
    %cst_32 = arith.constant dense<0xFF800000> : vector<16xf32>
    %67 = vector.multi_reduction <maximumf>, %60, %cst_32 [1] : vector<16x16xf32> to vector<16xf32>
    %68 = vector.shape_cast %67 : vector<16xf32> to vector<16x1xf32>
    %69 = vector.broadcast %68 : vector<16x1xf32> to vector<16x16xf32>
    %70 = arith.subf %60, %69 : vector<16x16xf32>
    %71 = math.exp %70 : vector<16x16xf32>
    %cst_33 = arith.constant dense<0.000000e+00> : vector<16x1xf32>
    %72 = tpu.matmul %71, %66, %cst_33 {dimension_numbers = #tpu.dot_dimension_numbers<[1], [0], [0], [1], [0, 0, 1, 1], [], []>} : vector<16x16xf32>, vector<16x1xf32>, vector<16x1xf32> -> vector<16x1xf32>
    %73 = math.log %72 : vector<16x1xf32>
    %74 = arith.addf %68, %73 : vector<16x1xf32>
    %cst_34 = arith.constant dense<0xFF800000> : vector<16xf32>
    %75 = vector.multi_reduction <maximumf>, %65, %cst_34 [1] : vector<16x16xf32> to vector<16xf32>
    %76 = vector.shape_cast %75 : vector<16xf32> to vector<16x1xf32>
    %77 = vector.broadcast %76 : vector<16x1xf32> to vector<16x16xf32>
    %78 = arith.subf %65, %77 : vector<16x16xf32>
    %79 = math.exp %78 : vector<16x16xf32>
    %cst_35 = arith.constant dense<0.000000e+00> : vector<16x1xf32>
    %80 = tpu.matmul %79, %66, %cst_35 {dimension_numbers = #tpu.dot_dimension_numbers<[1], [0], [0], [1], [0, 0, 1, 1], [], []>} : vector<16x16xf32>, vector<16x1xf32>, vector<16x1xf32> -> vector<16x1xf32>
    %81 = math.log %80 : vector<16x1xf32>
    %82 = arith.addf %76, %81 : vector<16x1xf32>
    %cst_36 = arith.constant dense<0.000000e+00> : vector<16x1xf32>
    %83 = tpu.matmul %32, %66, %cst_36 {dimension_numbers = #tpu.dot_dimension_numbers<[1], [0], [0], [1], [0, 0, 1, 1], [], []>} : vector<16x16xf32>, vector<16x1xf32>, vector<16x1xf32> -> vector<16x1xf32>
    %cst_37 = arith.constant dense<0.000000e+00> : vector<16x1xf32>
    %84 = tpu.matmul %36, %66, %cst_37 {dimension_numbers = #tpu.dot_dimension_numbers<[1], [0], [0], [1], [0, 0, 1, 1], [], []>} : vector<16x16xf32>, vector<16x1xf32>, vector<16x1xf32> -> vector<16x1xf32>
    %cst_38 = arith.constant 0.000000e+00 : f32
    %85 = vector.broadcast %cst_38 : f32 to vector<16x1xf32>
    %86 = arith.cmpf ogt, %83, %85 : vector<16x1xf32>
    %cst_39 = arith.constant 0.000000e+00 : f32
    %87 = vector.broadcast %cst_39 : f32 to vector<16x1xf32>
    %88 = arith.cmpf ogt, %84, %87 : vector<16x1xf32>
    %89 = arith.andi %86, %88 : vector<16x1xi1>
    %90 = arith.extui %89 : vector<16x1xi1> to vector<16x1xi32>
    %91 = arith.sitofp %90 : vector<16x1xi32> to vector<16x1xf32>
    %92 = arith.addf %74, %82 : vector<16x1xf32>
    %cst_40 = arith.constant 2.000000e+01 : f32
    %93 = vector.broadcast %cst_40 : f32 to vector<16x1xf32>
    %94 = arith.cmpf ogt, %92, %93 : vector<16x1xf32>
    %cst_41 = arith.constant 2.000000e+01 : f32
    %95 = vector.broadcast %cst_41 : f32 to vector<16x1xf32>
    %96 = arith.minimumf %92, %95 : vector<16x1xf32>
    %97 = math.exp %96 : vector<16x1xf32>
    %98 = math.log1p %97 : vector<16x1xf32>
    %99 = arith.select %94, %92, %98 : vector<16x1xi1>, vector<16x1xf32>
    %cst_42 = arith.constant 1.600000e+01 : f32
    %100 = vector.broadcast %cst_42 : f32 to vector<16x1xf32>
    %101 = arith.divf %99, %100 : vector<16x1xf32>
    %102 = tpu.iota {dimensions = array<i32: 1>} : vector<16x16xi32>
    %cst_43 = arith.constant dense<0x7F800000> : vector<16xf32>
    %103 = vector.multi_reduction <minimumf>, %27, %cst_43 [1] : vector<16x16xf32> to vector<16xf32>
    %104 = vector.shape_cast %103 : vector<16xf32> to vector<16x1xf32>
    %105 = vector.broadcast %104 : vector<16x1xf32> to vector<16x16xf32>
    %106 = arith.cmpf oeq, %27, %105 : vector<16x16xf32>
    %c16_i32 = arith.constant 16 : i32
    %107 = vector.broadcast %c16_i32 : i32 to vector<16x16xi32>
    %108 = arith.select %106, %102, %107 : vector<16x16xi1>, vector<16x16xi32>
    %cst_44 = arith.constant dense<2147483647> : vector<16xi32>
    %109 = vector.multi_reduction <minsi>, %108, %cst_44 [1] : vector<16x16xi32> to vector<16xi32>
    %110 = vector.shape_cast %109 : vector<16xi32> to vector<16x1xi32>
    %111 = vector.broadcast %110 : vector<16x1xi32> to vector<16x16xi32>
    %112 = arith.cmpi eq, %102, %111 : vector<16x16xi32>
    %113 = arith.extui %112 : vector<16x16xi1> to vector<16x16xi32>
    %114 = arith.sitofp %113 : vector<16x16xi32> to vector<16x16xf32>
    %115 = arith.mulf %32, %114 : vector<16x16xf32>
    %116 = vector.shape_cast %115 : vector<16x16xf32> to vector<1x16x16xf32>
    %cst_45 = arith.constant dense<0.000000e+00> : vector<1xf32>
    %117 = vector.multi_reduction <add>, %116, %cst_45 [1, 2] : vector<1x16x16xf32> to vector<1xf32>
    %118 = vector.shape_cast %117 : vector<1xf32> to vector<1x1x1xf32>
    %119 = vector.extract %118[0, 0, 0] : f32 from vector<1x1x1xf32>
    %cst_46 = arith.constant 0.000000e+00 : f32
    %120 = vector.broadcast %cst_46 : f32 to vector<16x1xf32>
    %121 = arith.cmpf ogt, %83, %120 : vector<16x1xf32>
    %122 = arith.extui %121 : vector<16x1xi1> to vector<16x1xi32>
    %123 = arith.sitofp %122 : vector<16x1xi32> to vector<16x1xf32>
    %124 = vector.shape_cast %123 : vector<16x1xf32> to vector<1x16x1xf32>
    %cst_47 = arith.constant dense<0.000000e+00> : vector<1xf32>
    %125 = vector.multi_reduction <add>, %124, %cst_47 [1, 2] : vector<1x16x1xf32> to vector<1xf32>
    %126 = vector.shape_cast %125 : vector<1xf32> to vector<1x1x1xf32>
    %127 = vector.extract %126[0, 0, 0] : f32 from vector<1x1x1xf32>
    %c0_48 = arith.constant 0 : index
    %128 = memref.load %arg8[%c0_48] : memref<8xf32, #tpu.memory_space<smem>>
    %129 = arith.mulf %101, %91 : vector<16x1xf32>
    %130 = vector.shape_cast %129 : vector<16x1xf32> to vector<1x16x1xf32>
    %cst_49 = arith.constant dense<0.000000e+00> : vector<1xf32>
    %131 = vector.multi_reduction <add>, %130, %cst_49 [1, 2] : vector<1x16x1xf32> to vector<1xf32>
    %132 = vector.shape_cast %131 : vector<1xf32> to vector<1x1x1xf32>
    %133 = vector.extract %132[0, 0, 0] : f32 from vector<1x1x1xf32>
    %134 = arith.addf %128, %133 : f32
    %c0_50 = arith.constant 0 : index
    %135 = memref.load %arg8[%c0_50] : memref<8xf32, #tpu.memory_space<smem>>
    memref.store %134, %arg8[%c0_50] : memref<8xf32, #tpu.memory_space<smem>>
    %c1 = arith.constant 1 : index
    %136 = memref.load %arg8[%c1] : memref<8xf32, #tpu.memory_space<smem>>
    %137 = vector.shape_cast %91 : vector<16x1xf32> to vector<1x16x1xf32>
    %cst_51 = arith.constant dense<0.000000e+00> : vector<1xf32>
    %138 = vector.multi_reduction <add>, %137, %cst_51 [1, 2] : vector<1x16x1xf32> to vector<1xf32>
    %139 = vector.shape_cast %138 : vector<1xf32> to vector<1x1x1xf32>
    %140 = vector.extract %139[0, 0, 0] : f32 from vector<1x1x1xf32>
    %141 = arith.addf %136, %140 : f32
    %c1_52 = arith.constant 1 : index
    %142 = memref.load %arg8[%c1_52] : memref<8xf32, #tpu.memory_space<smem>>
    memref.store %141, %arg8[%c1_52] : memref<8xf32, #tpu.memory_space<smem>>
    %c2 = arith.constant 2 : index
    %143 = memref.load %arg8[%c2] : memref<8xf32, #tpu.memory_space<smem>>
    %144 = arith.addf %143, %119 : f32
    %c2_53 = arith.constant 2 : index
    %145 = memref.load %arg8[%c2_53] : memref<8xf32, #tpu.memory_space<smem>>
    memref.store %144, %arg8[%c2_53] : memref<8xf32, #tpu.memory_space<smem>>
    %c3 = arith.constant 3 : index
    %146 = memref.load %arg8[%c3] : memref<8xf32, #tpu.memory_space<smem>>
    %147 = arith.addf %146, %127 : f32
    %c3_54 = arith.constant 3 : index
    %148 = memref.load %arg8[%c3_54] : memref<8xf32, #tpu.memory_space<smem>>
    memref.store %147, %arg8[%c3_54] : memref<8xf32, #tpu.memory_space<smem>>
    %149 = vector.shape_cast %68 : vector<16x1xf32> to vector<1x16x1xf32>
    %cst_55 = arith.constant dense<0xFF800000> : vector<1xf32>
    %150 = vector.multi_reduction <maximumf>, %149, %cst_55 [1, 2] : vector<1x16x1xf32> to vector<1xf32>
    %151 = vector.shape_cast %150 : vector<1xf32> to vector<1x1x1xf32>
    %152 = vector.extract %151[0, 0, 0] : f32 from vector<1x1x1xf32>
    %153 = vector.broadcast %152 : f32 to vector<16x1xf32>
    %154 = arith.subf %68, %153 : vector<16x1xf32>
    %155 = math.exp %154 : vector<16x1xf32>
    %cst_56 = arith.constant dense<0.000000e+00> : vector<1x16xf32>
    %156 = tpu.matmul %155, %71, %cst_56 {dimension_numbers = #tpu.dot_dimension_numbers<[0], [0], [1], [1], [0, 1, 1, 1], [], []>} : vector<16x1xf32>, vector<16x16xf32>, vector<1x16xf32> -> vector<1x16xf32>
    %cst_57 = arith.constant dense<0xFF800000> : vector<16xf32>
    %157 = vector.multi_reduction <maximumf>, %60, %cst_57 [0] : vector<16x16xf32> to vector<16xf32>
    %158 = vector.shape_cast %157 : vector<16xf32> to vector<1x16xf32>
    %c0_58 = arith.constant 0 : index
    %c0_59 = arith.constant 0 : index
    %159 = vector.load %arg7[%c0_58, %c0_59] : memref<8x16xf32, #tpu.memory_space<vmem>>, vector<1x16xf32>
    %c1_60 = arith.constant 1 : index
    %c0_61 = arith.constant 0 : index
    %160 = vector.load %arg7[%c1_60, %c0_61] : memref<8x16xf32, #tpu.memory_space<vmem>>, vector<1x16xf32>
    %161 = arith.maximumf %159, %158 : vector<1x16xf32>
    %162 = arith.subf %159, %161 : vector<1x16xf32>
    %163 = math.exp %162 : vector<1x16xf32>
    %164 = arith.mulf %160, %163 : vector<1x16xf32>
    %165 = vector.broadcast %152 : f32 to vector<1x16xf32>
    %166 = arith.subf %165, %161 : vector<1x16xf32>
    %167 = math.exp %166 : vector<1x16xf32>
    %168 = arith.mulf %156, %167 : vector<1x16xf32>
    %169 = arith.addf %164, %168 : vector<1x16xf32>
    %c0_62 = arith.constant 0 : index
    %c0_63 = arith.constant 0 : index
    %170 = vector.load %arg7[%c0_62, %c0_63] : memref<8x16xf32, #tpu.memory_space<vmem>>, vector<1x16xf32>
    tpu.vector_store %arg7[%c0_62, %c0_63], %161 {strides = array<i32>} : memref<8x16xf32, #tpu.memory_space<vmem>>, vector<1x16xf32>,
    %c1_64 = arith.constant 1 : index
    %c0_65 = arith.constant 0 : index
    %171 = vector.load %arg7[%c1_64, %c0_65] : memref<8x16xf32, #tpu.memory_space<vmem>>, vector<1x16xf32>
    tpu.vector_store %arg7[%c1_64, %c0_65], %169 {strides = array<i32>} : memref<8x16xf32, #tpu.memory_space<vmem>>, vector<1x16xf32>,
    %172 = vector.shape_cast %76 : vector<16x1xf32> to vector<1x16x1xf32>
    %cst_66 = arith.constant dense<0xFF800000> : vector<1xf32>
    %173 = vector.multi_reduction <maximumf>, %172, %cst_66 [1, 2] : vector<1x16x1xf32> to vector<1xf32>
    %174 = vector.shape_cast %173 : vector<1xf32> to vector<1x1x1xf32>
    %175 = vector.extract %174[0, 0, 0] : f32 from vector<1x1x1xf32>
    %176 = vector.broadcast %175 : f32 to vector<16x1xf32>
    %177 = arith.subf %76, %176 : vector<16x1xf32>
    %178 = math.exp %177 : vector<16x1xf32>
    %cst_67 = arith.constant dense<0.000000e+00> : vector<1x16xf32>
    %179 = tpu.matmul %178, %79, %cst_67 {dimension_numbers = #tpu.dot_dimension_numbers<[0], [0], [1], [1], [0, 1, 1, 1], [], []>} : vector<16x1xf32>, vector<16x16xf32>, vector<1x16xf32> -> vector<1x16xf32>
    %cst_68 = arith.constant dense<0xFF800000> : vector<16xf32>
    %180 = vector.multi_reduction <maximumf>, %65, %cst_68 [0] : vector<16x16xf32> to vector<16xf32>
    %181 = vector.shape_cast %180 : vector<16xf32> to vector<1x16xf32>
    %c2_69 = arith.constant 2 : index
    %c0_70 = arith.constant 0 : index
    %182 = vector.load %arg7[%c2_69, %c0_70] : memref<8x16xf32, #tpu.memory_space<vmem>>, vector<1x16xf32>
    %c3_71 = arith.constant 3 : index
    %c0_72 = arith.constant 0 : index
    %183 = vector.load %arg7[%c3_71, %c0_72] : memref<8x16xf32, #tpu.memory_space<vmem>>, vector<1x16xf32>
    %184 = arith.maximumf %182, %181 : vector<1x16xf32>
    %185 = arith.subf %182, %184 : vector<1x16xf32>
    %186 = math.exp %185 : vector<1x16xf32>
    %187 = arith.mulf %183, %186 : vector<1x16xf32>
    %188 = vector.broadcast %175 : f32 to vector<1x16xf32>
    %189 = arith.subf %188, %184 : vector<1x16xf32>
    %190 = math.exp %189 : vector<1x16xf32>
    %191 = arith.mulf %179, %190 : vector<1x16xf32>
    %192 = arith.addf %187, %191 : vector<1x16xf32>
    %c2_73 = arith.constant 2 : index
    %c0_74 = arith.constant 0 : index
    %193 = vector.load %arg7[%c2_73, %c0_74] : memref<8x16xf32, #tpu.memory_space<vmem>>, vector<1x16xf32>
    tpu.vector_store %arg7[%c2_73, %c0_74], %184 {strides = array<i32>} : memref<8x16xf32, #tpu.memory_space<vmem>>, vector<1x16xf32>,
    %c3_75 = arith.constant 3 : index
    %c0_76 = arith.constant 0 : index
    %194 = vector.load %arg7[%c3_75, %c0_76] : memref<8x16xf32, #tpu.memory_space<vmem>>, vector<1x16xf32>
    tpu.vector_store %arg7[%c3_75, %c0_76], %192 {strides = array<i32>} : memref<8x16xf32, #tpu.memory_space<vmem>>, vector<1x16xf32>,
    %c4 = arith.constant 4 : index
    %c0_77 = arith.constant 0 : index
    %195 = vector.load %arg7[%c4, %c0_77] : memref<8x16xf32, #tpu.memory_space<vmem>>, vector<1x16xf32>
    %cst_78 = arith.constant dense<0.000000e+00> : vector<16xf32>
    %196 = vector.multi_reduction <add>, %32, %cst_78 [0] : vector<16x16xf32> to vector<16xf32>
    %197 = vector.shape_cast %196 : vector<16xf32> to vector<1x16xf32>
    %198 = arith.addf %195, %197 : vector<1x16xf32>
    %c4_79 = arith.constant 4 : index
    %c0_80 = arith.constant 0 : index
    %199 = vector.load %arg7[%c4_79, %c0_80] : memref<8x16xf32, #tpu.memory_space<vmem>>, vector<1x16xf32>
    tpu.vector_store %arg7[%c4_79, %c0_80], %198 {strides = array<i32>} : memref<8x16xf32, #tpu.memory_space<vmem>>, vector<1x16xf32>,
    %c5 = arith.constant 5 : index
    %c0_81 = arith.constant 0 : index
    %200 = vector.load %arg7[%c5, %c0_81] : memref<8x16xf32, #tpu.memory_space<vmem>>, vector<1x16xf32>
    %cst_82 = arith.constant dense<0.000000e+00> : vector<16xf32>
    %201 = vector.multi_reduction <add>, %36, %cst_82 [0] : vector<16x16xf32> to vector<16xf32>
    %202 = vector.shape_cast %201 : vector<16xf32> to vector<1x16xf32>
    %203 = arith.addf %200, %202 : vector<1x16xf32>
    %c5_83 = arith.constant 5 : index
    %c0_84 = arith.constant 0 : index
    %204 = vector.load %arg7[%c5_83, %c0_84] : memref<8x16xf32, #tpu.memory_space<vmem>>, vector<1x16xf32>
    tpu.vector_store %arg7[%c5_83, %c0_84], %203 {strides = array<i32>} : memref<8x16xf32, #tpu.memory_space<vmem>>, vector<1x16xf32>,
    %c1_i32 = arith.constant 1 : i32
    %205 = arith.cmpi eq, %arg1, %c1_i32 : i32
    %206 = arith.extui %205 : i1 to i32
    %c0_i32_85 = arith.constant 0 : i32
    %207 = arith.cmpi ne, %206, %c0_i32_85 : i32
    scf.if %207 {
      %c0_86 = arith.constant 0 : index
      %c0_87 = arith.constant 0 : index
      %208 = vector.load %arg7[%c0_86, %c0_87] : memref<8x16xf32, #tpu.memory_space<vmem>>, vector<1x16xf32>
      %c1_88 = arith.constant 1 : index
      %c0_89 = arith.constant 0 : index
      %209 = vector.load %arg7[%c1_88, %c0_89] : memref<8x16xf32, #tpu.memory_space<vmem>>, vector<1x16xf32>
      %210 = math.log %209 : vector<1x16xf32>
      %211 = arith.addf %208, %210 : vector<1x16xf32>
      %c2_90 = arith.constant 2 : index
      %c0_91 = arith.constant 0 : index
      %212 = vector.load %arg7[%c2_90, %c0_91] : memref<8x16xf32, #tpu.memory_space<vmem>>, vector<1x16xf32>
      %c3_92 = arith.constant 3 : index
      %c0_93 = arith.constant 0 : index
      %213 = vector.load %arg7[%c3_92, %c0_93] : memref<8x16xf32, #tpu.memory_space<vmem>>, vector<1x16xf32>
      %214 = math.log %213 : vector<1x16xf32>
      %215 = arith.addf %212, %214 : vector<1x16xf32>
      %c4_94 = arith.constant 4 : index
      %c0_95 = arith.constant 0 : index
      %216 = vector.load %arg7[%c4_94, %c0_95] : memref<8x16xf32, #tpu.memory_space<vmem>>, vector<1x16xf32>
      %cst_96 = arith.constant 0.000000e+00 : f32
      %217 = vector.broadcast %cst_96 : f32 to vector<1x16xf32>
      %218 = arith.cmpf ogt, %216, %217 : vector<1x16xf32>
      %c5_97 = arith.constant 5 : index
      %c0_98 = arith.constant 0 : index
      %219 = vector.load %arg7[%c5_97, %c0_98] : memref<8x16xf32, #tpu.memory_space<vmem>>, vector<1x16xf32>
      %cst_99 = arith.constant 0.000000e+00 : f32
      %220 = vector.broadcast %cst_99 : f32 to vector<1x16xf32>
      %221 = arith.cmpf ogt, %219, %220 : vector<1x16xf32>
      %222 = arith.andi %218, %221 : vector<1x16xi1>
      %223 = arith.extui %222 : vector<1x16xi1> to vector<1x16xi32>
      %224 = arith.sitofp %223 : vector<1x16xi32> to vector<1x16xf32>
      %225 = arith.addf %211, %215 : vector<1x16xf32>
      %cst_100 = arith.constant 2.000000e+01 : f32
      %226 = vector.broadcast %cst_100 : f32 to vector<1x16xf32>
      %227 = arith.cmpf ogt, %225, %226 : vector<1x16xf32>
      %cst_101 = arith.constant 2.000000e+01 : f32
      %228 = vector.broadcast %cst_101 : f32 to vector<1x16xf32>
      %229 = arith.minimumf %225, %228 : vector<1x16xf32>
      %230 = math.exp %229 : vector<1x16xf32>
      %231 = math.log1p %230 : vector<1x16xf32>
      %232 = arith.select %227, %225, %231 : vector<1x16xi1>, vector<1x16xf32>
      %cst_102 = arith.constant 1.600000e+01 : f32
      %233 = vector.broadcast %cst_102 : f32 to vector<1x16xf32>
      %234 = arith.divf %232, %233 : vector<1x16xf32>
      %c0_103 = arith.constant 0 : index
      %235 = memref.load %arg8[%c0_103] : memref<8xf32, #tpu.memory_space<smem>>
      %c1_104 = arith.constant 1 : index
      %236 = memref.load %arg8[%c1_104] : memref<8xf32, #tpu.memory_space<smem>>
      %237 = arith.mulf %234, %224 : vector<1x16xf32>
      %238 = vector.shape_cast %237 : vector<1x16xf32> to vector<1x1x16xf32>
      %cst_105 = arith.constant dense<0.000000e+00> : vector<1xf32>
      %239 = vector.multi_reduction <add>, %238, %cst_105 [1, 2] : vector<1x1x16xf32> to vector<1xf32>
      %240 = vector.shape_cast %239 : vector<1xf32> to vector<1x1x1xf32>
      %241 = vector.extract %240[0, 0, 0] : f32 from vector<1x1x1xf32>
      %242 = vector.shape_cast %224 : vector<1x16xf32> to vector<1x1x16xf32>
      %cst_106 = arith.constant dense<0.000000e+00> : vector<1xf32>
      %243 = vector.multi_reduction <add>, %242, %cst_106 [1, 2] : vector<1x1x16xf32> to vector<1xf32>
      %244 = vector.shape_cast %243 : vector<1xf32> to vector<1x1x1xf32>
      %245 = vector.extract %244[0, 0, 0] : f32 from vector<1x1x1xf32>
      %c2_107 = arith.constant 2 : index
      %246 = memref.load %arg8[%c2_107] : memref<8xf32, #tpu.memory_space<smem>>
      %c3_108 = arith.constant 3 : index
      %247 = memref.load %arg8[%c3_108] : memref<8xf32, #tpu.memory_space<smem>>
      %248 = tpu.iota {dimensions = array<i32: 1>} : vector<8x128xi32>
      %cst_109 = arith.constant 0.000000e+00 : f32
      %249 = vector.broadcast %cst_109 : f32 to vector<8x128xf32>
      %c0_i32_110 = arith.constant 0 : i32
      %250 = vector.broadcast %c0_i32_110 : i32 to vector<8x128xi32>
      %251 = arith.cmpi eq, %248, %250 : vector<8x128xi32>
      %252 = vector.broadcast %235 : f32 to vector<8x128xf32>
      %253 = arith.select %251, %252, %249 : vector<8x128xi1>, vector<8x128xf32>
      %c1_i32_111 = arith.constant 1 : i32
      %254 = vector.broadcast %c1_i32_111 : i32 to vector<8x128xi32>
      %255 = arith.cmpi eq, %248, %254 : vector<8x128xi32>
      %256 = vector.broadcast %236 : f32 to vector<8x128xf32>
      %257 = arith.select %255, %256, %253 : vector<8x128xi1>, vector<8x128xf32>
      %c2_i32 = arith.constant 2 : i32
      %258 = vector.broadcast %c2_i32 : i32 to vector<8x128xi32>
      %259 = arith.cmpi eq, %248, %258 : vector<8x128xi32>
      %260 = vector.broadcast %241 : f32 to vector<8x128xf32>
      %261 = arith.select %259, %260, %257 : vector<8x128xi1>, vector<8x128xf32>
      %c3_i32 = arith.constant 3 : i32
      %262 = vector.broadcast %c3_i32 : i32 to vector<8x128xi32>
      %263 = arith.cmpi eq, %248, %262 : vector<8x128xi32>
      %264 = vector.broadcast %245 : f32 to vector<8x128xf32>
      %265 = arith.select %263, %264, %261 : vector<8x128xi1>, vector<8x128xf32>
      %c4_i32 = arith.constant 4 : i32
      %266 = vector.broadcast %c4_i32 : i32 to vector<8x128xi32>
      %267 = arith.cmpi eq, %248, %266 : vector<8x128xi32>
      %268 = vector.broadcast %246 : f32 to vector<8x128xf32>
      %269 = arith.select %267, %268, %265 : vector<8x128xi1>, vector<8x128xf32>
      %c5_i32 = arith.constant 5 : i32
      %270 = vector.broadcast %c5_i32 : i32 to vector<8x128xi32>
      %271 = arith.cmpi eq, %248, %270 : vector<8x128xi32>
      %272 = vector.broadcast %247 : f32 to vector<8x128xf32>
      %273 = arith.select %271, %272, %269 : vector<8x128xi1>, vector<8x128xf32>
      %c0_112 = arith.constant 0 : index
      %c0_113 = arith.constant 0 : index
      %c0_114 = arith.constant 0 : index
      %274 = vector.load %arg6[%c0_112, %c0_113, %c0_114] : memref<1x8x128xf32, #tpu.memory_space<vmem>>, vector<1x8x128xf32>
      %275 = vector.shape_cast %274 : vector<1x8x128xf32> to vector<8x128xf32>
      %276 = vector.shape_cast %273 : vector<8x128xf32> to vector<1x8x128xf32>
      tpu.vector_store %arg6[%c0_112, %c0_113, %c0_114], %276 {strides = array<i32>} : memref<1x8x128xf32, #tpu.memory_space<vmem>>, vector<1x8x128xf32>,
    } else {
    }
    return
  }
  func.func @transform_0(%arg0: i32, %arg1: i32) -> (i32, i32, i32) {
    %c0_i32 = arith.constant 0 : i32
    %c0_i32_0 = arith.constant 0 : i32
    return %arg0, %arg1, %c0_i32 : i32, i32, i32
  }
  func.func @transform_1(%arg0: i32, %arg1: i32) -> (i32, i32, i32) {
    %c0_i32 = arith.constant 0 : i32
    %c0_i32_0 = arith.constant 0 : i32
    %c0_i32_1 = arith.constant 0 : i32
    return %arg0, %c0_i32, %c0_i32_0 : i32, i32, i32
  }
  func.func @transform_2(%arg0: i32, %arg1: i32) -> (i32, i32, i32) {
    %c0_i32 = arith.constant 0 : i32
    %c0_i32_0 = arith.constant 0 : i32
    return %arg0, %arg1, %c0_i32 : i32, i32, i32
  }
  func.func @transform_3(%arg0: i32, %arg1: i32) -> (i32, i32, i32) {
    %c0_i32 = arith.constant 0 : i32
    %c0_i32_0 = arith.constant 0 : i32
    return %arg0, %arg1, %c0_i32 : i32, i32, i32
  }
  func.func @transform_4(%arg0: i32, %arg1: i32) -> (i32, i32, i32) {
    %c0_i32 = arith.constant 0 : i32
    %c0_i32_0 = arith.constant 0 : i32
    %c0_i32_1 = arith.constant 0 : i32
    return %arg0, %c0_i32, %c0_i32_0 : i32, i32, i32
  }
}

</mosaic_0001>

<llo_original>
// kernel: metric_loss_forward.3
$region0: #{metric_loss_forward.3}
  #allocation0 [shape = 'u32[]', space=smem, size = 0x4, offset = 0x4, fixed_abs, tag = 'smem constant byte address 0x4 - core index']
  #allocation1 [shape = 'u32[144,128]{1,0:T(1,128)}', space=vmem, size = 0x12000, scoped, tag = 'internal scratch']
  #allocation2 [shape = 'f32[8]{0:T(128)}', space=smem, size = 0x200, scoped, tag = 'scratch operand']
  %s0 = inlined_call_operand.vmem [shape: f32[2,9,9,256], index: 0, kind: input, shape index: {}]
  %s1 = inlined_call_operand.vmem [shape: f32[2,9,9,256], index: 1, kind: input, shape index: {}]
  %s2 = inlined_call_operand.vmem [shape: f32[2,9,256], index: 2, kind: input, shape index: {}]
  %s3 = inlined_call_operand.vmem [shape: f32[2,9,256], index: 3, kind: input, shape index: {}]
  %s4 = inlined_call_operand.vmem [shape: f32[2,8,128], index: 4, kind: output, shape index: {}]
  %s5 = sld [smem:[#allocation0]]
  $region209: #{metric_loss_forward.3} parent=0
    _
  %s7 = ssub.s32 1, %s5
  %s8 = scalar_select 0, %s7, %s5
  $region1: #{metric_loss_forward.3} parent=0
    #allocation3 [shape = 'u8[147456]{0}', space=vmem, size = 0x24000, scoped, tag = 'input window, operand 0']
    #allocation4 [shape = 'u8[147456]{0}', space=vmem, size = 0x24000, scoped, tag = 'input window, operand 1']
    #allocation5 [shape = 'u8[16384]{0}', space=vmem, size = 0x4000, scoped, tag = 'input window, operand 2']
    #allocation6 [shape = 'u8[16384]{0}', space=vmem, size = 0x4000, scoped, tag = 'input window, operand 3']
    loop: start=0, step=1, limit=6
    $region2: #{metric_loss_forward.3} parent=1 // loop_pre_header
      _
    $region3: #{metric_loss_forward.3} parent=1 // loop_header
      %s10 = sphi 0, %s14
      %p11 = scmp.ge.s32.totalorder %s10, 6
      %s17 = sphi 0, %s29
      %s18 = sphi 0, %s25
      %s19 = sphi 0, %s17
      %s20 = sphi 0, %s18
      %s21 = sphi 0, %s19
      %s22 = sphi 0, %s20
      %s34 = sphi 0, %s36
      %s37 = sphi 0, %s34
      %s38 = sphi 0, %s37
      %s54 = sphi 0, %s38
      %s62 = sphi 0, %s64
      %s65 = sphi 0, %s62
      %s66 = sphi 0, %s65
      %s82 = sphi 0, %s66
      %s90 = sphi 0, %s92
      %s93 = sphi 0, %s90
      %s94 = sphi 0, %s93
      %s110 = sphi 0, %s94
      %s118 = sphi 0, %s120
      %s121 = sphi 0, %s118
      %s122 = sphi 0, %s121
      %s138 = sphi 0, %s122
      %s144 = sphi 0, %s146
      %s147 = sphi 0, %s144
      %s148 = sphi 0, %s147
      %s164 = sphi 0, %s148
    $region4: #{metric_loss_forward.3} parent=1 // loop_header_branch
      %13 = sbr.rel (%p11) target = $region8
    $region5: #{metric_loss_forward.3} parent=1 // loop_body
      %s15 = ssub.s32 %s10, 1
      %s16 = ssub.s32 %s10, 2
      %s23 = sadd.s32 1, %s18
      %p24 = scmp.ge.s32.totalorder %s23, 2
      %s25 = scalar_select %p24, 0, %s23
      %s26 = sadd.s32 1, %s17
      %s27 = scalar_select %p24, %s26, %s17
      %p28 = scmp.ge.s32.totalorder %s27, 2
      %s29 = scalar_select %p28, 0, %s27
      %s30 = ssub.s32 %s17, %s29
      %s31 = ssub.s32 %s18, %s25
      %s32 = sor.u32 %s30, %s31
      %p33 = scmp.eq.s32.totalorder %s32, 0
      %s35 = sadd.s32 %s34, 1
      %s36 = scalar_select %p33, %s34, %s35
      %p39 = pneg %p33
      %p40 = scmp.eq.s32.totalorder %s10, 3
      %p41 = por %p39, %p40
      %p42 = scmp.ne.s32.totalorder %s34, %s37
      %p43 = scmp.eq.s32.totalorder %s10, 0
      %p44 = por %p42, %p43
      %p45 = scmp.ne.s32.totalorder %s34, %s37
      %p46 = scmp.eq.s32.totalorder %s15, 3
      %p47 = por %p45, %p46
      %p48 = scmp.ne.s32.totalorder %s37, %s38
      %p49 = scmp.eq.s32.totalorder %s15, 0
      %p50 = por %p48, %p49
      %p51 = scmp.ne.s32.totalorder %s37, %s38
      %p52 = scmp.eq.s32.totalorder %s16, 3
      %p53 = por %p51, %p52
      %p55 = scmp.ne.s32.totalorder %s38, %s54
      %p56 = scmp.eq.s32.totalorder %s16, 0
      %p57 = por %p55, %p56
      %s58 = ssub.s32 %s17, %s29
      %s59 = ssub.s32 %s18, %s25
      %s60 = sor.u32 %s58, %s59
      %p61 = scmp.eq.s32.totalorder %s60, 0
      %s63 = sadd.s32 %s62, 1
      %s64 = scalar_select %p61, %s62, %s63
      %p67 = pneg %p61
      %p68 = scmp.eq.s32.totalorder %s10, 3
      %p69 = por %p67, %p68
      %p70 = scmp.ne.s32.totalorder %s62, %s65
      %p71 = scmp.eq.s32.totalorder %s10, 0
      %p72 = por %p70, %p71
      %p73 = scmp.ne.s32.totalorder %s62, %s65
      %p74 = scmp.eq.s32.totalorder %s15, 3
      %p75 = por %p73, %p74
      %p76 = scmp.ne.s32.totalorder %s65, %s66
      %p77 = scmp.eq.s32.totalorder %s15, 0
      %p78 = por %p76, %p77
      %p79 = scmp.ne.s32.totalorder %s65, %s66
      %p80 = scmp.eq.s32.totalorder %s16, 3
      %p81 = por %p79, %p80
      %p83 = scmp.ne.s32.totalorder %s66, %s82
      %p84 = scmp.eq.s32.totalorder %s16, 0
      %p85 = por %p83, %p84
      %s86 = ssub.s32 %s17, %s29
      %s87 = ssub.s32 %s18, %s25
      %s88 = sor.u32 %s86, %s87
      %p89 = scmp.eq.s32.totalorder %s88, 0
      %s91 = sadd.s32 %s90, 1
      %s92 = scalar_select %p89, %s90, %s91
      %p95 = pneg %p89
      %p96 = scmp.eq.s32.totalorder %s10, 3
      %p97 = por %p95, %p96
      %p98 = scmp.ne.s32.totalorder %s90, %s93
      %p99 = scmp.eq.s32.totalorder %s10, 0
      %p100 = por %p98, %p99
      %p101 = scmp.ne.s32.totalorder %s90, %s93
      %p102 = scmp.eq.s32.totalorder %s15, 3
      %p103 = por %p101, %p102
      %p104 = scmp.ne.s32.totalorder %s93, %s94
      %p105 = scmp.eq.s32.totalorder %s15, 0
      %p106 = por %p104, %p105
      %p107 = scmp.ne.s32.totalorder %s93, %s94
      %p108 = scmp.eq.s32.totalorder %s16, 3
      %p109 = por %p107, %p108
      %p111 = scmp.ne.s32.totalorder %s94, %s110
      %p112 = scmp.eq.s32.totalorder %s16, 0
      %p113 = por %p111, %p112
      %s114 = ssub.s32 %s17, %s29
      %s115 = ssub.s32 %s18, %s25
      %s116 = sor.u32 %s114, %s115
      %p117 = scmp.eq.s32.totalorder %s116, 0
      %s119 = sadd.s32 %s118, 1
      %s120 = scalar_select %p117, %s118, %s119
      %p123 = pneg %p117
      %p124 = scmp.eq.s32.totalorder %s10, 3
      %p125 = por %p123, %p124
      %p126 = scmp.ne.s32.totalorder %s118, %s121
      %p127 = scmp.eq.s32.totalorder %s10, 0
      %p128 = por %p126, %p127
      %p129 = scmp.ne.s32.totalorder %s118, %s121
      %p130 = scmp.eq.s32.totalorder %s15, 3
      %p131 = por %p129, %p130
      %p132 = scmp.ne.s32.totalorder %s121, %s122
      %p133 = scmp.eq.s32.totalorder %s15, 0
      %p134 = por %p132, %p133
      %p135 = scmp.ne.s32.totalorder %s121, %s122
      %p136 = scmp.eq.s32.totalorder %s16, 3
      %p137 = por %p135, %p136
      %p139 = scmp.ne.s32.totalorder %s122, %s138
      %p140 = scmp.eq.s32.totalorder %s16, 0
      %p141 = por %p139, %p140
      %s142 = ssub.s32 %s17, %s29
      %p143 = scmp.eq.s32.totalorder %s142, 0
      %s145 = sadd.s32 %s144, 1
      %s146 = scalar_select %p143, %s144, %s145
      %p149 = pneg %p143
      %p150 = scmp.eq.s32.totalorder %s10, 3
      %p151 = por %p149, %p150
      %p152 = scmp.ne.s32.totalorder %s144, %s147
      %p153 = scmp.eq.s32.totalorder %s10, 0
      %p154 = por %p152, %p153
      %p155 = scmp.ne.s32.totalorder %s144, %s147
      %p156 = scmp.eq.s32.totalorder %s15, 3
      %p157 = por %p155, %p156
      %p158 = scmp.ne.s32.totalorder %s147, %s148
      %p159 = scmp.eq.s32.totalorder %s15, 0
      %p160 = por %p158, %p159
      %p161 = scmp.ne.s32.totalorder %s147, %s148
      %p162 = scmp.eq.s32.totalorder %s16, 3
      %p163 = por %p161, %p162
      %p165 = scmp.ne.s32.totalorder %s148, %s164
      %p166 = scmp.eq.s32.totalorder %s16, 0
      %p167 = por %p165, %p166
      %p168 = scmp.le.s32.totalorder 1, %s10
      %p169 = scmp.lt.s32.totalorder %s10, 5
      %p170 = pnand %p168, %p169
      %p171 = pneg %p170
      // Predicated region
      $region9: #{metric_loss_forward.3} parent=5 // pred_check
        _
      $region10: #{metric_loss_forward.3} parent=5 // pred_check_branch
        %173 = sbr.rel (%p170) target = $region12
      $region11: #{metric_loss_forward.3} parent=5 // pred_region
        %s174 = ssub.s32 %s10, 1
      $region12: #{metric_loss_forward.3} parent=5 // pred_fallthru
        _
      %p175 = scmp.lt.s32.totalorder %s10, 4
      // Predicated region
      $region13: #{metric_loss_forward.3} parent=5 // pred_check
        %p176 = pneg %p175
      $region14: #{metric_loss_forward.3} parent=5 // pred_check_branch
        %178 = sbr.rel (%p176) target = $region16
      $region15: #{metric_loss_forward.3} parent=5 // pred_region
        // Predicated region
        $region17: #{metric_loss_forward.3} parent=15 // pred_check
          %p179 = pneg %p44
        $region18: #{metric_loss_forward.3} parent=15 // pred_check_branch
          %181 = sbr.rel (%p179) target = $region20
        $region19: #{metric_loss_forward.3} parent=15 // pred_region
          %s182 = sand.u32 %s34, 1
          %s183 = sand.u32 %s34, 1
          %s184 = smul.addr %s183, 144
          %s185 = scalar_lea.vmem [#allocation3], %s184
          %s186 = smul.addr %s17, 36
          %s187 = sadd.s32 %s18, %s186
          %s188 = smul.addr %s187, 8
          %s189 = scalar_lea.vmem %s0, %s188
          // Predicated region
          $region21: #{metric_loss_forward.3} parent=19 // pred_check
            _
          $region22: #{metric_loss_forward.3} parent=19 // pred_check_branch
            %191 = sbr.rel (0) target = $region24
          $region23: #{metric_loss_forward.3} parent=19 // pred_region
            // Predicated region
            $region25: #{metric_loss_forward.3} parent=23 // pred_check
              _
            $region26: #{metric_loss_forward.3} parent=23 // pred_check_branch
              %193 = sbr.rel (0) target = $region28
            $region27: #{metric_loss_forward.3} parent=23 // pred_region
              // Predicated region
              $region40: #{metric_loss_forward.3} parent=27 // pred_check
                _
              $region41: #{metric_loss_forward.3} parent=27 // pred_check_branch
                %242 = sbr.rel (0) target = $region43
              $region42: #{metric_loss_forward.3} parent=27 // pred_region
                loop: start=0, step=1, limit=1
                $region44: #{metric_loss_forward.3} parent=42 // loop_pre_header
                  _
                $region45: #{metric_loss_forward.3} parent=42 // loop_header
                  %s244 = sphi 0, %s248
                  %p245 = scmp.ge.s32.totalorder %s244, 1
                  %s249 = sphi %s189, %s189
                  %s250 = sphi %s185, %s185
                $region46: #{metric_loss_forward.3} parent=42 // loop_header_branch
                  %247 = sbr.rel (%p245) target = $region50
                $region47: #{metric_loss_forward.3} parent=42 // loop_body
                  %v251 = vld [vmem:[%s249] sm:$0xff]
                  %252 = vst [vmem:[%s250] sm:$0xff] %v251
                  %v253 = vld [vmem:[%s249 + $0x10] sm:$0xff]
                  %254 = vst [vmem:[%s250 + $0x8] sm:$0xff] %v253
                  %v255 = vld [vmem:[%s249 + $0x20] sm:$0xff]
                  %256 = vst [vmem:[%s250 + $0x10] sm:$0xff] %v255
                  %v257 = vld [vmem:[%s249 + $0x30] sm:$0xff]
                  %258 = vst [vmem:[%s250 + $0x18] sm:$0xff] %v257
                  %v259 = vld [vmem:[%s249 + $0x40] sm:$0xff]
                  %260 = vst [vmem:[%s250 + $0x20] sm:$0xff] %v259
                  %v261 = vld [vmem:[%s249 + $0x50] sm:$0xff]
                  %262 = vst [vmem:[%s250 + $0x28] sm:$0xff] %v261
                  %v263 = vld [vmem:[%s249 + $0x60] sm:$0xff]
                  %264 = vst [vmem:[%s250 + $0x30] sm:$0xff] %v263
                  %v265 = vld [vmem:[%s249 + $0x70] sm:$0xff]
                  %266 = vst [vmem:[%s250 + $0x38] sm:$0xff] %v265
                  %v267 = vld [vmem:[%s249 + $0x80] sm:$0xff]
                  %268 = vst [vmem:[%s250 + $0x40] sm:$0xff] %v267
                  %v269 = vld [vmem:[%s249 + $0x90] sm:$0xff]
                  %270 = vst [vmem:[%s250 + $0x48] sm:$0xff] %v269
                  %v271 = vld [vmem:[%s249 + $0xa0] sm:$0xff]
                  %272 = vst [vmem:[%s250 + $0x50] sm:$0xff] %v271
                  %v273 = vld [vmem:[%s249 + $0xb0] sm:$0xff]
                  %274 = vst [vmem:[%s250 + $0x58] sm:$0xff] %v273
                  %v275 = vld [vmem:[%s249 + $0xc0] sm:$0xff]
                  %276 = vst [vmem:[%s250 + $0x60] sm:$0xff] %v275
                  %v277 = vld [vmem:[%s249 + $0xd0] sm:$0xff]
                  %278 = vst [vmem:[%s250 + $0x68] sm:$0xff] %v277
                  %v279 = vld [vmem:[%s249 + $0xe0] sm:$0xff]
                  %280 = vst [vmem:[%s250 + $0x70] sm:$0xff] %v279
                  %v281 = vld [vmem:[%s249 + $0xf0] sm:$0xff]
                  %282 = vst [vmem:[%s250 + $0x78] sm:$0xff] %v281
                  %v283 = vld [vmem:[%s249 + $0x100] sm:$0xff]
                  %284 = vst [vmem:[%s250 + $0x80] sm:$0xff] %v283
                  %v285 = vld [vmem:[%s249 + $0x110] sm:$0xff]
                  %286 = vst [vmem:[%s250 + $0x88] sm:$0xff] %v285
                $region48: #{metric_loss_forward.3} parent=42 // loop_footer
                  %s248 = sadd.s32 1, %s244
                $region49: #{metric_loss_forward.3} parent=42 // loop_footer_branch
                  %243 = sbr.rel target = $region45
                $region50: #{metric_loss_forward.3} parent=42 // loop_exit
                  _
              $region43: #{metric_loss_forward.3} parent=27 // pred_fallthru
                _
              // Predicated region
              $region51: #{metric_loss_forward.3} parent=27 // pred_check
                _
              $region52: #{metric_loss_forward.3} parent=27 // pred_check_branch
                %288 = sbr.rel target = $region54
              $region53: #{metric_loss_forward.3} parent=27 // pred_region
                _
              $region54: #{metric_loss_forward.3} parent=27 // pred_fallthru
                _
            $region28: #{metric_loss_forward.3} parent=23 // pred_fallthru
              _
            // Predicated region
            $region29: #{metric_loss_forward.3} parent=23 // pred_check
              _
            $region30: #{metric_loss_forward.3} parent=23 // pred_check_branch
              %195 = sbr.rel target = $region32
            $region31: #{metric_loss_forward.3} parent=23 // pred_region
              loop: start=0, step=1, limit=1
              $region33: #{metric_loss_forward.3} parent=31 // loop_pre_header
                _
              $region34: #{metric_loss_forward.3} parent=31 // loop_header
                %s198 = sphi 0, %s202
                %p199 = scmp.ge.s32.totalorder %s198, 1
                %s203 = sphi %s189, %s189
                %s204 = sphi %s185, %s185
              $region35: #{metric_loss_forward.3} parent=31 // loop_header_branch
                %201 = sbr.rel (%p199) target = $region39
              $region36: #{metric_loss_forward.3} parent=31 // loop_body
                %v205 = vld [vmem:[%s203] sm:$0xff]
                %206 = vst [vmem:[%s204] sm:$0xff] %v205
                %v207 = vld [vmem:[%s203 + $0x10] sm:$0xff]
                %208 = vst [vmem:[%s204 + $0x8] sm:$0xff] %v207
                %v209 = vld [vmem:[%s203 + $0x20] sm:$0xff]
                %210 = vst [vmem:[%s204 + $0x10] sm:$0xff] %v209
                %v211 = vld [vmem:[%s203 + $0x30] sm:$0xff]
                %212 = vst [vmem:[%s204 + $0x18] sm:$0xff] %v211
                %v213 = vld [vmem:[%s203 + $0x40] sm:$0xff]
                %214 = vst [vmem:[%s204 + $0x20] sm:$0xff] %v213
                %v215 = vld [vmem:[%s203 + $0x50] sm:$0xff]
                %216 = vst [vmem:[%s204 + $0x28] sm:$0xff] %v215
                %v217 = vld [vmem:[%s203 + $0x60] sm:$0xff]
                %218 = vst [vmem:[%s204 + $0x30] sm:$0xff] %v217
                %v219 = vld [vmem:[%s203 + $0x70] sm:$0xff]
                %220 = vst [vmem:[%s204 + $0x38] sm:$0xff] %v219
                %v221 = vld [vmem:[%s203 + $0x80] sm:$0xff]
                %222 = vst [vmem:[%s204 + $0x40] sm:$0xff] %v221
                %v223 = vld [vmem:[%s203 + $0x90] sm:$0xff]
                %224 = vst [vmem:[%s204 + $0x48] sm:$0xff] %v223
                %v225 = vld [vmem:[%s203 + $0xa0] sm:$0xff]
                %226 = vst [vmem:[%s204 + $0x50] sm:$0xff] %v225
                %v227 = vld [vmem:[%s203 + $0xb0] sm:$0xff]
                %228 = vst [vmem:[%s204 + $0x58] sm:$0xff] %v227
                %v229 = vld [vmem:[%s203 + $0xc0] sm:$0xff]
                %230 = vst [vmem:[%s204 + $0x60] sm:$0xff] %v229
                %v231 = vld [vmem:[%s203 + $0xd0] sm:$0xff]
                %232 = vst [vmem:[%s204 + $0x68] sm:$0xff] %v231
                %v233 = vld [vmem:[%s203 + $0xe0] sm:$0xff]
                %234 = vst [vmem:[%s204 + $0x70] sm:$0xff] %v233
                %v235 = vld [vmem:[%s203 + $0xf0] sm:$0xff]
                %236 = vst [vmem:[%s204 + $0x78] sm:$0xff] %v235
                %v237 = vld [vmem:[%s203 + $0x100] sm:$0xff]
                %238 = vst [vmem:[%s204 + $0x80] sm:$0xff] %v237
                %v239 = vld [vmem:[%s203 + $0x110] sm:$0xff]
                %240 = vst [vmem:[%s204 + $0x88] sm:$0xff] %v239
              $region37: #{metric_loss_forward.3} parent=31 // loop_footer
                %s202 = sadd.s32 1, %s198
              $region38: #{metric_loss_forward.3} parent=31 // loop_footer_branch
                %197 = sbr.rel target = $region34
              $region39: #{metric_loss_forward.3} parent=31 // loop_exit
                _
            $region32: #{metric_loss_forward.3} parent=23 // pred_fallthru
              _
          $region24: #{metric_loss_forward.3} parent=19 // pred_fallthru
            _
          %289 = vnop
        $region20: #{metric_loss_forward.3} parent=15 // pred_fallthru
          _
        // Predicated region
        $region55: #{metric_loss_forward.3} parent=15 // pred_check
          %p290 = pneg %p72
        $region56: #{metric_loss_forward.3} parent=15 // pred_check_branch
          %292 = sbr.rel (%p290) target = $region58
        $region57: #{metric_loss_forward.3} parent=15 // pred_region
          %s293 = sand.u32 %s62, 1
          %s294 = sand.u32 %s62, 1
          %s295 = smul.addr %s294, 144
          %s296 = scalar_lea.vmem [#allocation4], %s295
          %s297 = smul.addr %s17, 36
          %s298 = sadd.s32 %s18, %s297
          %s299 = smul.addr %s298, 8
          %s300 = scalar_lea.vmem %s1, %s299
          // Predicated region
          $region59: #{metric_loss_forward.3} parent=57 // pred_check
            _
          $region60: #{metric_loss_forward.3} parent=57 // pred_check_branch
            %302 = sbr.rel (0) target = $region62
          $region61: #{metric_loss_forward.3} parent=57 // pred_region
            // Predicated region
            $region63: #{metric_loss_forward.3} parent=61 // pred_check
              _
            $region64: #{metric_loss_forward.3} parent=61 // pred_check_branch
              %304 = sbr.rel (0) target = $region66
            $region65: #{metric_loss_forward.3} parent=61 // pred_region
              // Predicated region
              $region78: #{metric_loss_forward.3} parent=65 // pred_check
                _
              $region79: #{metric_loss_forward.3} parent=65 // pred_check_branch
                %353 = sbr.rel (0) target = $region81
              $region80: #{metric_loss_forward.3} parent=65 // pred_region
                loop: start=0, step=1, limit=1
                $region82: #{metric_loss_forward.3} parent=80 // loop_pre_header
                  _
                $region83: #{metric_loss_forward.3} parent=80 // loop_header
                  %s355 = sphi 0, %s359
                  %p356 = scmp.ge.s32.totalorder %s355, 1
                  %s360 = sphi %s300, %s300
                  %s361 = sphi %s296, %s296
                $region84: #{metric_loss_forward.3} parent=80 // loop_header_branch
                  %358 = sbr.rel (%p356) target = $region88
                $region85: #{metric_loss_forward.3} parent=80 // loop_body
                  %v362 = vld [vmem:[%s360] sm:$0xff]
                  %363 = vst [vmem:[%s361] sm:$0xff] %v362
                  %v364 = vld [vmem:[%s360 + $0x10] sm:$0xff]
                  %365 = vst [vmem:[%s361 + $0x8] sm:$0xff] %v364
                  %v366 = vld [vmem:[%s360 + $0x20] sm:$0xff]
                  %367 = vst [vmem:[%s361 + $0x10] sm:$0xff] %v366
                  %v368 = vld [vmem:[%s360 + $0x30] sm:$0xff]
                  %369 = vst [vmem:[%s361 + $0x18] sm:$0xff] %v368
                  %v370 = vld [vmem:[%s360 + $0x40] sm:$0xff]
                  %371 = vst [vmem:[%s361 + $0x20] sm:$0xff] %v370
                  %v372 = vld [vmem:[%s360 + $0x50] sm:$0xff]
                  %373 = vst [vmem:[%s361 + $0x28] sm:$0xff] %v372
                  %v374 = vld [vmem:[%s360 + $0x60] sm:$0xff]
                  %375 = vst [vmem:[%s361 + $0x30] sm:$0xff] %v374
                  %v376 = vld [vmem:[%s360 + $0x70] sm:$0xff]
                  %377 = vst [vmem:[%s361 + $0x38] sm:$0xff] %v376
                  %v378 = vld [vmem:[%s360 + $0x80] sm:$0xff]
                  %379 = vst [vmem:[%s361 + $0x40] sm:$0xff] %v378
                  %v380 = vld [vmem:[%s360 + $0x90] sm:$0xff]
                  %381 = vst [vmem:[%s361 + $0x48] sm:$0xff] %v380
                  %v382 = vld [vmem:[%s360 + $0xa0] sm:$0xff]
                  %383 = vst [vmem:[%s361 + $0x50] sm:$0xff] %v382
                  %v384 = vld [vmem:[%s360 + $0xb0] sm:$0xff]
                  %385 = vst [vmem:[%s361 + $0x58] sm:$0xff] %v384
                  %v386 = vld [vmem:[%s360 + $0xc0] sm:$0xff]
                  %387 = vst [vmem:[%s361 + $0x60] sm:$0xff] %v386
                  %v388 = vld [vmem:[%s360 + $0xd0] sm:$0xff]
                  %389 = vst [vmem:[%s361 + $0x68] sm:$0xff] %v388
                  %v390 = vld [vmem:[%s360 + $0xe0] sm:$0xff]
                  %391 = vst [vmem:[%s361 + $0x70] sm:$0xff] %v390
                  %v392 = vld [vmem:[%s360 + $0xf0] sm:$0xff]
                  %393 = vst [vmem:[%s361 + $0x78] sm:$0xff] %v392
                  %v394 = vld [vmem:[%s360 + $0x100] sm:$0xff]
                  %395 = vst [vmem:[%s361 + $0x80] sm:$0xff] %v394
                  %v396 = vld [vmem:[%s360 + $0x110] sm:$0xff]
                  %397 = vst [vmem:[%s361 + $0x88] sm:$0xff] %v396
                $region86: #{metric_loss_forward.3} parent=80 // loop_footer
                  %s359 = sadd.s32 1, %s355
                $region87: #{metric_loss_forward.3} parent=80 // loop_footer_branch
                  %354 = sbr.rel target = $region83
                $region88: #{metric_loss_forward.3} parent=80 // loop_exit
                  _
              $region81: #{metric_loss_forward.3} parent=65 // pred_fallthru
                _
              // Predicated region
              $region89: #{metric_loss_forward.3} parent=65 // pred_check
                _
              $region90: #{metric_loss_forward.3} parent=65 // pred_check_branch
                %399 = sbr.rel target = $region92
              $region91: #{metric_loss_forward.3} parent=65 // pred_region
                _
              $region92: #{metric_loss_forward.3} parent=65 // pred_fallthru
                _
            $region66: #{metric_loss_forward.3} parent=61 // pred_fallthru
              _
            // Predicated region
            $region67: #{metric_loss_forward.3} parent=61 // pred_check
              _
            $region68: #{metric_loss_forward.3} parent=61 // pred_check_branch
              %306 = sbr.rel target = $region70
            $region69: #{metric_loss_forward.3} parent=61 // pred_region
              loop: start=0, step=1, limit=1
              $region71: #{metric_loss_forward.3} parent=69 // loop_pre_header
                _
              $region72: #{metric_loss_forward.3} parent=69 // loop_header
                %s309 = sphi 0, %s313
                %p310 = scmp.ge.s32.totalorder %s309, 1
                %s314 = sphi %s300, %s300
                %s315 = sphi %s296, %s296
              $region73: #{metric_loss_forward.3} parent=69 // loop_header_branch
                %312 = sbr.rel (%p310) target = $region77
              $region74: #{metric_loss_forward.3} parent=69 // loop_body
                %v316 = vld [vmem:[%s314] sm:$0xff]
                %317 = vst [vmem:[%s315] sm:$0xff] %v316
                %v318 = vld [vmem:[%s314 + $0x10] sm:$0xff]
                %319 = vst [vmem:[%s315 + $0x8] sm:$0xff] %v318
                %v320 = vld [vmem:[%s314 + $0x20] sm:$0xff]
                %321 = vst [vmem:[%s315 + $0x10] sm:$0xff] %v320
                %v322 = vld [vmem:[%s314 + $0x30] sm:$0xff]
                %323 = vst [vmem:[%s315 + $0x18] sm:$0xff] %v322
                %v324 = vld [vmem:[%s314 + $0x40] sm:$0xff]
                %325 = vst [vmem:[%s315 + $0x20] sm:$0xff] %v324
                %v326 = vld [vmem:[%s314 + $0x50] sm:$0xff]
                %327 = vst [vmem:[%s315 + $0x28] sm:$0xff] %v326
                %v328 = vld [vmem:[%s314 + $0x60] sm:$0xff]
                %329 = vst [vmem:[%s315 + $0x30] sm:$0xff] %v328
                %v330 = vld [vmem:[%s314 + $0x70] sm:$0xff]
                %331 = vst [vmem:[%s315 + $0x38] sm:$0xff] %v330
                %v332 = vld [vmem:[%s314 + $0x80] sm:$0xff]
                %333 = vst [vmem:[%s315 + $0x40] sm:$0xff] %v332
                %v334 = vld [vmem:[%s314 + $0x90] sm:$0xff]
                %335 = vst [vmem:[%s315 + $0x48] sm:$0xff] %v334
                %v336 = vld [vmem:[%s314 + $0xa0] sm:$0xff]
                %337 = vst [vmem:[%s315 + $0x50] sm:$0xff] %v336
                %v338 = vld [vmem:[%s314 + $0xb0] sm:$0xff]
                %339 = vst [vmem:[%s315 + $0x58] sm:$0xff] %v338
                %v340 = vld [vmem:[%s314 + $0xc0] sm:$0xff]
                %341 = vst [vmem:[%s315 + $0x60] sm:$0xff] %v340
                %v342 = vld [vmem:[%s314 + $0xd0] sm:$0xff]
                %343 = vst [vmem:[%s315 + $0x68] sm:$0xff] %v342
                %v344 = vld [vmem:[%s314 + $0xe0] sm:$0xff]
                %345 = vst [vmem:[%s315 + $0x70] sm:$0xff] %v344
                %v346 = vld [vmem:[%s314 + $0xf0] sm:$0xff]
                %347 = vst [vmem:[%s315 + $0x78] sm:$0xff] %v346
                %v348 = vld [vmem:[%s314 + $0x100] sm:$0xff]
                %349 = vst [vmem:[%s315 + $0x80] sm:$0xff] %v348
                %v350 = vld [vmem:[%s314 + $0x110] sm:$0xff]
                %351 = vst [vmem:[%s315 + $0x88] sm:$0xff] %v350
              $region75: #{metric_loss_forward.3} parent=69 // loop_footer
                %s313 = sadd.s32 1, %s309
              $region76: #{metric_loss_forward.3} parent=69 // loop_footer_branch
                %308 = sbr.rel target = $region72
              $region77: #{metric_loss_forward.3} parent=69 // loop_exit
                _
            $region70: #{metric_loss_forward.3} parent=61 // pred_fallthru
              _
          $region62: #{metric_loss_forward.3} parent=57 // pred_fallthru
            _
          %400 = vnop
        $region58: #{metric_loss_forward.3} parent=15 // pred_fallthru
          _
        // Predicated region
        $region93: #{metric_loss_forward.3} parent=15 // pred_check
          %p401 = pneg %p100
        $region94: #{metric_loss_forward.3} parent=15 // pred_check_branch
          %403 = sbr.rel (%p401) target = $region96
        $region95: #{metric_loss_forward.3} parent=15 // pred_region
          %s404 = sand.u32 %s90, 1
          %s405 = sand.u32 %s90, 1
          %s406 = smul.addr %s405, 16
          %s407 = scalar_lea.vmem [#allocation5], %s406
          %s408 = smul.addr %s17, 4
          %s409 = sadd.s32 %s18, %s408
          %s410 = smul.addr %s409, 8
          %s411 = scalar_lea.vmem %s2, %s410
          // Predicated region
          $region97: #{metric_loss_forward.3} parent=95 // pred_check
            _
          $region98: #{metric_loss_forward.3} parent=95 // pred_check_branch
            %413 = sbr.rel (0) target = $region100
          $region99: #{metric_loss_forward.3} parent=95 // pred_region
            // Predicated region
            $region101: #{metric_loss_forward.3} parent=99 // pred_check
              _
            $region102: #{metric_loss_forward.3} parent=99 // pred_check_branch
              %415 = sbr.rel (0) target = $region104
            $region103: #{metric_loss_forward.3} parent=99 // pred_region
              // Predicated region
              $region116: #{metric_loss_forward.3} parent=103 // pred_check
                _
              $region117: #{metric_loss_forward.3} parent=103 // pred_check_branch
                %432 = sbr.rel (0) target = $region119
              $region118: #{metric_loss_forward.3} parent=103 // pred_region
                loop: start=0, step=1, limit=1
                $region120: #{metric_loss_forward.3} parent=118 // loop_pre_header
                  _
                $region121: #{metric_loss_forward.3} parent=118 // loop_header
                  %s434 = sphi 0, %s438
                  %p435 = scmp.ge.s32.totalorder %s434, 1
                  %s439 = sphi %s411, %s411
                  %s440 = sphi %s407, %s407
                $region122: #{metric_loss_forward.3} parent=118 // loop_header_branch
                  %437 = sbr.rel (%p435) target = $region126
                $region123: #{metric_loss_forward.3} parent=118 // loop_body
                  %v441 = vld [vmem:[%s439] sm:$0xff]
                  %442 = vst [vmem:[%s440] sm:$0xff] %v441
                  %v443 = vld [vmem:[%s439 + $0x10] sm:$0xff]
                  %444 = vst [vmem:[%s440 + $0x8] sm:$0xff] %v443
                $region124: #{metric_loss_forward.3} parent=118 // loop_footer
                  %s438 = sadd.s32 1, %s434
                $region125: #{metric_loss_forward.3} parent=118 // loop_footer_branch
                  %433 = sbr.rel target = $region121
                $region126: #{metric_loss_forward.3} parent=118 // loop_exit
                  _
              $region119: #{metric_loss_forward.3} parent=103 // pred_fallthru
                _
              // Predicated region
              $region127: #{metric_loss_forward.3} parent=103 // pred_check
                _
              $region128: #{metric_loss_forward.3} parent=103 // pred_check_branch
                %446 = sbr.rel target = $region130
              $region129: #{metric_loss_forward.3} parent=103 // pred_region
                _
              $region130: #{metric_loss_forward.3} parent=103 // pred_fallthru
                _
            $region104: #{metric_loss_forward.3} parent=99 // pred_fallthru
              _
            // Predicated region
            $region105: #{metric_loss_forward.3} parent=99 // pred_check
              _
            $region106: #{metric_loss_forward.3} parent=99 // pred_check_branch
              %417 = sbr.rel target = $region108
            $region107: #{metric_loss_forward.3} parent=99 // pred_region
              loop: start=0, step=1, limit=1
              $region109: #{metric_loss_forward.3} parent=107 // loop_pre_header
                _
              $region110: #{metric_loss_forward.3} parent=107 // loop_header
                %s420 = sphi 0, %s424
                %p421 = scmp.ge.s32.totalorder %s420, 1
                %s425 = sphi %s411, %s411
                %s426 = sphi %s407, %s407
              $region111: #{metric_loss_forward.3} parent=107 // loop_header_branch
                %423 = sbr.rel (%p421) target = $region115
              $region112: #{metric_loss_forward.3} parent=107 // loop_body
                %v427 = vld [vmem:[%s425] sm:$0xff]
                %428 = vst [vmem:[%s426] sm:$0xff] %v427
                %v429 = vld [vmem:[%s425 + $0x10] sm:$0xff]
                %430 = vst [vmem:[%s426 + $0x8] sm:$0xff] %v429
              $region113: #{metric_loss_forward.3} parent=107 // loop_footer
                %s424 = sadd.s32 1, %s420
              $region114: #{metric_loss_forward.3} parent=107 // loop_footer_branch
                %419 = sbr.rel target = $region110
              $region115: #{metric_loss_forward.3} parent=107 // loop_exit
                _
            $region108: #{metric_loss_forward.3} parent=99 // pred_fallthru
              _
          $region100: #{metric_loss_forward.3} parent=95 // pred_fallthru
            _
          %447 = vnop
        $region96: #{metric_loss_forward.3} parent=15 // pred_fallthru
          _
        // Predicated region
        $region131: #{metric_loss_forward.3} parent=15 // pred_check
          %p448 = pneg %p128
        $region132: #{metric_loss_forward.3} parent=15 // pred_check_branch
          %450 = sbr.rel (%p448) target = $region134
        $region133: #{metric_loss_forward.3} parent=15 // pred_region
          %s451 = sand.u32 %s118, 1
          %s452 = sand.u32 %s118, 1
          %s453 = smul.addr %s452, 16
          %s454 = scalar_lea.vmem [#allocation6], %s453
          %s455 = smul.addr %s17, 4
          %s456 = sadd.s32 %s18, %s455
          %s457 = smul.addr %s456, 8
          %s458 = scalar_lea.vmem %s3, %s457
          // Predicated region
          $region135: #{metric_loss_forward.3} parent=133 // pred_check
            _
          $region136: #{metric_loss_forward.3} parent=133 // pred_check_branch
            %460 = sbr.rel (0) target = $region138
          $region137: #{metric_loss_forward.3} parent=133 // pred_region
            // Predicated region
            $region139: #{metric_loss_forward.3} parent=137 // pred_check
              _
            $region140: #{metric_loss_forward.3} parent=137 // pred_check_branch
              %462 = sbr.rel (0) target = $region142
            $region141: #{metric_loss_forward.3} parent=137 // pred_region
              // Predicated region
              $region154: #{metric_loss_forward.3} parent=141 // pred_check
                _
              $region155: #{metric_loss_forward.3} parent=141 // pred_check_branch
                %479 = sbr.rel (0) target = $region157
              $region156: #{metric_loss_forward.3} parent=141 // pred_region
                loop: start=0, step=1, limit=1
                $region158: #{metric_loss_forward.3} parent=156 // loop_pre_header
                  _
                $region159: #{metric_loss_forward.3} parent=156 // loop_header
                  %s481 = sphi 0, %s485
                  %p482 = scmp.ge.s32.totalorder %s481, 1
                  %s486 = sphi %s458, %s458
                  %s487 = sphi %s454, %s454
                $region160: #{metric_loss_forward.3} parent=156 // loop_header_branch
                  %484 = sbr.rel (%p482) target = $region164
                $region161: #{metric_loss_forward.3} parent=156 // loop_body
                  %v488 = vld [vmem:[%s486] sm:$0xff]
                  %489 = vst [vmem:[%s487] sm:$0xff] %v488
                  %v490 = vld [vmem:[%s486 + $0x10] sm:$0xff]
                  %491 = vst [vmem:[%s487 + $0x8] sm:$0xff] %v490
                $region162: #{metric_loss_forward.3} parent=156 // loop_footer
                  %s485 = sadd.s32 1, %s481
                $region163: #{metric_loss_forward.3} parent=156 // loop_footer_branch
                  %480 = sbr.rel target = $region159
                $region164: #{metric_loss_forward.3} parent=156 // loop_exit
                  _
              $region157: #{metric_loss_forward.3} parent=141 // pred_fallthru
                _
              // Predicated region
              $region165: #{metric_loss_forward.3} parent=141 // pred_check
                _
              $region166: #{metric_loss_forward.3} parent=141 // pred_check_branch
                %493 = sbr.rel target = $region168
              $region167: #{metric_loss_forward.3} parent=141 // pred_region
                _
              $region168: #{metric_loss_forward.3} parent=141 // pred_fallthru
                _
            $region142: #{metric_loss_forward.3} parent=137 // pred_fallthru
              _
            // Predicated region
            $region143: #{metric_loss_forward.3} parent=137 // pred_check
              _
            $region144: #{metric_loss_forward.3} parent=137 // pred_check_branch
              %464 = sbr.rel target = $region146
            $region145: #{metric_loss_forward.3} parent=137 // pred_region
              loop: start=0, step=1, limit=1
              $region147: #{metric_loss_forward.3} parent=145 // loop_pre_header
                _
              $region148: #{metric_loss_forward.3} parent=145 // loop_header
                %s467 = sphi 0, %s471
                %p468 = scmp.ge.s32.totalorder %s467, 1
                %s472 = sphi %s458, %s458
                %s473 = sphi %s454, %s454
              $region149: #{metric_loss_forward.3} parent=145 // loop_header_branch
                %470 = sbr.rel (%p468) target = $region153
              $region150: #{metric_loss_forward.3} parent=145 // loop_body
                %v474 = vld [vmem:[%s472] sm:$0xff]
                %475 = vst [vmem:[%s473] sm:$0xff] %v474
                %v476 = vld [vmem:[%s472 + $0x10] sm:$0xff]
                %477 = vst [vmem:[%s473 + $0x8] sm:$0xff] %v476
              $region151: #{metric_loss_forward.3} parent=145 // loop_footer
                %s471 = sadd.s32 1, %s467
              $region152: #{metric_loss_forward.3} parent=145 // loop_footer_branch
                %466 = sbr.rel target = $region148
              $region153: #{metric_loss_forward.3} parent=145 // loop_exit
                _
            $region146: #{metric_loss_forward.3} parent=137 // pred_fallthru
              _
          $region138: #{metric_loss_forward.3} parent=133 // pred_fallthru
            _
          %494 = vnop
        $region134: #{metric_loss_forward.3} parent=15 // pred_fallthru
          _
      $region16: #{metric_loss_forward.3} parent=5 // pred_fallthru
        _
      %p495 = scmp.le.s32.totalorder 1, %s10
      %p496 = scmp.lt.s32.totalorder %s10, 5
      %p497 = pnand %p495, %p496
      %p498 = pneg %p497
      // Predicated region
      $region169: #{metric_loss_forward.3} parent=5 // pred_check
        _
      $region170: #{metric_loss_forward.3} parent=5 // pred_check_branch
        %500 = sbr.rel (%p497) target = $region172
      $region171: #{metric_loss_forward.3} parent=5 // pred_region
        %s501 = ssub.s32 %s10, 1
        %s502 = sand.u32 %s37, 1
        %s503 = sand.u32 %s37, 1
        %s504 = smul.addr %s503, 144
        %s505 = scalar_lea.vmem [#allocation3], %s504
        // Predicated region
        $region173: #{metric_loss_forward.3} parent=171 // pred_check
          %p506 = pneg %p50
        $region174: #{metric_loss_forward.3} parent=171 // pred_check_branch
          %508 = sbr.rel (%p506) target = $region176
        $region175: #{metric_loss_forward.3} parent=171 // pred_region
          _
        $region176: #{metric_loss_forward.3} parent=171 // pred_fallthru
          _
        %s509 = sand.u32 %s65, 1
        %s510 = sand.u32 %s65, 1
        %s511 = smul.addr %s510, 144
        %s512 = scalar_lea.vmem [#allocation4], %s511
        // Predicated region
        $region177: #{metric_loss_forward.3} parent=171 // pred_check
          %p513 = pneg %p78
        $region178: #{metric_loss_forward.3} parent=171 // pred_check_branch
          %515 = sbr.rel (%p513) target = $region180
        $region179: #{metric_loss_forward.3} parent=171 // pred_region
          _
        $region180: #{metric_loss_forward.3} parent=171 // pred_fallthru
          _
        %s516 = sand.u32 %s93, 1
        %s517 = sand.u32 %s93, 1
        %s518 = smul.addr %s517, 16
        %s519 = scalar_lea.vmem [#allocation5], %s518
        // Predicated region
        $region181: #{metric_loss_forward.3} parent=171 // pred_check
          %p520 = pneg %p106
        $region182: #{metric_loss_forward.3} parent=171 // pred_check_branch
          %522 = sbr.rel (%p520) target = $region184
        $region183: #{metric_loss_forward.3} parent=171 // pred_region
          _
        $region184: #{metric_loss_forward.3} parent=171 // pred_fallthru
          _
        %s523 = sand.u32 %s121, 1
        %s524 = sand.u32 %s121, 1
        %s525 = smul.addr %s524, 16
        %s526 = scalar_lea.vmem [#allocation6], %s525
        // Predicated region
        $region185: #{metric_loss_forward.3} parent=171 // pred_check
          %p527 = pneg %p134
        $region186: #{metric_loss_forward.3} parent=171 // pred_check_branch
          %529 = sbr.rel (%p527) target = $region188
        $region187: #{metric_loss_forward.3} parent=171 // pred_region
          _
        $region188: #{metric_loss_forward.3} parent=171 // pred_fallthru
          _
        %s530 = sand.u32 %s37, 1
        %s531 = sand.u32 %s37, 1
        %s532 = smul.addr %s531, 144
        %s533 = scalar_lea.vmem [#allocation3], %s532
        %p534 = pneg %p50
        %p535 = pneg %p47
        %s536 = sand.u32 %s65, 1
        %s537 = sand.u32 %s65, 1
        %s538 = smul.addr %s537, 144
        %s539 = scalar_lea.vmem [#allocation4], %s538
        %p540 = pneg %p78
        %p541 = pneg %p75
        %s542 = sand.u32 %s93, 1
        %s543 = sand.u32 %s93, 1
        %s544 = smul.addr %s543, 16
        %s545 = scalar_lea.vmem [#allocation5], %s544
        %p546 = pneg %p106
        %p547 = pneg %p103
        %s548 = sand.u32 %s121, 1
        %s549 = sand.u32 %s121, 1
        %s550 = smul.addr %s549, 16
        %s551 = scalar_lea.vmem [#allocation6], %s550
        %p552 = pneg %p134
        %p553 = pneg %p131
        %p554 = pneg %p160
        %p555 = pneg %p157
        %p556 = scmp.lt.s32.totalorder %s19, 1
        %s557 = scalar_select %p556, %s19, 1
        %s558 = smul.addr %s557, 8
        %s559 = scalar_lea.vmem %s4, %s558
        %p560 = scmp.lt.s32.totalorder %s19, 1
        %s561 = scalar_select %p560, %s19, 1
        %s562 = smul.addr %s561, 8
        %s563 = scalar_lea.vmem %s4, %s562
        %p564 = scmp.eq.s32.totalorder %s20, 0
        // Predicated region
        $region189: #{metric_loss_forward.3} parent=171 // pred_check
          %p565 = pneg %p564
        $region190: #{metric_loss_forward.3} parent=171 // pred_check_branch
          %567 = sbr.rel (%p565) target = $region192
        $region191: #{metric_loss_forward.3} parent=171 // pred_region
          %s568 = scalar_lea.smem [#allocation2], 0
          %569 = sst [smem:[%s568]] 0.0
          %s570 = scalar_lea.smem [#allocation2], 1
          %571 = sst [smem:[%s570]] 0.0
          %s572 = scalar_lea.smem [#allocation2], 2
          %573 = sst [smem:[%s572]] 0.0
          %s574 = scalar_lea.smem [#allocation2], 3
          %575 = sst [smem:[%s574]] 0.0
          %s576 = scalar_lea.smem [#allocation2], 4
          %577 = sst [smem:[%s576]] 0.0
          %s578 = scalar_lea.smem [#allocation2], 5
          %579 = sst [smem:[%s578]] 0.0
        $region192: #{metric_loss_forward.3} parent=171 // pred_fallthru
          _
        %v580 = vld [vmem:[%s505] sm:$0xff]
        %v581 = vld [vmem:[%s505 + $0x8] sm:$0x1]
        %v582 = vld [vmem:[%s505 + $0x10] sm:$0xff]
        %v583 = vld [vmem:[%s505 + $0x18] sm:$0x1]
        %v584 = vld [vmem:[%s505 + $0x20] sm:$0xff]
        %v585 = vld [vmem:[%s505 + $0x28] sm:$0x1]
        %v586 = vld [vmem:[%s505 + $0x30] sm:$0xff]
        %v587 = vld [vmem:[%s505 + $0x38] sm:$0x1]
        %v588 = vld [vmem:[%s505 + $0x40] sm:$0xff]
        %v589 = vld [vmem:[%s505 + $0x48] sm:$0x1]
        %v590 = vld [vmem:[%s505 + $0x50] sm:$0xff]
        %v591 = vld [vmem:[%s505 + $0x58] sm:$0x1]
        %v592 = vld [vmem:[%s505 + $0x60] sm:$0xff]
        %v593 = vld [vmem:[%s505 + $0x68] sm:$0x1]
        %v594 = vld [vmem:[%s505 + $0x70] sm:$0xff]
        %v595 = vld [vmem:[%s505 + $0x78] sm:$0x1]
        %v596 = vld [vmem:[%s505 + $0x80] sm:$0xff]
        %v597 = vld [vmem:[%s505 + $0x88] sm:$0x1]
        %v598 = vld [vmem:[%s512] sm:$0xff]
        %v599 = vld [vmem:[%s512 + $0x8] sm:$0x1]
        %v600 = vld [vmem:[%s512 + $0x10] sm:$0xff]
        %v601 = vld [vmem:[%s512 + $0x18] sm:$0x1]
        %v602 = vld [vmem:[%s512 + $0x20] sm:$0xff]
        %v603 = vld [vmem:[%s512 + $0x28] sm:$0x1]
        %v604 = vld [vmem:[%s512 + $0x30] sm:$0xff]
        %v605 = vld [vmem:[%s512 + $0x38] sm:$0x1]
        %v606 = vld [vmem:[%s512 + $0x40] sm:$0xff]
        %v607 = vld [vmem:[%s512 + $0x48] sm:$0x1]
        %v608 = vld [vmem:[%s512 + $0x50] sm:$0xff]
        %v609 = vld [vmem:[%s512 + $0x58] sm:$0x1]
        %v610 = vld [vmem:[%s512 + $0x60] sm:$0xff]
        %v611 = vld [vmem:[%s512 + $0x68] sm:$0x1]
        %v612 = vld [vmem:[%s512 + $0x70] sm:$0xff]
        %v613 = vld [vmem:[%s512 + $0x78] sm:$0x1]
        %v614 = vld [vmem:[%s512 + $0x80] sm:$0xff]
        %v615 = vld [vmem:[%s512 + $0x88] sm:$0x1]
        %v616 = vld [vmem:[%s519] sm:$0xff]
        %v617 = vld [vmem:[%s519 + $0x8] sm:$0x1]
        %v618 = vld [vmem:[%s526] sm:$0xff]
        %v619 = vld [vmem:[%s526 + $0x8] sm:$0x1]
        %v622 = vcombine.high %v616, %v616
        %v624 = vunpack.c.l.s4 1966171168
        %v625 = vunpack.c.0.s8 %v624
        %v626 = vlaneseq
        %v627 = vshrl.u32 %v626, 7
        %v628 = vsub.s32 %v625, %v627
        %v629 = vrot.slane %v616, %v628
        %v631 = vunpack.c.l.s4 1966171168
        %v632 = vunpack.c.0.s8 %v631
        %v633 = vlaneseq
        %v634 = vshrl.u32 %v633, 7
        %v635 = vsub.s32 %v632, %v634
        %v636 = vrot.slane %v622, %v635
        %v637 = vcombine.high %v629, %v629
        %v638 = vcombine.high %v636, %v636
        %v640 = vunpack.c.l.s4 1966171168
        %v641 = vunpack.c.0.s8 %v640
        %v642 = vlaneseq
        %v643 = vshrl.u32 %v642, 7
        %v644 = vsub.s32 %v641, %v643
        %v645 = vrot.slane %v629, %v644
        %v647 = vunpack.c.l.s4 1966171168
        %v648 = vunpack.c.0.s8 %v647
        %v649 = vlaneseq
        %v650 = vshrl.u32 %v649, 7
        %v651 = vsub.s32 %v648, %v650
        %v652 = vrot.slane %v636, %v651
        %v654 = vunpack.c.l.s4 1966171168
        %v655 = vunpack.c.0.s8 %v654
        %v656 = vlaneseq
        %v657 = vshrl.u32 %v656, 7
        %v658 = vsub.s32 %v655, %v657
        %v659 = vrot.slane %v637, %v658
        %v661 = vunpack.c.l.s4 1966171168
        %v662 = vunpack.c.0.s8 %v661
        %v663 = vlaneseq
        %v664 = vshrl.u32 %v663, 7
        %v665 = vsub.s32 %v662, %v664
        %v666 = vrot.slane %v638, %v665
        %v667 = vcombine.high %v645, %v645
        %v668 = vcombine.high %v652, %v652
        %v669 = vcombine.high %v659, %v659
        %v670 = vcombine.high %v666, %v666
        %v672 = vunpack.c.l.s4 1966171168
        %v673 = vunpack.c.0.s8 %v672
        %v674 = vlaneseq
        %v675 = vshrl.u32 %v674, 7
        %v676 = vsub.s32 %v673, %v675
        %v677 = vrot.slane %v617, %v676
        %v679 = vunpack.c.l.s4 1966171168
        %v680 = vunpack.c.0.s8 %v679
        %v681 = vlaneseq
        %v682 = vshrl.u32 %v681, 7
        %v683 = vsub.s32 %v680, %v682
        %v684 = vrot.slane %v677, %v683
        %v685 = vlaneseq
        %v686 = vshrl.u32 %v685, 7
        %v687 = vsub.s32 0, %v686
        %v688 = vrot.slane %v645, %v687
        %v689 = vlaneseq
        %v690 = vshrl.u32 %v689, 7
        %v691 = vsub.s32 0, %v690
        %v692 = vrot.slane %v659, %v691
        %v693 = vlaneseq
        %v694 = vshrl.u32 %v693, 7
        %v695 = vsub.s32 0, %v694
        %v696 = vrot.slane %v667, %v695
        %v697 = vlaneseq
        %v698 = vshrl.u32 %v697, 7
        %v699 = vsub.s32 0, %v698
        %v700 = vrot.slane %v669, %v699
        %v701 = vlaneseq
        %v702 = vshrl.u32 %v701, 7
        %v703 = vsub.s32 0, %v702
        %v704 = vrot.slane %v652, %v703
        %v705 = vlaneseq
        %v706 = vshrl.u32 %v705, 7
        %v707 = vsub.s32 0, %v706
        %v708 = vrot.slane %v666, %v707
        %v709 = vlaneseq
        %v710 = vshrl.u32 %v709, 7
        %v711 = vsub.s32 0, %v710
        %v712 = vrot.slane %v668, %v711
        %v713 = vlaneseq
        %v714 = vshrl.u32 %v713, 7
        %v715 = vsub.s32 0, %v714
        %v716 = vrot.slane %v670, %v715
        %v717 = vlaneseq
        %v718 = vshrl.u32 %v717, 7
        %v719 = vsub.s32 0, %v718
        %v720 = vrot.slane %v684, %v719
        %v730 = vmul.f32 %v598, %v688
        %v731 = vmul.f32 %v599, %v688
        %v732 = vmul.f32 %v600, %v692
        %v733 = vmul.f32 %v601, %v692
        %v734 = vmul.f32 %v602, %v696
        %v735 = vmul.f32 %v603, %v696
        %v736 = vmul.f32 %v604, %v700
        %v737 = vmul.f32 %v605, %v700
        %v738 = vmul.f32 %v606, %v704
        %v739 = vmul.f32 %v607, %v704
        %v740 = vmul.f32 %v608, %v708
        %v741 = vmul.f32 %v609, %v708
        %v742 = vmul.f32 %v610, %v712
        %v743 = vmul.f32 %v611, %v712
        %v744 = vmul.f32 %v612, %v716
        %v745 = vmul.f32 %v613, %v716
        %v746 = vmul.f32 %v614, %v720
        %v747 = vmul.f32 %v615, %v720
        %v748 = vmul.f32 %v730, %v618
        %v749 = vmul.f32 %v731, %v619
        %v750 = vmul.f32 %v732, %v618
        %v751 = vmul.f32 %v733, %v619
        %v752 = vmul.f32 %v734, %v618
        %v753 = vmul.f32 %v735, %v619
        %v754 = vmul.f32 %v736, %v618
        %v755 = vmul.f32 %v737, %v619
        %v756 = vmul.f32 %v738, %v618
        %v757 = vmul.f32 %v739, %v619
        %v758 = vmul.f32 %v740, %v618
        %v759 = vmul.f32 %v741, %v619
        %v760 = vmul.f32 %v742, %v618
        %v761 = vmul.f32 %v743, %v619
        %v762 = vmul.f32 %v744, %v618
        %v763 = vmul.f32 %v745, %v619
        %v764 = vmul.f32 %v746, %v618
        %v765 = vmul.f32 %v747, %v619
        %s766 = sld [smem:[#allocation2]]
        %v767 = vmul.f32 %v580, %v748
        %v768 = vmul.f32 %v581, %v749
        %v769 = vmul.f32 %v582, %v750
        %v770 = vmul.f32 %v583, %v751
        %v771 = vmul.f32 %v584, %v752
        %v772 = vmul.f32 %v585, %v753
        %v773 = vmul.f32 %v586, %v754
        %v774 = vmul.f32 %v587, %v755
        %v775 = vmul.f32 %v588, %v756
        %v776 = vmul.f32 %v589, %v757
        %v777 = vmul.f32 %v590, %v758
        %v778 = vmul.f32 %v591, %v759
        %v779 = vmul.f32 %v592, %v760
        %v780 = vmul.f32 %v593, %v761
        %v781 = vmul.f32 %v594, %v762
        %v782 = vmul.f32 %v595, %v763
        %v783 = vmul.f32 %v596, %v764
        %v784 = vmul.f32 %v597, %v765
        %vm785 = vcmask 1040384
        %v786 = vsel %vm785, %v768, 0.0
        %v787 = vadd.f32 %v767, %v786
        %v788 = vadd.f32 %v787, %v769
        %v789 = vsel %vm785, %v770, 0.0
        %v790 = vadd.f32 %v788, %v789
        %v791 = vadd.f32 %v790, %v771
        %v792 = vsel %vm785, %v772, 0.0
        %v793 = vadd.f32 %v791, %v792
        %v794 = vadd.f32 %v793, %v773
        %v795 = vsel %vm785, %v774, 0.0
        %v796 = vadd.f32 %v794, %v795
        %v797 = vadd.f32 %v796, %v775
        %v798 = vsel %vm785, %v776, 0.0
        %v799 = vadd.f32 %v797, %v798
        %v800 = vadd.f32 %v799, %v777
        %v801 = vsel %vm785, %v778, 0.0
        %v802 = vadd.f32 %v800, %v801
        %v803 = vadd.f32 %v802, %v779
        %v804 = vsel %vm785, %v780, 0.0
        %v805 = vadd.f32 %v803, %v804
        %v806 = vadd.f32 %v805, %v781
        %v807 = vsel %vm785, %v782, 0.0
        %v808 = vadd.f32 %v806, %v807
        %v809 = vadd.f32 %v808, %v783
        %v810 = vsel %vm785, %v784, 0.0
        %v811 = vadd.f32 %v809, %v810
        %812 = vadd.xlane.f32.xlu0 %v811
        %v813 = vpop.xlane.xlu0 %812
        %v814 = vrot.slane %v813, 4
        %v815 = vadd.f32 %v813, %v814
        %v816 = vrot.slane %v815, 2
        %v817 = vadd.f32 %v815, %v816
        %v818 = vrot.slane %v817, 1
        %v819 = vadd.f32 %v817, %v818
        %s820 = vtos %v819
        %s821 = sadd.f32 %s766, %s820
        %s822 = scalar_lea.smem [#allocation2], 0
        %823 = sst [smem:[%s822]] %s821
        %s824 = sld [smem:[#allocation2 + $0x1]]
        %v825 = vsel %vm785, %v749, 0.0
        %v826 = vadd.f32 %v748, %v825
        %v827 = vadd.f32 %v826, %v750
        %v828 = vsel %vm785, %v751, 0.0
        %v829 = vadd.f32 %v827, %v828
        %v830 = vadd.f32 %v829, %v752
        %v831 = vsel %vm785, %v753, 0.0
        %v832 = vadd.f32 %v830, %v831
        %v833 = vadd.f32 %v832, %v754
        %v834 = vsel %vm785, %v755, 0.0
        %v835 = vadd.f32 %v833, %v834
        %v836 = vadd.f32 %v835, %v756
        %v837 = vsel %vm785, %v757, 0.0
        %v838 = vadd.f32 %v836, %v837
        %v839 = vadd.f32 %v838, %v758
        %v840 = vsel %vm785, %v759, 0.0
        %v841 = vadd.f32 %v839, %v840
        %v842 = vadd.f32 %v841, %v760
        %v843 = vsel %vm785, %v761, 0.0
        %v844 = vadd.f32 %v842, %v843
        %v845 = vadd.f32 %v844, %v762
        %v846 = vsel %vm785, %v763, 0.0
        %v847 = vadd.f32 %v845, %v846
        %v848 = vadd.f32 %v847, %v764
        %v849 = vsel %vm785, %v765, 0.0
        %v850 = vadd.f32 %v848, %v849
        %851 = vadd.xlane.f32.xlu0 %v850
        %v852 = vpop.xlane.xlu0 %851
        %v853 = vrot.slane %v852, 4
        %v854 = vadd.f32 %v852, %v853
        %v855 = vrot.slane %v854, 2
        %v856 = vadd.f32 %v854, %v855
        %v857 = vrot.slane %v856, 1
        %v858 = vadd.f32 %v856, %v857
        %s859 = vtos %v858
        %s860 = sadd.f32 %s824, %s859
        %s861 = scalar_lea.smem [#allocation2], 1
        %862 = sst [smem:[%s861]] %s860
        %v863 = vlaneseq
        %v864 = vshrl.u32 %v863, 7
        %v865 = vadd.s32 %v864, 8
        %v866 = vsel %vm785, %v581, -inf
        %v867 = vmax.f32 %v580, %v866
        %v868 = vrot.slane %v867, 4
        %v869 = vmax.f32 %v867, %v868
        %v870 = vrot.slane %v869, 2
        %v871 = vmax.f32 %v869, %v870
        %v872 = vrot.slane %v871, 1
        %v873 = vmax.f32 %v871, %v872
        %v874 = vsel %vm785, %v583, -inf
        %v875 = vmax.f32 %v582, %v874
        %v876 = vrot.slane %v875, 4
        %v877 = vmax.f32 %v875, %v876
        %v878 = vrot.slane %v877, 2
        %v879 = vmax.f32 %v877, %v878
        %v880 = vrot.slane %v879, 1
        %v881 = vmax.f32 %v879, %v880
        %v882 = vsel %vm785, %v585, -inf
        %v883 = vmax.f32 %v584, %v882
        %v884 = vrot.slane %v883, 4
        %v885 = vmax.f32 %v883, %v884
        %v886 = vrot.slane %v885, 2
        %v887 = vmax.f32 %v885, %v886
        %v888 = vrot.slane %v887, 1
        %v889 = vmax.f32 %v887, %v888
        %v890 = vsel %vm785, %v587, -inf
        %v891 = vmax.f32 %v586, %v890
        %v892 = vrot.slane %v891, 4
        %v893 = vmax.f32 %v891, %v892
        %v894 = vrot.slane %v893, 2
        %v895 = vmax.f32 %v893, %v894
        %v896 = vrot.slane %v895, 1
        %v897 = vmax.f32 %v895, %v896
        %v898 = vsel %vm785, %v589, -inf
        %v899 = vmax.f32 %v588, %v898
        %v900 = vrot.slane %v899, 4
        %v901 = vmax.f32 %v899, %v900
        %v902 = vrot.slane %v901, 2
        %v903 = vmax.f32 %v901, %v902
        %v904 = vrot.slane %v903, 1
        %v905 = vmax.f32 %v903, %v904
        %v906 = vsel %vm785, %v591, -inf
        %v907 = vmax.f32 %v590, %v906
        %v908 = vrot.slane %v907, 4
        %v909 = vmax.f32 %v907, %v908
        %v910 = vrot.slane %v909, 2
        %v911 = vmax.f32 %v909, %v910
        %v912 = vrot.slane %v911, 1
        %v913 = vmax.f32 %v911, %v912
        %v914 = vsel %vm785, %v593, -inf
        %v915 = vmax.f32 %v592, %v914
        %v916 = vrot.slane %v915, 4
        %v917 = vmax.f32 %v915, %v916
        %v918 = vrot.slane %v917, 2
        %v919 = vmax.f32 %v917, %v918
        %v920 = vrot.slane %v919, 1
        %v921 = vmax.f32 %v919, %v920
        %v922 = vsel %vm785, %v595, -inf
        %v923 = vmax.f32 %v594, %v922
        %v924 = vrot.slane %v923, 4
        %v925 = vmax.f32 %v923, %v924
        %v926 = vrot.slane %v925, 2
        %v927 = vmax.f32 %v925, %v926
        %v928 = vrot.slane %v927, 1
        %v929 = vmax.f32 %v927, %v928
        %vm930 = vcmp.eq.f32.partialorder %v580, %v873
        %vm931 = vcmp.eq.f32.partialorder %v581, %v873
        %vm932 = vcmp.eq.f32.partialorder %v582, %v881
        %vm933 = vcmp.eq.f32.partialorder %v583, %v881
        %vm934 = vcmp.eq.f32.partialorder %v584, %v889
        %vm935 = vcmp.eq.f32.partialorder %v585, %v889
        %vm936 = vcmp.eq.f32.partialorder %v586, %v897
        %vm937 = vcmp.eq.f32.partialorder %v587, %v897
        %vm938 = vcmp.eq.f32.partialorder %v588, %v905
        %vm939 = vcmp.eq.f32.partialorder %v589, %v905
        %vm940 = vcmp.eq.f32.partialorder %v590, %v913
        %vm941 = vcmp.eq.f32.partialorder %v591, %v913
        %vm942 = vcmp.eq.f32.partialorder %v592, %v921
        %vm943 = vcmp.eq.f32.partialorder %v593, %v921
        %vm944 = vcmp.eq.f32.partialorder %v594, %v929
        %vm945 = vcmp.eq.f32.partialorder %v595, %v929
        %v946 = vsel %vm930, %v864, 9
        %v947 = vsel %vm931, %v865, 9
        %v948 = vsel %vm932, %v864, 9
        %v949 = vsel %vm933, %v865, 9
        %v950 = vsel %vm934, %v864, 9
        %v951 = vsel %vm935, %v865, 9
        %v952 = vsel %vm936, %v864, 9
        %v953 = vsel %vm937, %v865, 9
        %v954 = vsel %vm938, %v864, 9
        %v955 = vsel %vm939, %v865, 9
        %v956 = vsel %vm940, %v864, 9
        %v957 = vsel %vm941, %v865, 9
        %v958 = vsel %vm942, %v864, 9
        %v959 = vsel %vm943, %v865, 9
        %v960 = vsel %vm944, %v864, 9
        %v961 = vsel %vm945, %v865, 9
        %v962 = vsel %vm785, %v947, 2147483647
        %vm963 = vcmp.lt.s32.totalorder %v946, %v962
        %v964 = vsel %vm963, %v946, %v962
        %v965 = vrot.slane %v964, 4
        %vm966 = vcmp.lt.s32.totalorder %v964, %v965
        %v967 = vsel %vm966, %v964, %v965
        %v968 = vrot.slane %v967, 2
        %vm969 = vcmp.lt.s32.totalorder %v967, %v968
        %v970 = vsel %vm969, %v967, %v968
        %v971 = vrot.slane %v970, 1
        %vm972 = vcmp.lt.s32.totalorder %v970, %v971
        %v973 = vsel %vm972, %v970, %v971
        %v974 = vsel %vm785, %v949, 2147483647
        %vm975 = vcmp.lt.s32.totalorder %v948, %v974
        %v976 = vsel %vm975, %v948, %v974
        %v977 = vrot.slane %v976, 4
        %vm978 = vcmp.lt.s32.totalorder %v976, %v977
        %v979 = vsel %vm978, %v976, %v977
        %v980 = vrot.slane %v979, 2
        %vm981 = vcmp.lt.s32.totalorder %v979, %v980
        %v982 = vsel %vm981, %v979, %v980
        %v983 = vrot.slane %v982, 1
        %vm984 = vcmp.lt.s32.totalorder %v982, %v983
        %v985 = vsel %vm984, %v982, %v983
        %v986 = vsel %vm785, %v951, 2147483647
        %vm987 = vcmp.lt.s32.totalorder %v950, %v986
        %v988 = vsel %vm987, %v950, %v986
        %v989 = vrot.slane %v988, 4
        %vm990 = vcmp.lt.s32.totalorder %v988, %v989
        %v991 = vsel %vm990, %v988, %v989
        %v992 = vrot.slane %v991, 2
        %vm993 = vcmp.lt.s32.totalorder %v991, %v992
        %v994 = vsel %vm993, %v991, %v992
        %v995 = vrot.slane %v994, 1
        %vm996 = vcmp.lt.s32.totalorder %v994, %v995
        %v997 = vsel %vm996, %v994, %v995
        %v998 = vsel %vm785, %v953, 2147483647
        %vm999 = vcmp.lt.s32.totalorder %v952, %v998
        %v1000 = vsel %vm999, %v952, %v998
        %v1001 = vrot.slane %v1000, 4
        %vm1002 = vcmp.lt.s32.totalorder %v1000, %v1001
        %v1003 = vsel %vm1002, %v1000, %v1001
        %v1004 = vrot.slane %v1003, 2
        %vm1005 = vcmp.lt.s32.totalorder %v1003, %v1004
        %v1006 = vsel %vm1005, %v1003, %v1004
        %v1007 = vrot.slane %v1006, 1
        %vm1008 = vcmp.lt.s32.totalorder %v1006, %v1007
        %v1009 = vsel %vm1008, %v1006, %v1007
        %v1010 = vsel %vm785, %v955, 2147483647
        %vm1011 = vcmp.lt.s32.totalorder %v954, %v1010
        %v1012 = vsel %vm1011, %v954, %v1010
        %v1013 = vrot.slane %v1012, 4
        %vm1014 = vcmp.lt.s32.totalorder %v1012, %v1013
        %v1015 = vsel %vm1014, %v1012, %v1013
        %v1016 = vrot.slane %v1015, 2
        %vm1017 = vcmp.lt.s32.totalorder %v1015, %v1016
        %v1018 = vsel %vm1017, %v1015, %v1016
        %v1019 = vrot.slane %v1018, 1
        %vm1020 = vcmp.lt.s32.totalorder %v1018, %v1019
        %v1021 = vsel %vm1020, %v1018, %v1019
        %v1022 = vsel %vm785, %v957, 2147483647
        %vm1023 = vcmp.lt.s32.totalorder %v956, %v1022
        %v1024 = vsel %vm1023, %v956, %v1022
        %v1025 = vrot.slane %v1024, 4
        %vm1026 = vcmp.lt.s32.totalorder %v1024, %v1025
        %v1027 = vsel %vm1026, %v1024, %v1025
        %v1028 = vrot.slane %v1027, 2
        %vm1029 = vcmp.lt.s32.totalorder %v1027, %v1028
        %v1030 = vsel %vm1029, %v1027, %v1028
        %v1031 = vrot.slane %v1030, 1
        %vm1032 = vcmp.lt.s32.totalorder %v1030, %v1031
        %v1033 = vsel %vm1032, %v1030, %v1031
        %v1034 = vsel %vm785, %v959, 2147483647
        %vm1035 = vcmp.lt.s32.totalorder %v958, %v1034
        %v1036 = vsel %vm1035, %v958, %v1034
        %v1037 = vrot.slane %v1036, 4
        %vm1038 = vcmp.lt.s32.totalorder %v1036, %v1037
        %v1039 = vsel %vm1038, %v1036, %v1037
        %v1040 = vrot.slane %v1039, 2
        %vm1041 = vcmp.lt.s32.totalorder %v1039, %v1040
        %v1042 = vsel %vm1041, %v1039, %v1040
        %v1043 = vrot.slane %v1042, 1
        %vm1044 = vcmp.lt.s32.totalorder %v1042, %v1043
        %v1045 = vsel %vm1044, %v1042, %v1043
        %v1046 = vsel %vm785, %v961, 2147483647
        %vm1047 = vcmp.lt.s32.totalorder %v960, %v1046
        %v1048 = vsel %vm1047, %v960, %v1046
        %v1049 = vrot.slane %v1048, 4
        %vm1050 = vcmp.lt.s32.totalorder %v1048, %v1049
        %v1051 = vsel %vm1050, %v1048, %v1049
        %v1052 = vrot.slane %v1051, 2
        %vm1053 = vcmp.lt.s32.totalorder %v1051, %v1052
        %v1054 = vsel %vm1053, %v1051, %v1052
        %v1055 = vrot.slane %v1054, 1
        %vm1056 = vcmp.lt.s32.totalorder %v1054, %v1055
        %v1057 = vsel %vm1056, %v1054, %v1055
        %s1058 = sld [smem:[#allocation2 + $0x2]]
        %vm1059 = vcmp.eq.s32.totalorder %v864, %v973
        %vm1060 = vcmp.eq.s32.totalorder %v865, %v973
        %vm1061 = vcmp.eq.s32.totalorder %v864, %v985
        %vm1062 = vcmp.eq.s32.totalorder %v865, %v985
        %vm1063 = vcmp.eq.s32.totalorder %v864, %v997
        %vm1064 = vcmp.eq.s32.totalorder %v865, %v997
        %vm1065 = vcmp.eq.s32.totalorder %v864, %v1009
        %vm1066 = vcmp.eq.s32.totalorder %v865, %v1009
        %vm1067 = vcmp.eq.s32.totalorder %v864, %v1021
        %vm1068 = vcmp.eq.s32.totalorder %v865, %v1021
        %vm1069 = vcmp.eq.s32.totalorder %v864, %v1033
        %vm1070 = vcmp.eq.s32.totalorder %v865, %v1033
        %vm1071 = vcmp.eq.s32.totalorder %v864, %v1045
        %vm1072 = vcmp.eq.s32.totalorder %v865, %v1045
        %vm1073 = vcmp.eq.s32.totalorder %v864, %v1057
        %vm1074 = vcmp.eq.s32.totalorder %v865, %v1057
        %v1075 = vsel %vm1059, 1, 0
        %v1076 = vsel %vm1060, 1, 0
        %v1077 = vsel %vm1061, 1, 0
        %v1078 = vsel %vm1062, 1, 0
        %v1079 = vsel %vm1063, 1, 0
        %v1080 = vsel %vm1064, 1, 0
        %v1081 = vsel %vm1065, 1, 0
        %v1082 = vsel %vm1066, 1, 0
        %v1083 = vsel %vm1067, 1, 0
        %v1084 = vsel %vm1068, 1, 0
        %v1085 = vsel %vm1069, 1, 0
        %v1086 = vsel %vm1070, 1, 0
        %v1087 = vsel %vm1071, 1, 0
        %v1088 = vsel %vm1072, 1, 0
        %v1089 = vsel %vm1073, 1, 0
        %v1090 = vsel %vm1074, 1, 0
        %v1091 = vcvt.s32.f32 %v1075
        %v1092 = vcvt.s32.f32 %v1076
        %v1093 = vcvt.s32.f32 %v1077
        %v1094 = vcvt.s32.f32 %v1078
        %v1095 = vcvt.s32.f32 %v1079
        %v1096 = vcvt.s32.f32 %v1080
        %v1097 = vcvt.s32.f32 %v1081
        %v1098 = vcvt.s32.f32 %v1082
        %v1099 = vcvt.s32.f32 %v1083
        %v1100 = vcvt.s32.f32 %v1084
        %v1101 = vcvt.s32.f32 %v1085
        %v1102 = vcvt.s32.f32 %v1086
        %v1103 = vcvt.s32.f32 %v1087
        %v1104 = vcvt.s32.f32 %v1088
        %v1105 = vcvt.s32.f32 %v1089
        %v1106 = vcvt.s32.f32 %v1090
        %v1107 = vmul.f32 %v748, %v1091
        %v1108 = vmul.f32 %v749, %v1092
        %v1109 = vmul.f32 %v750, %v1093
        %v1110 = vmul.f32 %v751, %v1094
        %v1111 = vmul.f32 %v752, %v1095
        %v1112 = vmul.f32 %v753, %v1096
        %v1113 = vmul.f32 %v754, %v1097
        %v1114 = vmul.f32 %v755, %v1098
        %v1115 = vmul.f32 %v756, %v1099
        %v1116 = vmul.f32 %v757, %v1100
        %v1117 = vmul.f32 %v758, %v1101
        %v1118 = vmul.f32 %v759, %v1102
        %v1119 = vmul.f32 %v760, %v1103
        %v1120 = vmul.f32 %v761, %v1104
        %v1121 = vmul.f32 %v762, %v1105
        %v1122 = vmul.f32 %v763, %v1106
        %v1123 = vsel %vm785, %v1108, 0.0
        %v1124 = vadd.f32 %v1107, %v1123
        %v1125 = vadd.f32 %v1124, %v1109
        %v1126 = vsel %vm785, %v1110, 0.0
        %v1127 = vadd.f32 %v1125, %v1126
        %v1128 = vadd.f32 %v1127, %v1111
        %v1129 = vsel %vm785, %v1112, 0.0
        %v1130 = vadd.f32 %v1128, %v1129
        %v1131 = vadd.f32 %v1130, %v1113
        %v1132 = vsel %vm785, %v1114, 0.0
        %v1133 = vadd.f32 %v1131, %v1132
        %v1134 = vadd.f32 %v1133, %v1115
        %v1135 = vsel %vm785, %v1116, 0.0
        %v1136 = vadd.f32 %v1134, %v1135
        %v1137 = vadd.f32 %v1136, %v1117
        %v1138 = vsel %vm785, %v1118, 0.0
        %v1139 = vadd.f32 %v1137, %v1138
        %v1140 = vadd.f32 %v1139, %v1119
        %v1141 = vsel %vm785, %v1120, 0.0
        %v1142 = vadd.f32 %v1140, %v1141
        %v1143 = vadd.f32 %v1142, %v1121
        %v1144 = vsel %vm785, %v1122, 0.0
        %v1145 = vadd.f32 %v1143, %v1144
        %1146 = vadd.xlane.f32.xlu0 %v1145
        %v1147 = vpop.xlane.xlu0 %1146
        %v1148 = vrot.slane %v1147, 4
        %v1149 = vadd.f32 %v1147, %v1148
        %v1150 = vrot.slane %v1149, 2
        %v1151 = vadd.f32 %v1149, %v1150
        %v1152 = vrot.slane %v1151, 1
        %v1153 = vadd.f32 %v1151, %v1152
        %s1154 = vtos %v1153
        %s1155 = sadd.f32 %s1058, %s1154
        %s1156 = scalar_lea.smem [#allocation2], 2
        %1157 = sst [smem:[%s1156]] %s1155
        %vm1158 = vcmp.gt.f32.partialorder %v582, %v580
        %v1159 = vsel %vm1158, %v582, %v580
        %v1160 = vsel %vm1158, %v750, %v748
        %vm1161 = vcmp.gt.f32.partialorder %v584, %v1159
        %v1162 = vsel %vm1161, %v584, %v1159
        %v1163 = vsel %vm1161, %v752, %v1160
        %vm1164 = vcmp.gt.f32.partialorder %v586, %v1162
        %v1165 = vsel %vm1164, %v586, %v1162
        %v1166 = vsel %vm1164, %v754, %v1163
        %vm1167 = vcmp.gt.f32.partialorder %v588, %v1165
        %v1168 = vsel %vm1167, %v588, %v1165
        %v1169 = vsel %vm1167, %v756, %v1166
        %vm1170 = vcmp.gt.f32.partialorder %v590, %v1168
        %v1171 = vsel %vm1170, %v590, %v1168
        %v1172 = vsel %vm1170, %v758, %v1169
        %vm1173 = vcmp.gt.f32.partialorder %v592, %v1171
        %v1174 = vsel %vm1173, %v592, %v1171
        %v1175 = vsel %vm1173, %v760, %v1172
        %vm1176 = vcmp.gt.f32.partialorder %v594, %v1174
        %v1177 = vsel %vm1176, %v594, %v1174
        %v1178 = vsel %vm1176, %v762, %v1175
        %vm1179 = vcmp.gt.f32.partialorder %v596, %v1177
        %v1180 = vsel %vm1179, %v764, %v1178
        %s1181 = sld [smem:[#allocation2 + $0x3]]
        %1182 = vadd.xlane.f32.xlu0 %v1180
        %v1183 = vpop.xlane.xlu0 %1182
        %v1184 = vrot.slane %v1183, 4
        %v1185 = vadd.f32 %v1183, %v1184
        %v1186 = vrot.slane %v1185, 2
        %v1187 = vadd.f32 %v1185, %v1186
        %v1188 = vrot.slane %v1187, 1
        %v1189 = vadd.f32 %v1187, %v1188
        %s1190 = vtos %v1189
        %s1191 = sadd.f32 %s1181, %s1190
        %s1192 = scalar_lea.smem [#allocation2], 3
        %1193 = sst [smem:[%s1192]] %s1191
        %s1194 = sld [smem:[#allocation2 + $0x4]]
        %v1195 = vsel %vm785, %v617, 0.0
        %v1196 = vadd.f32 %v616, %v1195
        %1197 = vadd.xlane.f32.xlu0 %v1196
        %v1198 = vpop.xlane.xlu0 %1197
        %v1199 = vrot.slane %v1198, 4
        %v1200 = vadd.f32 %v1198, %v1199
        %v1201 = vrot.slane %v1200, 2
        %v1202 = vadd.f32 %v1200, %v1201
        %v1203 = vrot.slane %v1202, 1
        %v1204 = vadd.f32 %v1202, %v1203
        %s1205 = vtos %v1204
        %s1206 = ssub.f32 %s1205, 128.0
        %s1207 = sadd.f32 %s1194, %s1206
        %s1208 = scalar_lea.smem [#allocation2], 4
        %1209 = sst [smem:[%s1208]] %s1207
        %s1210 = sld [smem:[#allocation2 + $0x5]]
        %v1211 = vsel %vm785, %v619, 0.0
        %v1212 = vadd.f32 %v618, %v1211
        %1213 = vadd.xlane.f32.xlu0 %v1212
        %v1214 = vpop.xlane.xlu0 %1213
        %v1215 = vrot.slane %v1214, 4
        %v1216 = vadd.f32 %v1214, %v1215
        %v1217 = vrot.slane %v1216, 2
        %v1218 = vadd.f32 %v1216, %v1217
        %v1219 = vrot.slane %v1218, 1
        %v1220 = vadd.f32 %v1218, %v1219
        %s1221 = vtos %v1220
        %s1222 = ssub.f32 %s1221, 128.0
        %s1223 = sadd.f32 %s1210, %s1222
        %s1224 = scalar_lea.smem [#allocation2], 5
        %1225 = sst [smem:[%s1224]] %s1223
        %p1226 = scmp.eq.s32.totalorder %s20, 1
        // Predicated region
        $region193: #{metric_loss_forward.3} parent=171 // pred_check
          %p1227 = pneg %p1226
        $region194: #{metric_loss_forward.3} parent=171 // pred_check_branch
          %1229 = sbr.rel (%p1227) target = $region196
        $region195: #{metric_loss_forward.3} parent=171 // pred_region
          %s1230 = sld [smem:[#allocation2]]
          %s1231 = sld [smem:[#allocation2 + $0x1]]
          %s1232 = sld [smem:[#allocation2 + $0x2]]
          %s1233 = sld [smem:[#allocation2 + $0x3]]
          %s1234 = sld [smem:[#allocation2 + $0x4]]
          %s1235 = sld [smem:[#allocation2 + $0x5]]
          %v1236 = vlaneseq
          %v1237 = vand.u32 %v1236, 127
          %vm1238 = vcmp.eq.s32.totalorder %v1237, 0
          %v1239 = vstv %s1230
          %v1240 = vsel %vm1238, %v1239, 0.0
          %vm1241 = vcmp.eq.s32.totalorder %v1237, 1
          %v1242 = vstv %s1231
          %v1243 = vsel %vm1241, %v1242, %v1240
          %vm1244 = vcmp.eq.s32.totalorder %v1237, 2
          %v1245 = vstv %s1232
          %v1246 = vsel %vm1244, %v1245, %v1243
          %vm1247 = vcmp.eq.s32.totalorder %v1237, 3
          %v1248 = vstv %s1233
          %v1249 = vsel %vm1247, %v1248, %v1246
          %vm1250 = vcmp.eq.s32.totalorder %v1237, 4
          %v1251 = vstv %s1234
          %v1252 = vsel %vm1250, %v1251, %v1249
          %vm1253 = vcmp.eq.s32.totalorder %v1237, 5
          %v1254 = vstv %s1235
          %v1255 = vsel %vm1253, %v1254, %v1252
          %1256 = vst [vmem:[%s563] sm:$0xff] %v1255
        $region196: #{metric_loss_forward.3} parent=171 // pred_fallthru
          _
        %p1257 = scmp.lt.s32.totalorder %s19, 1
        %s1258 = scalar_select %p1257, %s19, 1
        %s1259 = smul.addr %s1258, 8
        %s1260 = scalar_lea.vmem %s4, %s1259
        // Predicated region
        $region197: #{metric_loss_forward.3} parent=171 // pred_check
          %p1261 = pneg %p157
        $region198: #{metric_loss_forward.3} parent=171 // pred_check_branch
          %1263 = sbr.rel (%p1261) target = $region200
        $region199: #{metric_loss_forward.3} parent=171 // pred_region
          _
        $region200: #{metric_loss_forward.3} parent=171 // pred_fallthru
          _
      $region172: #{metric_loss_forward.3} parent=5 // pred_fallthru
        _
      %p1264 = scmp.le.s32.totalorder 2, %s10
      // Predicated region
      $region201: #{metric_loss_forward.3} parent=5 // pred_check
        %p1265 = pneg %p1264
      $region202: #{metric_loss_forward.3} parent=5 // pred_check_branch
        %1267 = sbr.rel (%p1265) target = $region204
      $region203: #{metric_loss_forward.3} parent=5 // pred_region
        %s1268 = ssub.s32 %s10, 2
        // Predicated region
        $region205: #{metric_loss_forward.3} parent=203 // pred_check
          %p1269 = pneg %p163
        $region206: #{metric_loss_forward.3} parent=203 // pred_check_branch
          %1271 = sbr.rel (%p1269) target = $region208
        $region207: #{metric_loss_forward.3} parent=203 // pred_region
          %p1272 = scmp.lt.s32.totalorder %s21, 1
          %s1273 = scalar_select %p1272, %s21, 1
          %s1274 = smul.addr %s1273, 8
          %s1275 = scalar_lea.vmem %s4, %s1274
        $region208: #{metric_loss_forward.3} parent=203 // pred_fallthru
          _
      $region204: #{metric_loss_forward.3} parent=5 // pred_fallthru
        _
    $region6: #{metric_loss_forward.3} parent=1 // loop_footer
      %s14 = sadd.s32 1, %s10
    $region7: #{metric_loss_forward.3} parent=1 // loop_footer_branch
      %9 = sbr.rel target = $region3
    $region8: #{metric_loss_forward.3} parent=1 // loop_exit
      _

// kernel: metric_loss_forward.2
$region0: #{metric_loss_forward.2}
  #allocation0 [shape = 'u32[]', space=smem, size = 0x4, offset = 0x4, fixed_abs, tag = 'smem constant byte address 0x4 - core index']
  #allocation1 [shape = 'u32[144,128]{1,0:T(1,128)}', space=vmem, size = 0x12000, scoped, tag = 'internal scratch']
  #allocation2 [shape = 'f32[8,16]{1,0:T(8,128)}', space=vmem, size = 0x1000, scoped, tag = 'scratch operand']
  #allocation3 [shape = 'f32[8]{0:T(128)}', space=smem, size = 0x200, scoped, tag = 'scratch operand']
  %s0 = inlined_call_operand.vmem [shape: f32[2,32,32], index: 0, kind: input, shape index: {}]
  %s1 = inlined_call_operand.vmem [shape: f32[2,16,32], index: 1, kind: input, shape index: {}]
  %s2 = inlined_call_operand.vmem [shape: bf16[2,32,16], index: 2, kind: input, shape index: {}]
  %s3 = inlined_call_operand.vmem [shape: bf16[2,32,16], index: 3, kind: input, shape index: {}]
  %s4 = inlined_call_operand.vmem [shape: f32[2,8,128], index: 4, kind: output, shape index: {}]
  %s5 = sld [smem:[#allocation0]]
  $region57: #{metric_loss_forward.2} parent=0
    _
  %s7 = ssub.s32 1, %s5
  %s8 = scalar_select 0, %s7, %s5
  loop: start=0, step=1, limit=6
  $region2: #{metric_loss_forward.2} parent=0 // loop_pre_header
    _
  $region3: #{metric_loss_forward.2} parent=0 // loop_header
    %s10 = sphi 0, %s14
    %p11 = scmp.ge.s32.totalorder %s10, 6
    %s17 = sphi 0, %s29
    %s18 = sphi 0, %s25
    %s19 = sphi 0, %s17
    %s20 = sphi 0, %s18
    %s21 = sphi 0, %s19
    %s22 = sphi 0, %s20
    %s34 = sphi 0, %s36
    %s37 = sphi 0, %s34
    %s38 = sphi 0, %s37
    %s54 = sphi 0, %s38
    %s60 = sphi 0, %s62
    %s63 = sphi 0, %s60
    %s64 = sphi 0, %s63
    %s80 = sphi 0, %s64
    %s88 = sphi 0, %s90
    %s91 = sphi 0, %s88
    %s92 = sphi 0, %s91
    %s108 = sphi 0, %s92
    %s116 = sphi 0, %s118
    %s119 = sphi 0, %s116
    %s120 = sphi 0, %s119
    %s136 = sphi 0, %s120
    %s142 = sphi 0, %s144
    %s145 = sphi 0, %s142
    %s146 = sphi 0, %s145
    %s162 = sphi 0, %s146
  $region4: #{metric_loss_forward.2} parent=0 // loop_header_branch
    %13 = sbr.rel (%p11) target = $region8
  $region5: #{metric_loss_forward.2} parent=0 // loop_body
    %s15 = ssub.s32 %s10, 1
    %s16 = ssub.s32 %s10, 2
    %s23 = sadd.s32 1, %s18
    %p24 = scmp.ge.s32.totalorder %s23, 2
    %s25 = scalar_select %p24, 0, %s23
    %s26 = sadd.s32 1, %s17
    %s27 = scalar_select %p24, %s26, %s17
    %p28 = scmp.ge.s32.totalorder %s27, 2
    %s29 = scalar_select %p28, 0, %s27
    %s30 = ssub.s32 %s17, %s29
    %s31 = ssub.s32 %s18, %s25
    %s32 = sor.u32 %s30, %s31
    %p33 = scmp.eq.s32.totalorder %s32, 0
    %s35 = sadd.s32 %s34, 1
    %s36 = scalar_select %p33, %s34, %s35
    %p39 = pneg %p33
    %p40 = scmp.eq.s32.totalorder %s10, 3
    %p41 = por %p39, %p40
    %p42 = scmp.ne.s32.totalorder %s34, %s37
    %p43 = scmp.eq.s32.totalorder %s10, 0
    %p44 = por %p42, %p43
    %p45 = scmp.ne.s32.totalorder %s34, %s37
    %p46 = scmp.eq.s32.totalorder %s15, 3
    %p47 = por %p45, %p46
    %p48 = scmp.ne.s32.totalorder %s37, %s38
    %p49 = scmp.eq.s32.totalorder %s15, 0
    %p50 = por %p48, %p49
    %p51 = scmp.ne.s32.totalorder %s37, %s38
    %p52 = scmp.eq.s32.totalorder %s16, 3
    %p53 = por %p51, %p52
    %p55 = scmp.ne.s32.totalorder %s38, %s54
    %p56 = scmp.eq.s32.totalorder %s16, 0
    %p57 = por %p55, %p56
    %s58 = ssub.s32 %s17, %s29
    %p59 = scmp.eq.s32.totalorder %s58, 0
    %s61 = sadd.s32 %s60, 1
    %s62 = scalar_select %p59, %s60, %s61
    %p65 = pneg %p59
    %p66 = scmp.eq.s32.totalorder %s10, 3
    %p67 = por %p65, %p66
    %p68 = scmp.ne.s32.totalorder %s60, %s63
    %p69 = scmp.eq.s32.totalorder %s10, 0
    %p70 = por %p68, %p69
    %p71 = scmp.ne.s32.totalorder %s60, %s63
    %p72 = scmp.eq.s32.totalorder %s15, 3
    %p73 = por %p71, %p72
    %p74 = scmp.ne.s32.totalorder %s63, %s64
    %p75 = scmp.eq.s32.totalorder %s15, 0
    %p76 = por %p74, %p75
    %p77 = scmp.ne.s32.totalorder %s63, %s64
    %p78 = scmp.eq.s32.totalorder %s16, 3
    %p79 = por %p77, %p78
    %p81 = scmp.ne.s32.totalorder %s64, %s80
    %p82 = scmp.eq.s32.totalorder %s16, 0
    %p83 = por %p81, %p82
    %s84 = ssub.s32 %s17, %s29
    %s85 = ssub.s32 %s18, %s25
    %s86 = sor.u32 %s84, %s85
    %p87 = scmp.eq.s32.totalorder %s86, 0
    %s89 = sadd.s32 %s88, 1
    %s90 = scalar_select %p87, %s88, %s89
    %p93 = pneg %p87
    %p94 = scmp.eq.s32.totalorder %s10, 3
    %p95 = por %p93, %p94
    %p96 = scmp.ne.s32.totalorder %s88, %s91
    %p97 = scmp.eq.s32.totalorder %s10, 0
    %p98 = por %p96, %p97
    %p99 = scmp.ne.s32.totalorder %s88, %s91
    %p100 = scmp.eq.s32.totalorder %s15, 3
    %p101 = por %p99, %p100
    %p102 = scmp.ne.s32.totalorder %s91, %s92
    %p103 = scmp.eq.s32.totalorder %s15, 0
    %p104 = por %p102, %p103
    %p105 = scmp.ne.s32.totalorder %s91, %s92
    %p106 = scmp.eq.s32.totalorder %s16, 3
    %p107 = por %p105, %p106
    %p109 = scmp.ne.s32.totalorder %s92, %s108
    %p110 = scmp.eq.s32.totalorder %s16, 0
    %p111 = por %p109, %p110
    %s112 = ssub.s32 %s17, %s29
    %s113 = ssub.s32 %s18, %s25
    %s114 = sor.u32 %s112, %s113
    %p115 = scmp.eq.s32.totalorder %s114, 0
    %s117 = sadd.s32 %s116, 1
    %s118 = scalar_select %p115, %s116, %s117
    %p121 = pneg %p115
    %p122 = scmp.eq.s32.totalorder %s10, 3
    %p123 = por %p121, %p122
    %p124 = scmp.ne.s32.totalorder %s116, %s119
    %p125 = scmp.eq.s32.totalorder %s10, 0
    %p126 = por %p124, %p125
    %p127 = scmp.ne.s32.totalorder %s116, %s119
    %p128 = scmp.eq.s32.totalorder %s15, 3
    %p129 = por %p127, %p128
    %p130 = scmp.ne.s32.totalorder %s119, %s120
    %p131 = scmp.eq.s32.totalorder %s15, 0
    %p132 = por %p130, %p131
    %p133 = scmp.ne.s32.totalorder %s119, %s120
    %p134 = scmp.eq.s32.totalorder %s16, 3
    %p135 = por %p133, %p134
    %p137 = scmp.ne.s32.totalorder %s120, %s136
    %p138 = scmp.eq.s32.totalorder %s16, 0
    %p139 = por %p137, %p138
    %s140 = ssub.s32 %s17, %s29
    %p141 = scmp.eq.s32.totalorder %s140, 0
    %s143 = sadd.s32 %s142, 1
    %s144 = scalar_select %p141, %s142, %s143
    %p147 = pneg %p141
    %p148 = scmp.eq.s32.totalorder %s10, 3
    %p149 = por %p147, %p148
    %p150 = scmp.ne.s32.totalorder %s142, %s145
    %p151 = scmp.eq.s32.totalorder %s10, 0
    %p152 = por %p150, %p151
    %p153 = scmp.ne.s32.totalorder %s142, %s145
    %p154 = scmp.eq.s32.totalorder %s15, 3
    %p155 = por %p153, %p154
    %p156 = scmp.ne.s32.totalorder %s145, %s146
    %p157 = scmp.eq.s32.totalorder %s15, 0
    %p158 = por %p156, %p157
    %p159 = scmp.ne.s32.totalorder %s145, %s146
    %p160 = scmp.eq.s32.totalorder %s16, 3
    %p161 = por %p159, %p160
    %p163 = scmp.ne.s32.totalorder %s146, %s162
    %p164 = scmp.eq.s32.totalorder %s16, 0
    %p165 = por %p163, %p164
    %p166 = scmp.le.s32.totalorder 1, %s10
    %p167 = scmp.lt.s32.totalorder %s10, 5
    %p168 = pnand %p166, %p167
    %p169 = pneg %p168
    // Predicated region
    $region9: #{metric_loss_forward.2} parent=5 // pred_check
      _
    $region10: #{metric_loss_forward.2} parent=5 // pred_check_branch
      %171 = sbr.rel (%p168) target = $region12
    $region11: #{metric_loss_forward.2} parent=5 // pred_region
      %s172 = ssub.s32 %s10, 1
    $region12: #{metric_loss_forward.2} parent=5 // pred_fallthru
      _
    %p173 = scmp.lt.s32.totalorder %s10, 4
    // Predicated region
    $region13: #{metric_loss_forward.2} parent=5 // pred_check
      %p174 = pneg %p173
    $region14: #{metric_loss_forward.2} parent=5 // pred_check_branch
      %176 = sbr.rel (%p174) target = $region16
    $region15: #{metric_loss_forward.2} parent=5 // pred_region
      // Predicated region
      $region17: #{metric_loss_forward.2} parent=15 // pred_check
        %p177 = pneg %p44
      $region18: #{metric_loss_forward.2} parent=15 // pred_check_branch
        %179 = sbr.rel (%p177) target = $region20
      $region19: #{metric_loss_forward.2} parent=15 // pred_region
        %s180 = smul.u32 2, %s18
        %p181 = scmp.lt.s32.totalorder %s17, 1
        %s182 = scalar_select %p181, %s17, 1
        %p183 = scmp.lt.s32.totalorder %s180, 3
        %s184 = scalar_select %p183, %s180, 3
        %s185 = smul.addr %s182, 4
        %s186 = sadd.s32 %s184, %s185
        %s187 = smul.addr %s186, 8
        %s188 = scalar_lea.vmem %s0, %s187
        %s189 = smul.u32 2, %s18
      $region20: #{metric_loss_forward.2} parent=15 // pred_fallthru
        _
      // Predicated region
      $region21: #{metric_loss_forward.2} parent=15 // pred_check
        %p190 = pneg %p70
      $region22: #{metric_loss_forward.2} parent=15 // pred_check_branch
        %192 = sbr.rel (%p190) target = $region24
      $region23: #{metric_loss_forward.2} parent=15 // pred_region
        %p193 = scmp.lt.s32.totalorder %s17, 1
        %s194 = scalar_select %p193, %s17, 1
        %s195 = smul.addr %s194, 2
        %s196 = smul.addr %s195, 8
        %s197 = scalar_lea.vmem %s1, %s196
      $region24: #{metric_loss_forward.2} parent=15 // pred_fallthru
        _
      // Predicated region
      $region25: #{metric_loss_forward.2} parent=15 // pred_check
        %p198 = pneg %p98
      $region26: #{metric_loss_forward.2} parent=15 // pred_check_branch
        %200 = sbr.rel (%p198) target = $region28
      $region27: #{metric_loss_forward.2} parent=15 // pred_region
        %s201 = smul.u32 2, %s18
        %p202 = scmp.lt.s32.totalorder %s17, 1
        %s203 = scalar_select %p202, %s17, 1
        %p204 = scmp.lt.s32.totalorder %s201, 3
        %s205 = scalar_select %p204, %s201, 3
        %s206 = smul.addr %s203, 4
        %s207 = sadd.s32 %s205, %s206
        %s208 = smul.addr %s207, 4
        %s209 = scalar_lea.vmem %s2, %s208
        %s210 = smul.u32 2, %s18
      $region28: #{metric_loss_forward.2} parent=15 // pred_fallthru
        _
      // Predicated region
      $region29: #{metric_loss_forward.2} parent=15 // pred_check
        %p211 = pneg %p126
      $region30: #{metric_loss_forward.2} parent=15 // pred_check_branch
        %213 = sbr.rel (%p211) target = $region32
      $region31: #{metric_loss_forward.2} parent=15 // pred_region
        %s214 = smul.u32 2, %s18
        %p215 = scmp.lt.s32.totalorder %s17, 1
        %s216 = scalar_select %p215, %s17, 1
        %p217 = scmp.lt.s32.totalorder %s214, 3
        %s218 = scalar_select %p217, %s214, 3
        %s219 = smul.addr %s216, 4
        %s220 = sadd.s32 %s218, %s219
        %s221 = smul.addr %s220, 4
        %s222 = scalar_lea.vmem %s3, %s221
        %s223 = smul.u32 2, %s18
      $region32: #{metric_loss_forward.2} parent=15 // pred_fallthru
        _
    $region16: #{metric_loss_forward.2} parent=5 // pred_fallthru
      _
    %p224 = scmp.le.s32.totalorder 1, %s10
    %p225 = scmp.lt.s32.totalorder %s10, 5
    %p226 = pnand %p224, %p225
    %p227 = pneg %p226
    // Predicated region
    $region33: #{metric_loss_forward.2} parent=5 // pred_check
      _
    $region34: #{metric_loss_forward.2} parent=5 // pred_check_branch
      %229 = sbr.rel (%p226) target = $region36
    $region35: #{metric_loss_forward.2} parent=5 // pred_region
      %s230 = ssub.s32 %s10, 1
      %s231 = smul.u32 2, %s20
      %p232 = scmp.lt.s32.totalorder %s19, 1
      %s233 = scalar_select %p232, %s19, 1
      %p234 = scmp.lt.s32.totalorder %s231, 3
      %s235 = scalar_select %p234, %s231, 3
      %s236 = smul.addr %s233, 4
      %s237 = sadd.s32 %s235, %s236
      %s238 = smul.addr %s237, 8
      %s239 = scalar_lea.vmem %s0, %s238
      %p240 = pneg %p50
      %p241 = pneg %p47
      %p242 = scmp.lt.s32.totalorder %s19, 1
      %s243 = scalar_select %p242, %s19, 1
      %s244 = smul.addr %s243, 2
      %s245 = smul.addr %s244, 8
      %s246 = scalar_lea.vmem %s1, %s245
      %p247 = pneg %p76
      %p248 = pneg %p73
      %s249 = smul.u32 2, %s20
      %p250 = scmp.lt.s32.totalorder %s19, 1
      %s251 = scalar_select %p250, %s19, 1
      %p252 = scmp.lt.s32.totalorder %s249, 3
      %s253 = scalar_select %p252, %s249, 3
      %s254 = smul.addr %s251, 4
      %s255 = sadd.s32 %s253, %s254
      %s256 = smul.addr %s255, 4
      %s257 = scalar_lea.vmem %s2, %s256
      %p258 = pneg %p104
      %p259 = pneg %p101
      %s260 = smul.u32 2, %s20
      %p261 = scmp.lt.s32.totalorder %s19, 1
      %s262 = scalar_select %p261, %s19, 1
      %p263 = scmp.lt.s32.totalorder %s260, 3
      %s264 = scalar_select %p263, %s260, 3
      %s265 = smul.addr %s262, 4
      %s266 = sadd.s32 %s264, %s265
      %s267 = smul.addr %s266, 4
      %s268 = scalar_lea.vmem %s3, %s267
      %p269 = pneg %p132
      %p270 = pneg %p129
      %p271 = pneg %p158
      %p272 = pneg %p155
      %p273 = scmp.lt.s32.totalorder %s19, 1
      %s274 = scalar_select %p273, %s19, 1
      %s275 = smul.addr %s274, 8
      %s276 = scalar_lea.vmem %s4, %s275
      %s277 = smul.u32 2, %s20
      %p278 = scmp.lt.s32.totalorder %s19, 1
      %s279 = scalar_select %p278, %s19, 1
      %p280 = scmp.lt.s32.totalorder %s277, 3
      %s281 = scalar_select %p280, %s277, 3
      %s282 = smul.addr %s279, 4
      %s283 = sadd.s32 %s281, %s282
      %s284 = smul.addr %s283, 8
      %s285 = scalar_lea.vmem %s0, %s284
      %s286 = smul.u32 2, %s20
      %p287 = scmp.lt.s32.totalorder %s19, 1
      %s288 = scalar_select %p287, %s19, 1
      %s289 = smul.addr %s288, 2
      %s290 = smul.addr %s289, 8
      %s291 = scalar_lea.vmem %s1, %s290
      %s292 = smul.u32 2, %s20
      %p293 = scmp.lt.s32.totalorder %s19, 1
      %s294 = scalar_select %p293, %s19, 1
      %p295 = scmp.lt.s32.totalorder %s292, 3
      %s296 = scalar_select %p295, %s292, 3
      %s297 = smul.addr %s294, 4
      %s298 = sadd.s32 %s296, %s297
      %s299 = smul.addr %s298, 4
      %s300 = scalar_lea.vmem %s2, %s299
      %s301 = smul.u32 2, %s20
      %s302 = smul.u32 2, %s20
      %p303 = scmp.lt.s32.totalorder %s19, 1
      %s304 = scalar_select %p303, %s19, 1
      %p305 = scmp.lt.s32.totalorder %s302, 3
      %s306 = scalar_select %p305, %s302, 3
      %s307 = smul.addr %s304, 4
      %s308 = sadd.s32 %s306, %s307
      %s309 = smul.addr %s308, 4
      %s310 = scalar_lea.vmem %s3, %s309
      %s311 = smul.u32 2, %s20
      %p312 = scmp.lt.s32.totalorder %s19, 1
      %s313 = scalar_select %p312, %s19, 1
      %s314 = smul.addr %s313, 8
      %s315 = scalar_lea.vmem %s4, %s314
      %p316 = scmp.eq.s32.totalorder %s20, 0
      // Predicated region
      $region37: #{metric_loss_forward.2} parent=35 // pred_check
        %p317 = pneg %p316
      $region38: #{metric_loss_forward.2} parent=35 // pred_check_branch
        %319 = sbr.rel (%p317) target = $region40
      $region39: #{metric_loss_forward.2} parent=35 // pred_region
        %s320 = scalar_lea.smem [#allocation3], 0
        %321 = sst [smem:[%s320]] 0.0
        %s322 = scalar_lea.smem [#allocation3], 1
        %323 = sst [smem:[%s322]] 0.0
        %s324 = scalar_lea.smem [#allocation3], 2
        %325 = sst [smem:[%s324]] 0.0
        %s326 = scalar_lea.smem [#allocation3], 3
        %327 = sst [smem:[%s326]] 0.0
        %vm328 = vcmask 130048
        %329 = vst.msk [vmem:[#allocation2] sm:$0xff] %vm328, 0.0
        %vm330 = vcmask 122880
        %331 = vst.msk [vmem:[#allocation2] sm:$0x1] %vm330, -1e+30
        %332 = vst.msk [vmem:[#allocation2 + $0x2] sm:$0x1] %vm330, -1e+30
      $region40: #{metric_loss_forward.2} parent=35 // pred_fallthru
        _
      %v333 = vld [vmem:[%s285] sm:$0xff]
      %v334 = vld [vmem:[%s285 + $0x8] sm:$0xff]
      %v335 = vld [vmem:[%s291] sm:$0xff]
      %v336 = vld [vmem:[%s291 + $0x8] sm:$0xff]
      %v337 = vld [vmem:[%s300] sm:$0xf]
      %v338 = vld [vmem:[%s300 + $0x4] sm:$0xf]
      %v339 = vunpack.c.l.bf16 %v337
      %v340 = vunpack.c.l.bf16 %v338
      %v341 = vld [vmem:[%s310] sm:$0xf]
      %v342 = vld [vmem:[%s310 + $0x4] sm:$0xf]
      %v343 = vunpack.c.l.bf16 %v341
      %v344 = vunpack.c.l.bf16 %v342
      %v345 = vmul.f32 %v333, %v333
      %v346 = vmul.f32 %v334, %v334
      %vm347 = vcmask 261120
      %v348 = vsel %vm347, %v345, 0.0
      %349 = vadd.xlane.f32.xlu0 %v348
      %v350 = vpop.xlane.xlu0 %349
      %v351 = vsel %vm347, %v346, 0.0
      %352 = vadd.xlane.f32.xlu0 %v351
      %v353 = vpop.xlane.xlu0 %352
      %v354 = vmul.f32 %v335, %v335
      %v355 = vmul.f32 %v336, %v336
      %v356 = vsel %vm347, %v354, 0.0
      %357 = vadd.xlane.f32.xlu0 %v356
      %v358 = vpop.xlane.xlu0 %357
      %v359 = vsel %vm347, %v355, 0.0
      %360 = vadd.xlane.f32.xlu0 %v359
      %v361 = vpop.xlane.xlu0 %360
      %v363 = vsel %vm347, %v333, 0
      %v366 = vsel %vm347, %v334, 0
      %v369 = vsel %vm347, %v335, 0
      %v372 = vsel %vm347, %v336, 0
      %374 = vmatprep.subr.mxu0 0.0
      %v375 = vand.u32 %v369, 4294901760
      %376 = vmatpush1.xpose.msra.mxu0 %v375
      %377 = vmatprep.subr.mxu0 0.0
      %v378 = vand.u32 %v372, 4294901760
      %379 = vmatpush1.xpose.msra.mxu0 %v378
      %380 = vmatprep.subr.mxu0 0.0
      %381 = vmatpush1.xpose.msra.mxu0 0.0
      %382 = vmatprep.subr.mxu0 0.0
      %383 = vmatpush1.xpose.msra.mxu0 0.0
      %384 = vmatprep.subr.mxu0 0.0
      %385 = vmatpush1.xpose.msra.mxu0 0.0
      %386 = vmatprep.subr.mxu0 0.0
      %387 = vmatpush1.xpose.msra.mxu0 0.0
      %388 = vmatprep.subr.mxu0 0.0
      %389 = vmatpush1.xpose.msra.mxu0 0.0
      %390 = vmatprep.subr.mxu0 0.0
      %391 = vmatpush1.xpose.msra.mxu0 0.0
      %392 = vmatprep.subr.mxu0 0.0
      %393 = vmatpush1.xpose.msra.mxu0 0.0
      %394 = vmatprep.subr.mxu0 0.0
      %395 = vmatpush1.xpose.msra.mxu0 0.0
      %396 = vmatprep.subr.mxu0 0.0
      %397 = vmatpush1.xpose.msra.mxu0 0.0
      %398 = vmatprep.subr.mxu0 0.0
      %399 = vmatpush1.xpose.msra.mxu0 0.0
      %400 = vmatprep.subr.mxu0 0.0
      %401 = vmatpush1.xpose.msra.mxu0 0.0
      %402 = vmatprep.subr.mxu0 0.0
      %403 = vmatpush1.xpose.msra.mxu0 0.0
      %404 = vmatprep.subr.mxu0 0.0
      %405 = vmatpush1.xpose.msra.mxu0 0.0
      %406 = vmatprep.subr.mxu0 0.0
      %407 = vmatpush1.xpose.msra.mxu0 0.0
      %408 = vmatprep.subr.mxu0 0.0
      %409 = vmatpush1.xpose.msra.mxu0 0.0
      %410 = vmatprep.subr.mxu0 0.0
      %411 = vmatpush1.xpose.msra.mxu0 0.0
      %412 = vmatprep.subr.mxu0 0.0
      %413 = vmatpush1.xpose.msra.mxu0 0.0
      %414 = vmatprep.subr.mxu0 0.0
      %415 = vmatpush1.xpose.msra.mxu0 0.0
      %416 = vmatprep.subr.mxu0 0.0
      %417 = vmatpush1.xpose.msra.mxu0 0.0
      %418 = vmatprep.subr.mxu0 0.0
      %419 = vmatpush1.xpose.msra.mxu0 0.0
      %420 = vmatprep.subr.mxu0 0.0
      %421 = vmatpush1.xpose.msra.mxu0 0.0
      %422 = vmatprep.subr.mxu0 0.0
      %423 = vmatpush1.xpose.msra.mxu0 0.0
      %424 = vmatprep.subr.mxu0 0.0
      %425 = vmatpush1.xpose.msra.mxu0 0.0
      %426 = vmatprep.subr.mxu0 0.0
      %427 = vmatpush1.xpose.msra.mxu0 0.0
      %428 = vmatprep.subr.mxu0 0.0
      %429 = vmatpush1.xpose.msra.mxu0 0.0
      %430 = vmatprep.subr.mxu0 0.0
      %431 = vmatpush1.xpose.msra.mxu0 0.0
      %432 = vmatprep.subr.mxu0 0.0
      %433 = vmatpush1.xpose.msra.mxu0 0.0
      %434 = vmatprep.subr.mxu0 0.0
      %435 = vmatpush1.xpose.msra.mxu0 0.0
      %436 = vmatprep.subr.mxu0 0.0
      %437 = vmatpush1.xpose.msra.mxu0 0.0
      %438 = vmatprep.subr.mxu0 0.0
      %439 = vmatpush1.xpose.msra.mxu0 0.0
      %440 = vmatprep.mubr.f32.mxu0 0.0
      %v441 = vand.u32 %v363, 4294901760
      %v442 = vsub.f32 %v363, %v441
      %v443 = vand.u32 %v442, 4294901760
      %v444 = vsub.f32 %v442, %v443
      %v445 = vand.u32 %v444, 4294901760
      %446 = vmatmul.mubr.f32.gmra.mrb[0].mxu0 %v445
      %v447 = vpop.f32.mrb[0].mxu0
      %v448 = vadd.f32 0.0, %v447
      %v449 = vpop.f32.mrb[0].mxu0
      %450 = vmatprep.mubr.f32.mxu0 0.0
      %v451 = vand.u32 %v366, 4294901760
      %v452 = vsub.f32 %v366, %v451
      %v453 = vand.u32 %v452, 4294901760
      %v454 = vsub.f32 %v452, %v453
      %v455 = vand.u32 %v454, 4294901760
      %456 = vmatmul.mubr.f32.gmra.mrb[0].mxu0 %v455
      %v457 = vpop.f32.mrb[0].mxu0
      %v458 = vadd.f32 0.0, %v457
      %v459 = vpop.f32.mrb[0].mxu0
      %460 = vdwg.mxu0
      %461 = vmatprep.subr.mxu0 0.0
      %v462 = vand.u32 %v369, 4294901760
      %v463 = vsub.f32 %v369, %v462
      %v464 = vand.u32 %v463, 4294901760
      %v465 = vsub.f32 %v463, %v464
      %v466 = vand.u32 %v465, 4294901760
      %467 = vmatpush1.xpose.msra.mxu0 %v466
      %468 = vmatprep.subr.mxu0 0.0
      %v469 = vand.u32 %v372, 4294901760
      %v470 = vsub.f32 %v372, %v469
      %v471 = vand.u32 %v470, 4294901760
      %v472 = vsub.f32 %v470, %v471
      %v473 = vand.u32 %v472, 4294901760
      %474 = vmatpush1.xpose.msra.mxu0 %v473
      %475 = vmatprep.subr.mxu0 0.0
      %476 = vmatpush1.xpose.msra.mxu0 0.0
      %477 = vmatprep.subr.mxu0 0.0
      %478 = vmatpush1.xpose.msra.mxu0 0.0
      %479 = vmatprep.subr.mxu0 0.0
      %480 = vmatpush1.xpose.msra.mxu0 0.0
      %481 = vmatprep.subr.mxu0 0.0
      %482 = vmatpush1.xpose.msra.mxu0 0.0
      %483 = vmatprep.subr.mxu0 0.0
      %484 = vmatpush1.xpose.msra.mxu0 0.0
      %485 = vmatprep.subr.mxu0 0.0
      %486 = vmatpush1.xpose.msra.mxu0 0.0
      %487 = vmatprep.subr.mxu0 0.0
      %488 = vmatpush1.xpose.msra.mxu0 0.0
      %489 = vmatprep.subr.mxu0 0.0
      %490 = vmatpush1.xpose.msra.mxu0 0.0
      %491 = vmatprep.subr.mxu0 0.0
      %492 = vmatpush1.xpose.msra.mxu0 0.0
      %493 = vmatprep.subr.mxu0 0.0
      %494 = vmatpush1.xpose.msra.mxu0 0.0
      %495 = vmatprep.subr.mxu0 0.0
      %496 = vmatpush1.xpose.msra.mxu0 0.0
      %497 = vmatprep.subr.mxu0 0.0
      %498 = vmatpush1.xpose.msra.mxu0 0.0
      %499 = vmatprep.subr.mxu0 0.0
      %500 = vmatpush1.xpose.msra.mxu0 0.0
      %501 = vmatprep.subr.mxu0 0.0
      %502 = vmatpush1.xpose.msra.mxu0 0.0
      %503 = vmatprep.subr.mxu0 0.0
      %504 = vmatpush1.xpose.msra.mxu0 0.0
      %505 = vmatprep.subr.mxu0 0.0
      %506 = vmatpush1.xpose.msra.mxu0 0.0
      %507 = vmatprep.subr.mxu0 0.0
      %508 = vmatpush1.xpose.msra.mxu0 0.0
      %509 = vmatprep.subr.mxu0 0.0
      %510 = vmatpush1.xpose.msra.mxu0 0.0
      %511 = vmatprep.subr.mxu0 0.0
      %512 = vmatpush1.xpose.msra.mxu0 0.0
      %513 = vmatprep.subr.mxu0 0.0
      %514 = vmatpush1.xpose.msra.mxu0 0.0
      %515 = vmatprep.subr.mxu0 0.0
      %516 = vmatpush1.xpose.msra.mxu0 0.0
      %517 = vmatprep.subr.mxu0 0.0
      %518 = vmatpush1.xpose.msra.mxu0 0.0
      %519 = vmatprep.subr.mxu0 0.0
      %520 = vmatpush1.xpose.msra.mxu0 0.0
      %521 = vmatprep.subr.mxu0 0.0
      %522 = vmatpush1.xpose.msra.mxu0 0.0
      %523 = vmatprep.subr.mxu0 0.0
      %524 = vmatpush1.xpose.msra.mxu0 0.0
      %525 = vmatprep.subr.mxu0 0.0
      %526 = vmatpush1.xpose.msra.mxu0 0.0
      %527 = vmatprep.subr.mxu0 0.0
      %528 = vmatpush1.xpose.msra.mxu0 0.0
      %529 = vmatprep.subr.mxu0 0.0
      %530 = vmatpush1.xpose.msra.mxu0 0.0
      %531 = vmatprep.subr.mxu0 0.0
      %532 = vmatpush1.xpose.msra.mxu0 0.0
      %533 = vmatprep.subr.mxu0 0.0
      %534 = vmatpush1.xpose.msra.mxu0 0.0
      %535 = vmatprep.mubr.f32.mxu0 0.0
      %v536 = vand.u32 %v363, 4294901760
      %537 = vmatmul.mubr.f32.gmra.mrb[0].mxu0 %v536
      %v538 = vpop.f32.mrb[0].mxu0
      %v539 = vadd.f32 %v448, %v538
      %v540 = vpop.f32.mrb[0].mxu0
      %541 = vmatprep.mubr.f32.mxu0 0.0
      %v542 = vand.u32 %v366, 4294901760
      %543 = vmatmul.mubr.f32.gmra.mrb[0].mxu0 %v542
      %v544 = vpop.f32.mrb[0].mxu0
      %v545 = vadd.f32 %v458, %v544
      %v546 = vpop.f32.mrb[0].mxu0
      %547 = vdwg.mxu0
      %548 = vmatprep.subr.mxu0 0.0
      %v549 = vand.u32 %v369, 4294901760
      %v550 = vsub.f32 %v369, %v549
      %551 = vmatpush1.xpose.msra.mxu0 %v550
      %552 = vmatprep.subr.mxu0 0.0
      %v553 = vand.u32 %v372, 4294901760
      %v554 = vsub.f32 %v372, %v553
      %555 = vmatpush1.xpose.msra.mxu0 %v554
      %556 = vmatprep.subr.mxu0 0.0
      %557 = vmatpush1.xpose.msra.mxu0 0.0
      %558 = vmatprep.subr.mxu0 0.0
      %559 = vmatpush1.xpose.msra.mxu0 0.0
      %560 = vmatprep.subr.mxu0 0.0
      %561 = vmatpush1.xpose.msra.mxu0 0.0
      %562 = vmatprep.subr.mxu0 0.0
      %563 = vmatpush1.xpose.msra.mxu0 0.0
      %564 = vmatprep.subr.mxu0 0.0
      %565 = vmatpush1.xpose.msra.mxu0 0.0
      %566 = vmatprep.subr.mxu0 0.0
      %567 = vmatpush1.xpose.msra.mxu0 0.0
      %568 = vmatprep.subr.mxu0 0.0
      %569 = vmatpush1.xpose.msra.mxu0 0.0
      %570 = vmatprep.subr.mxu0 0.0
      %571 = vmatpush1.xpose.msra.mxu0 0.0
      %572 = vmatprep.subr.mxu0 0.0
      %573 = vmatpush1.xpose.msra.mxu0 0.0
      %574 = vmatprep.subr.mxu0 0.0
      %575 = vmatpush1.xpose.msra.mxu0 0.0
      %576 = vmatprep.subr.mxu0 0.0
      %577 = vmatpush1.xpose.msra.mxu0 0.0
      %578 = vmatprep.subr.mxu0 0.0
      %579 = vmatpush1.xpose.msra.mxu0 0.0
      %580 = vmatprep.subr.mxu0 0.0
      %581 = vmatpush1.xpose.msra.mxu0 0.0
      %582 = vmatprep.subr.mxu0 0.0
      %583 = vmatpush1.xpose.msra.mxu0 0.0
      %584 = vmatprep.subr.mxu0 0.0
      %585 = vmatpush1.xpose.msra.mxu0 0.0
      %586 = vmatprep.subr.mxu0 0.0
      %587 = vmatpush1.xpose.msra.mxu0 0.0
      %588 = vmatprep.subr.mxu0 0.0
      %589 = vmatpush1.xpose.msra.mxu0 0.0
      %590 = vmatprep.subr.mxu0 0.0
      %591 = vmatpush1.xpose.msra.mxu0 0.0
      %592 = vmatprep.subr.mxu0 0.0
      %593 = vmatpush1.xpose.msra.mxu0 0.0
      %594 = vmatprep.subr.mxu0 0.0
      %595 = vmatpush1.xpose.msra.mxu0 0.0
      %596 = vmatprep.subr.mxu0 0.0
      %597 = vmatpush1.xpose.msra.mxu0 0.0
      %598 = vmatprep.subr.mxu0 0.0
      %599 = vmatpush1.xpose.msra.mxu0 0.0
      %600 = vmatprep.subr.mxu0 0.0
      %601 = vmatpush1.xpose.msra.mxu0 0.0
      %602 = vmatprep.subr.mxu0 0.0
      %603 = vmatpush1.xpose.msra.mxu0 0.0
      %604 = vmatprep.subr.mxu0 0.0
      %605 = vmatpush1.xpose.msra.mxu0 0.0
      %606 = vmatprep.subr.mxu0 0.0
      %607 = vmatpush1.xpose.msra.mxu0 0.0
      %608 = vmatprep.subr.mxu0 0.0
      %609 = vmatpush1.xpose.msra.mxu0 0.0
      %610 = vmatprep.subr.mxu0 0.0
      %611 = vmatpush1.xpose.msra.mxu0 0.0
      %612 = vmatprep.subr.mxu0 0.0
      %613 = vmatpush1.xpose.msra.mxu0 0.0
      %614 = vmatprep.subr.mxu0 0.0
      %615 = vmatpush1.xpose.msra.mxu0 0.0
      %616 = vmatprep.mubr.f32.mxu0 0.0
      %v617 = vand.u32 %v363, 4294901760
      %v618 = vsub.f32 %v363, %v617
      %619 = vmatmul.mubr.f32.gmra.mrb[0].mxu0 %v618
      %v620 = vpop.f32.mrb[0].mxu0
      %v621 = vadd.f32 %v539, %v620
      %v622 = vpop.f32.mrb[0].mxu0
      %623 = vmatprep.mubr.f32.mxu0 0.0
      %v624 = vand.u32 %v366, 4294901760
      %v625 = vsub.f32 %v366, %v624
      %626 = vmatmul.mubr.f32.gmra.mrb[0].mxu0 %v625
      %v627 = vpop.f32.mrb[0].mxu0
      %v628 = vadd.f32 %v545, %v627
      %v629 = vpop.f32.mrb[0].mxu0
      %630 = vdwg.mxu0
      %631 = vmatprep.subr.mxu0 0.0
      %v632 = vand.u32 %v369, 4294901760
      %633 = vmatpush1.xpose.msra.mxu0 %v632
      %634 = vmatprep.subr.mxu0 0.0
      %v635 = vand.u32 %v372, 4294901760
      %636 = vmatpush1.xpose.msra.mxu0 %v635
      %637 = vmatprep.subr.mxu0 0.0
      %638 = vmatpush1.xpose.msra.mxu0 0.0
      %639 = vmatprep.subr.mxu0 0.0
      %640 = vmatpush1.xpose.msra.mxu0 0.0
      %641 = vmatprep.subr.mxu0 0.0
      %642 = vmatpush1.xpose.msra.mxu0 0.0
      %643 = vmatprep.subr.mxu0 0.0
      %644 = vmatpush1.xpose.msra.mxu0 0.0
      %645 = vmatprep.subr.mxu0 0.0
      %646 = vmatpush1.xpose.msra.mxu0 0.0
      %647 = vmatprep.subr.mxu0 0.0
      %648 = vmatpush1.xpose.msra.mxu0 0.0
      %649 = vmatprep.subr.mxu0 0.0
      %650 = vmatpush1.xpose.msra.mxu0 0.0
      %651 = vmatprep.subr.mxu0 0.0
      %652 = vmatpush1.xpose.msra.mxu0 0.0
      %653 = vmatprep.subr.mxu0 0.0
      %654 = vmatpush1.xpose.msra.mxu0 0.0
      %655 = vmatprep.subr.mxu0 0.0
      %656 = vmatpush1.xpose.msra.mxu0 0.0
      %657 = vmatprep.subr.mxu0 0.0
      %658 = vmatpush1.xpose.msra.mxu0 0.0
      %659 = vmatprep.subr.mxu0 0.0
      %660 = vmatpush1.xpose.msra.mxu0 0.0
      %661 = vmatprep.subr.mxu0 0.0
      %662 = vmatpush1.xpose.msra.mxu0 0.0
      %663 = vmatprep.subr.mxu0 0.0
      %664 = vmatpush1.xpose.msra.mxu0 0.0
      %665 = vmatprep.subr.mxu0 0.0
      %666 = vmatpush1.xpose.msra.mxu0 0.0
      %667 = vmatprep.subr.mxu0 0.0
      %668 = vmatpush1.xpose.msra.mxu0 0.0
      %669 = vmatprep.subr.mxu0 0.0
      %670 = vmatpush1.xpose.msra.mxu0 0.0
      %671 = vmatprep.subr.mxu0 0.0
      %672 = vmatpush1.xpose.msra.mxu0 0.0
      %673 = vmatprep.subr.mxu0 0.0
      %674 = vmatpush1.xpose.msra.mxu0 0.0
      %675 = vmatprep.subr.mxu0 0.0
      %676 = vmatpush1.xpose.msra.mxu0 0.0
      %677 = vmatprep.subr.mxu0 0.0
      %678 = vmatpush1.xpose.msra.mxu0 0.0
      %679 = vmatprep.subr.mxu0 0.0
      %680 = vmatpush1.xpose.msra.mxu0 0.0
      %681 = vmatprep.subr.mxu0 0.0
      %682 = vmatpush1.xpose.msra.mxu0 0.0
      %683 = vmatprep.subr.mxu0 0.0
      %684 = vmatpush1.xpose.msra.mxu0 0.0
      %685 = vmatprep.subr.mxu0 0.0
      %686 = vmatpush1.xpose.msra.mxu0 0.0
      %687 = vmatprep.subr.mxu0 0.0
      %688 = vmatpush1.xpose.msra.mxu0 0.0
      %689 = vmatprep.subr.mxu0 0.0
      %690 = vmatpush1.xpose.msra.mxu0 0.0
      %691 = vmatprep.subr.mxu0 0.0
      %692 = vmatpush1.xpose.msra.mxu0 0.0
      %693 = vmatprep.subr.mxu0 0.0
      %694 = vmatpush1.xpose.msra.mxu0 0.0
      %695 = vmatprep.subr.mxu0 0.0
      %696 = vmatpush1.xpose.msra.mxu0 0.0
      %697 = vmatprep.mubr.f32.mxu0 0.0
      %v698 = vand.u32 %v363, 4294901760
      %v699 = vsub.f32 %v363, %v698
      %v700 = vand.u32 %v699, 4294901760
      %701 = vmatmul.mubr.f32.gmra.mrb[0].mxu0 %v700
      %v702 = vpop.f32.mrb[0].mxu0
      %v703 = vadd.f32 %v621, %v702
      %v704 = vpop.f32.mrb[0].mxu0
      %705 = vmatprep.mubr.f32.mxu0 0.0
      %v706 = vand.u32 %v366, 4294901760
      %v707 = vsub.f32 %v366, %v706
      %v708 = vand.u32 %v707, 4294901760
      %709 = vmatmul.mubr.f32.gmra.mrb[0].mxu0 %v708
      %v710 = vpop.f32.mrb[0].mxu0
      %v711 = vadd.f32 %v628, %v710
      %v712 = vpop.f32.mrb[0].mxu0
      %713 = vdwg.mxu0
      %714 = vmatprep.subr.mxu0 0.0
      %v715 = vand.u32 %v369, 4294901760
      %v716 = vsub.f32 %v369, %v715
      %v717 = vand.u32 %v716, 4294901760
      %718 = vmatpush1.xpose.msra.mxu0 %v717
      %719 = vmatprep.subr.mxu0 0.0
      %v720 = vand.u32 %v372, 4294901760
      %v721 = vsub.f32 %v372, %v720
      %v722 = vand.u32 %v721, 4294901760
      %723 = vmatpush1.xpose.msra.mxu0 %v722
      %724 = vmatprep.subr.mxu0 0.0
      %725 = vmatpush1.xpose.msra.mxu0 0.0
      %726 = vmatprep.subr.mxu0 0.0
      %727 = vmatpush1.xpose.msra.mxu0 0.0
      %728 = vmatprep.subr.mxu0 0.0
      %729 = vmatpush1.xpose.msra.mxu0 0.0
      %730 = vmatprep.subr.mxu0 0.0
      %731 = vmatpush1.xpose.msra.mxu0 0.0
      %732 = vmatprep.subr.mxu0 0.0
      %733 = vmatpush1.xpose.msra.mxu0 0.0
      %734 = vmatprep.subr.mxu0 0.0
      %735 = vmatpush1.xpose.msra.mxu0 0.0
      %736 = vmatprep.subr.mxu0 0.0
      %737 = vmatpush1.xpose.msra.mxu0 0.0
      %738 = vmatprep.subr.mxu0 0.0
      %739 = vmatpush1.xpose.msra.mxu0 0.0
      %740 = vmatprep.subr.mxu0 0.0
      %741 = vmatpush1.xpose.msra.mxu0 0.0
      %742 = vmatprep.subr.mxu0 0.0
      %743 = vmatpush1.xpose.msra.mxu0 0.0
      %744 = vmatprep.subr.mxu0 0.0
      %745 = vmatpush1.xpose.msra.mxu0 0.0
      %746 = vmatprep.subr.mxu0 0.0
      %747 = vmatpush1.xpose.msra.mxu0 0.0
      %748 = vmatprep.subr.mxu0 0.0
      %749 = vmatpush1.xpose.msra.mxu0 0.0
      %750 = vmatprep.subr.mxu0 0.0
      %751 = vmatpush1.xpose.msra.mxu0 0.0
      %752 = vmatprep.subr.mxu0 0.0
      %753 = vmatpush1.xpose.msra.mxu0 0.0
      %754 = vmatprep.subr.mxu0 0.0
      %755 = vmatpush1.xpose.msra.mxu0 0.0
      %756 = vmatprep.subr.mxu0 0.0
      %757 = vmatpush1.xpose.msra.mxu0 0.0
      %758 = vmatprep.subr.mxu0 0.0
      %759 = vmatpush1.xpose.msra.mxu0 0.0
      %760 = vmatprep.subr.mxu0 0.0
      %761 = vmatpush1.xpose.msra.mxu0 0.0
      %762 = vmatprep.subr.mxu0 0.0
      %763 = vmatpush1.xpose.msra.mxu0 0.0
      %764 = vmatprep.subr.mxu0 0.0
      %765 = vmatpush1.xpose.msra.mxu0 0.0
      %766 = vmatprep.subr.mxu0 0.0
      %767 = vmatpush1.xpose.msra.mxu0 0.0
      %768 = vmatprep.subr.mxu0 0.0
      %769 = vmatpush1.xpose.msra.mxu0 0.0
      %770 = vmatprep.subr.mxu0 0.0
      %771 = vmatpush1.xpose.msra.mxu0 0.0
      %772 = vmatprep.subr.mxu0 0.0
      %773 = vmatpush1.xpose.msra.mxu0 0.0
      %774 = vmatprep.subr.mxu0 0.0
      %775 = vmatpush1.xpose.msra.mxu0 0.0
      %776 = vmatprep.subr.mxu0 0.0
      %777 = vmatpush1.xpose.msra.mxu0 0.0
      %778 = vmatprep.subr.mxu0 0.0
      %779 = vmatpush1.xpose.msra.mxu0 0.0
      %780 = vmatprep.subr.mxu0 0.0
      %781 = vmatpush1.xpose.msra.mxu0 0.0
      %782 = vmatprep.subr.mxu0 0.0
      %783 = vmatpush1.xpose.msra.mxu0 0.0
      %784 = vmatprep.mubr.f32.mxu0 0.0
      %v785 = vand.u32 %v363, 4294901760
      %786 = vmatmul.mubr.f32.gmra.mrb[0].mxu0 %v785
      %v787 = vpop.f32.mrb[0].mxu0
      %v788 = vadd.f32 %v703, %v787
      %v789 = vpop.f32.mrb[0].mxu0
      %790 = vmatprep.mubr.f32.mxu0 0.0
      %v791 = vand.u32 %v366, 4294901760
      %792 = vmatmul.mubr.f32.gmra.mrb[0].mxu0 %v791
      %v793 = vpop.f32.mrb[0].mxu0
      %v794 = vadd.f32 %v711, %v793
      %v795 = vpop.f32.mrb[0].mxu0
      %796 = vdwg.mxu0
      %797 = vmatprep.subr.mxu0 0.0
      %v798 = vand.u32 %v369, 4294901760
      %799 = vmatpush1.xpose.msra.mxu0 %v798
      %800 = vmatprep.subr.mxu0 0.0
      %v801 = vand.u32 %v372, 4294901760
      %802 = vmatpush1.xpose.msra.mxu0 %v801
      %803 = vmatprep.subr.mxu0 0.0
      %804 = vmatpush1.xpose.msra.mxu0 0.0
      %805 = vmatprep.subr.mxu0 0.0
      %806 = vmatpush1.xpose.msra.mxu0 0.0
      %807 = vmatprep.subr.mxu0 0.0
      %808 = vmatpush1.xpose.msra.mxu0 0.0
      %809 = vmatprep.subr.mxu0 0.0
      %810 = vmatpush1.xpose.msra.mxu0 0.0
      %811 = vmatprep.subr.mxu0 0.0
      %812 = vmatpush1.xpose.msra.mxu0 0.0
      %813 = vmatprep.subr.mxu0 0.0
      %814 = vmatpush1.xpose.msra.mxu0 0.0
      %815 = vmatprep.subr.mxu0 0.0
      %816 = vmatpush1.xpose.msra.mxu0 0.0
      %817 = vmatprep.subr.mxu0 0.0
      %818 = vmatpush1.xpose.msra.mxu0 0.0
      %819 = vmatprep.subr.mxu0 0.0
      %820 = vmatpush1.xpose.msra.mxu0 0.0
      %821 = vmatprep.subr.mxu0 0.0
      %822 = vmatpush1.xpose.msra.mxu0 0.0
      %823 = vmatprep.subr.mxu0 0.0
      %824 = vmatpush1.xpose.msra.mxu0 0.0
      %825 = vmatprep.subr.mxu0 0.0
      %826 = vmatpush1.xpose.msra.mxu0 0.0
      %827 = vmatprep.subr.mxu0 0.0
      %828 = vmatpush1.xpose.msra.mxu0 0.0
      %829 = vmatprep.subr.mxu0 0.0
      %830 = vmatpush1.xpose.msra.mxu0 0.0
      %831 = vmatprep.subr.mxu0 0.0
      %832 = vmatpush1.xpose.msra.mxu0 0.0
      %833 = vmatprep.subr.mxu0 0.0
      %834 = vmatpush1.xpose.msra.mxu0 0.0
      %835 = vmatprep.subr.mxu0 0.0
      %836 = vmatpush1.xpose.msra.mxu0 0.0
      %837 = vmatprep.subr.mxu0 0.0
      %838 = vmatpush1.xpose.msra.mxu0 0.0
      %839 = vmatprep.subr.mxu0 0.0
      %840 = vmatpush1.xpose.msra.mxu0 0.0
      %841 = vmatprep.subr.mxu0 0.0
      %842 = vmatpush1.xpose.msra.mxu0 0.0
      %843 = vmatprep.subr.mxu0 0.0
      %844 = vmatpush1.xpose.msra.mxu0 0.0
      %845 = vmatprep.subr.mxu0 0.0
      %846 = vmatpush1.xpose.msra.mxu0 0.0
      %847 = vmatprep.subr.mxu0 0.0
      %848 = vmatpush1.xpose.msra.mxu0 0.0
      %849 = vmatprep.subr.mxu0 0.0
      %850 = vmatpush1.xpose.msra.mxu0 0.0
      %851 = vmatprep.subr.mxu0 0.0
      %852 = vmatpush1.xpose.msra.mxu0 0.0
      %853 = vmatprep.subr.mxu0 0.0
      %854 = vmatpush1.xpose.msra.mxu0 0.0
      %855 = vmatprep.subr.mxu0 0.0
      %856 = vmatpush1.xpose.msra.mxu0 0.0
      %857 = vmatprep.subr.mxu0 0.0
      %858 = vmatpush1.xpose.msra.mxu0 0.0
      %859 = vmatprep.subr.mxu0 0.0
      %860 = vmatpush1.xpose.msra.mxu0 0.0
      %861 = vmatprep.subr.mxu0 0.0
      %862 = vmatpush1.xpose.msra.mxu0 0.0
      %863 = vmatprep.mubr.f32.mxu0 0.0
      %v864 = vand.u32 %v363, 4294901760
      %865 = vmatmul.mubr.f32.gmra.mrb[0].mxu0 %v864
      %v866 = vpop.f32.mrb[0].mxu0
      %v867 = vadd.f32 %v788, %v866
      %v868 = vpop.f32.mrb[0].mxu0
      %869 = vmatprep.mubr.f32.mxu0 0.0
      %v870 = vand.u32 %v366, 4294901760
      %871 = vmatmul.mubr.f32.gmra.mrb[0].mxu0 %v870
      %v872 = vpop.f32.mrb[0].mxu0
      %v873 = vadd.f32 %v794, %v872
      %v874 = vpop.f32.mrb[0].mxu0
      %875 = vdwg.mxu0
      %v878 = vlaneseq
      %v879 = vand.u32 %v878, 127
      %v880 = vlaneseq
      %v881 = vshrl.u32 %v880, 7
      %v882 = vsub.s32 %v879, %v881
      %v883 = vrot.slane %v358, %v882
      %v884 = vadd.s32 %v879, 4294967288
      %v885 = vlaneseq
      %v886 = vshrl.u32 %v885, 7
      %v887 = vsub.s32 %v884, %v886
      %v888 = vrot.slane %v361, %v887
      %vm889 = vcmask 130112
      %v890 = vsel %vm889, %v888, %v883
      %vm891 = vcmask 1042434
      %v892 = vsel %vm891, %v890, %v890
      %vm893 = vcmask 1043459
      %v894 = vsel %vm893, %v890, %v892
      %vm895 = vcmask 1044484
      %v896 = vsel %vm895, %v890, %v894
      %vm897 = vcmask 1045509
      %v898 = vsel %vm897, %v890, %v896
      %vm899 = vcmask 1046534
      %v900 = vsel %vm899, %v890, %v898
      %vm901 = vcmask 1047559
      %v902 = vsel %vm901, %v890, %v900
      %v904 = vadd.f32 %v350, %v902
      %v905 = vadd.f32 %v353, %v902
      %v906 = vmul.f32 %v867, 2.0
      %v907 = vmul.f32 %v873, 2.0
      %v908 = vsub.f32 %v904, %v906
      %v909 = vsub.f32 %v905, %v907
      %v910 = vmax.f32 %v908, 1e-12
      %v911 = vmax.f32 %v909, 1e-12
      %v912 = vrsqrt.pop %v910
      %v913 = vmul.f32 %v910, %v912
      %vm914 = vcmp.eq.f32.partialorder %v910, inf
      %v915 = vsel %vm914, %v910, %v913
      %vm916 = vcmp.eq.f32.partialorder %v910, 0.0
      %v917 = vand.u32 %v910, 2147483648
      %v918 = vsel %vm916, %v917, %v915
      %v919 = vrsqrt.pop %v911
      %v920 = vmul.f32 %v911, %v919
      %vm921 = vcmp.eq.f32.partialorder %v911, inf
      %v922 = vsel %vm921, %v911, %v920
      %vm923 = vcmp.eq.f32.partialorder %v911, 0.0
      %v924 = vand.u32 %v911, 2147483648
      %v925 = vsel %vm923, %v924, %v922
      %vm926 = vcmp.gt.f32.partialorder %v339, 0.0
      %vm927 = vcmp.gt.f32.partialorder %v340, 0.0
      %v928 = vsel %vm926, 1, 0
      %v929 = vsel %vm927, 1, 0
      %v930 = vcvt.s32.f32 %v928
      %v931 = vcvt.s32.f32 %v929
      %vm932 = vcmp.gt.f32.partialorder %v343, 0.0
      %vm933 = vcmp.gt.f32.partialorder %v344, 0.0
      %v934 = vsel %vm932, 1, 0
      %v935 = vsel %vm933, 1, 0
      %v936 = vcvt.s32.f32 %v934
      %v937 = vcvt.s32.f32 %v935
      %v938 = vsub.f32 1.0, %v930
      %v939 = vsub.f32 1.0, %v931
      %v940 = vmul.f32 %v938, 100000.0
      %v941 = vmul.f32 %v939, 100000.0
      %v942 = vsub.f32 %v918, %v940
      %v943 = vsub.f32 %v925, %v941
      %v944 = vsub.f32 %v942, 0.1
      %v945 = vsub.f32 %v943, 0.1
      %v946 = vmax.f32 %v944, 0.0
      %v947 = vmax.f32 %v945, 0.0
      %v948 = vmul.f32 %v946, %v339
      %v949 = vmul.f32 %v947, %v340
      %v950 = vsub.f32 1.0, %v936
      %v951 = vsub.f32 1.0, %v937
      %v952 = vmul.f32 %v950, 100000.0
      %v953 = vmul.f32 %v951, 100000.0
      %v954 = vadd.f32 %v918, %v952
      %v955 = vadd.f32 %v925, %v953
      %v956 = vsub.f32 1.4, %v954
      %v957 = vsub.f32 1.4, %v955
      %v958 = vmax.f32 %v956, 0.0
      %v959 = vmax.f32 %v957, 0.0
      %v960 = vsub.f32 %v918, 0.1
      %v961 = vsub.f32 %v925, 0.1
      %v962 = vmul.f32 %v960, 16.0
      %v963 = vmul.f32 %v961, 16.0
      %v964 = vmul.f32 %v962, %v948
      %v965 = vmul.f32 %v963, %v949
      %v966 = vsub.f32 1.4, %v918
      %v967 = vsub.f32 1.4, %v925
      %v968 = vmul.f32 %v966, 16.0
      %v969 = vmul.f32 %v967, 16.0
      %v970 = vmul.f32 %v968, %v958
      %v971 = vmul.f32 %v969, %v959
      %vm972 = vcmask 130048
      %v973 = vsel %vm972, %v964, -inf
      %974 = vmax.xlane.f32.xlu0 %v973
      %v975 = vpop.xlane.xlu0 %974
      %v976 = vsel %vm972, %v965, -inf
      %977 = vmax.xlane.f32.xlu0 %v976
      %v978 = vpop.xlane.xlu0 %977
      %v979 = vsub.f32 %v964, %v975
      %v980 = vsub.f32 %v965, %v978
      %v981 = vmul.f32 %v979, 1.442695
      %v982 = vpow.pop %v981
      %v983 = vmul.f32 %v980, 1.442695
      %v984 = vpow.pop %v983
      %v986 = vsel %vm972, %v982, 0
      %v989 = vsel %vm972, %v984, 0
      %991 = vmatprep.subr.mxu0 0.0
      %992 = vmatpush1.msra.mxu0 1.0
      %993 = vmatprep.subr.mxu0 0.0
      %994 = vmatpush1.msra.mxu0 1.0
      %995 = vmatprep.subr.mxu0 0.0
      %996 = vmatpush1.msra.mxu0 0.0
      %997 = vmatprep.subr.mxu0 0.0
      %998 = vmatpush1.msra.mxu0 0.0
      %999 = vmatprep.subr.mxu0 0.0
      %1000 = vmatpush1.msra.mxu0 0.0
      %1001 = vmatprep.subr.mxu0 0.0
      %1002 = vmatpush1.msra.mxu0 0.0
      %1003 = vmatprep.subr.mxu0 0.0
      %1004 = vmatpush1.msra.mxu0 0.0
      %1005 = vmatprep.subr.mxu0 0.0
      %1006 = vmatpush1.msra.mxu0 0.0
      %1007 = vmatprep.subr.mxu0 0.0
      %1008 = vmatpush1.msra.mxu0 0.0
      %1009 = vmatprep.subr.mxu0 0.0
      %1010 = vmatpush1.msra.mxu0 0.0
      %1011 = vmatprep.subr.mxu0 0.0
      %1012 = vmatpush1.msra.mxu0 0.0
      %1013 = vmatprep.subr.mxu0 0.0
      %1014 = vmatpush1.msra.mxu0 0.0
      %1015 = vmatprep.subr.mxu0 0.0
      %1016 = vmatpush1.msra.mxu0 0.0
      %1017 = vmatprep.subr.mxu0 0.0
      %1018 = vmatpush1.msra.mxu0 0.0
      %1019 = vmatprep.subr.mxu0 0.0
      %1020 = vmatpush1.msra.mxu0 0.0
      %1021 = vmatprep.subr.mxu0 0.0
      %1022 = vmatpush1.msra.mxu0 0.0
      %1023 = vmatprep.subr.mxu0 0.0
      %1024 = vmatpush1.msra.mxu0 0.0
      %1025 = vmatprep.subr.mxu0 0.0
      %1026 = vmatpush1.msra.mxu0 0.0
      %1027 = vmatprep.subr.mxu0 0.0
      %1028 = vmatpush1.msra.mxu0 0.0
      %1029 = vmatprep.subr.mxu0 0.0
      %1030 = vmatpush1.msra.mxu0 0.0
      %1031 = vmatprep.subr.mxu0 0.0
      %1032 = vmatpush1.msra.mxu0 0.0
      %1033 = vmatprep.subr.mxu0 0.0
      %1034 = vmatpush1.msra.mxu0 0.0
      %1035 = vmatprep.subr.mxu0 0.0
      %1036 = vmatpush1.msra.mxu0 0.0
      %1037 = vmatprep.subr.mxu0 0.0
      %1038 = vmatpush1.msra.mxu0 0.0
      %1039 = vmatprep.subr.mxu0 0.0
      %1040 = vmatpush1.msra.mxu0 0.0
      %1041 = vmatprep.subr.mxu0 0.0
      %1042 = vmatpush1.msra.mxu0 0.0
      %1043 = vmatprep.subr.mxu0 0.0
      %1044 = vmatpush1.msra.mxu0 0.0
      %1045 = vmatprep.subr.mxu0 0.0
      %1046 = vmatpush1.msra.mxu0 0.0
      %1047 = vmatprep.subr.mxu0 0.0
      %1048 = vmatpush1.msra.mxu0 0.0
      %1049 = vmatprep.subr.mxu0 0.0
      %1050 = vmatpush1.msra.mxu0 0.0
      %1051 = vmatprep.subr.mxu0 0.0
      %1052 = vmatpush1.msra.mxu0 0.0
      %1053 = vmatprep.subr.mxu0 0.0
      %1054 = vmatpush1.msra.mxu0 0.0
      %1055 = vmatprep.mubr.f32.mxu0 0.0
      %1056 = vmatmul.mubr.f32.gmra.mrb[0].mxu0 %v986
      %v1057 = vpop.f32.mrb[0].mxu0
      %v1058 = vadd.f32 0.0, %v1057
      %v1059 = vpop.f32.mrb[0].mxu0
      %1060 = vmatprep.mubr.f32.mxu0 0.0
      %1061 = vmatmul.mubr.f32.gmra.mrb[0].mxu0 %v989
      %v1062 = vpop.f32.mrb[0].mxu0
      %v1063 = vadd.f32 0.0, %v1062
      %v1064 = vpop.f32.mrb[0].mxu0
      %1065 = vdwg.mxu0
      %v1066 = vlog2.pop %v1058
      %v1067 = vmul.f32 %v1066, 0.6931472
      %v1068 = vlog2.pop %v1063
      %v1069 = vmul.f32 %v1068, 0.6931472
      %v1070 = vadd.f32 %v975, %v1067
      %v1071 = vadd.f32 %v978, %v1069
      %v1072 = vsel %vm972, %v970, -inf
      %1073 = vmax.xlane.f32.xlu0 %v1072
      %v1074 = vpop.xlane.xlu0 %1073
      %v1075 = vsel %vm972, %v971, -inf
      %1076 = vmax.xlane.f32.xlu0 %v1075
      %v1077 = vpop.xlane.xlu0 %1076
      %v1078 = vsub.f32 %v970, %v1074
      %v1079 = vsub.f32 %v971, %v1077
      %v1080 = vmul.f32 %v1078, 1.442695
      %v1081 = vpow.pop %v1080
      %v1082 = vmul.f32 %v1079, 1.442695
      %v1083 = vpow.pop %v1082
      %v1085 = vsel %vm972, %v1081, 0
      %v1088 = vsel %vm972, %v1083, 0
      %1090 = vmatprep.subr.mxu0 0.0
      %1091 = vmatpush1.msra.mxu0 1.0
      %1092 = vmatprep.subr.mxu0 0.0
      %1093 = vmatpush1.msra.mxu0 1.0
      %1094 = vmatprep.subr.mxu0 0.0
      %1095 = vmatpush1.msra.mxu0 0.0
      %1096 = vmatprep.subr.mxu0 0.0
      %1097 = vmatpush1.msra.mxu0 0.0
      %1098 = vmatprep.subr.mxu0 0.0
      %1099 = vmatpush1.msra.mxu0 0.0
      %1100 = vmatprep.subr.mxu0 0.0
      %1101 = vmatpush1.msra.mxu0 0.0
      %1102 = vmatprep.subr.mxu0 0.0
      %1103 = vmatpush1.msra.mxu0 0.0
      %1104 = vmatprep.subr.mxu0 0.0
      %1105 = vmatpush1.msra.mxu0 0.0
      %1106 = vmatprep.subr.mxu0 0.0
      %1107 = vmatpush1.msra.mxu0 0.0
      %1108 = vmatprep.subr.mxu0 0.0
      %1109 = vmatpush1.msra.mxu0 0.0
      %1110 = vmatprep.subr.mxu0 0.0
      %1111 = vmatpush1.msra.mxu0 0.0
      %1112 = vmatprep.subr.mxu0 0.0
      %1113 = vmatpush1.msra.mxu0 0.0
      %1114 = vmatprep.subr.mxu0 0.0
      %1115 = vmatpush1.msra.mxu0 0.0
      %1116 = vmatprep.subr.mxu0 0.0
      %1117 = vmatpush1.msra.mxu0 0.0
      %1118 = vmatprep.subr.mxu0 0.0
      %1119 = vmatpush1.msra.mxu0 0.0
      %1120 = vmatprep.subr.mxu0 0.0
      %1121 = vmatpush1.msra.mxu0 0.0
      %1122 = vmatprep.subr.mxu0 0.0
      %1123 = vmatpush1.msra.mxu0 0.0
      %1124 = vmatprep.subr.mxu0 0.0
      %1125 = vmatpush1.msra.mxu0 0.0
      %1126 = vmatprep.subr.mxu0 0.0
      %1127 = vmatpush1.msra.mxu0 0.0
      %1128 = vmatprep.subr.mxu0 0.0
      %1129 = vmatpush1.msra.mxu0 0.0
      %1130 = vmatprep.subr.mxu0 0.0
      %1131 = vmatpush1.msra.mxu0 0.0
      %1132 = vmatprep.subr.mxu0 0.0
      %1133 = vmatpush1.msra.mxu0 0.0
      %1134 = vmatprep.subr.mxu0 0.0
      %1135 = vmatpush1.msra.mxu0 0.0
      %1136 = vmatprep.subr.mxu0 0.0
      %1137 = vmatpush1.msra.mxu0 0.0
      %1138 = vmatprep.subr.mxu0 0.0
      %1139 = vmatpush1.msra.mxu0 0.0
      %1140 = vmatprep.subr.mxu0 0.0
      %1141 = vmatpush1.msra.mxu0 0.0
      %1142 = vmatprep.subr.mxu0 0.0
      %1143 = vmatpush1.msra.mxu0 0.0
      %1144 = vmatprep.subr.mxu0 0.0
      %1145 = vmatpush1.msra.mxu0 0.0
      %1146 = vmatprep.subr.mxu0 0.0
      %1147 = vmatpush1.msra.mxu0 0.0
      %1148 = vmatprep.subr.mxu0 0.0
      %1149 = vmatpush1.msra.mxu0 0.0
      %1150 = vmatprep.subr.mxu0 0.0
      %1151 = vmatpush1.msra.mxu0 0.0
      %1152 = vmatprep.subr.mxu0 0.0
      %1153 = vmatpush1.msra.mxu0 0.0
      %1154 = vmatprep.mubr.f32.mxu0 0.0
      %1155 = vmatmul.mubr.f32.gmra.mrb[0].mxu0 %v1085
      %v1156 = vpop.f32.mrb[0].mxu0
      %v1157 = vadd.f32 0.0, %v1156
      %v1158 = vpop.f32.mrb[0].mxu0
      %1159 = vmatprep.mubr.f32.mxu0 0.0
      %1160 = vmatmul.mubr.f32.gmra.mrb[0].mxu0 %v1088
      %v1161 = vpop.f32.mrb[0].mxu0
      %v1162 = vadd.f32 0.0, %v1161
      %v1163 = vpop.f32.mrb[0].mxu0
      %1164 = vdwg.mxu0
      %v1165 = vlog2.pop %v1157
      %v1166 = vmul.f32 %v1165, 0.6931472
      %v1167 = vlog2.pop %v1162
      %v1168 = vmul.f32 %v1167, 0.6931472
      %v1169 = vadd.f32 %v1074, %v1166
      %v1170 = vadd.f32 %v1077, %v1168
      %v1172 = vsel %vm972, %v930, 0
      %v1175 = vsel %vm972, %v931, 0
      %1177 = vmatprep.subr.mxu0 0.0
      %1178 = vmatpush1.msra.mxu0 1.0
      %1179 = vmatprep.subr.mxu0 0.0
      %1180 = vmatpush1.msra.mxu0 1.0
      %1181 = vmatprep.subr.mxu0 0.0
      %1182 = vmatpush1.msra.mxu0 0.0
      %1183 = vmatprep.subr.mxu0 0.0
      %1184 = vmatpush1.msra.mxu0 0.0
      %1185 = vmatprep.subr.mxu0 0.0
      %1186 = vmatpush1.msra.mxu0 0.0
      %1187 = vmatprep.subr.mxu0 0.0
      %1188 = vmatpush1.msra.mxu0 0.0
      %1189 = vmatprep.subr.mxu0 0.0
      %1190 = vmatpush1.msra.mxu0 0.0
      %1191 = vmatprep.subr.mxu0 0.0
      %1192 = vmatpush1.msra.mxu0 0.0
      %1193 = vmatprep.subr.mxu0 0.0
      %1194 = vmatpush1.msra.mxu0 0.0
      %1195 = vmatprep.subr.mxu0 0.0
      %1196 = vmatpush1.msra.mxu0 0.0
      %1197 = vmatprep.subr.mxu0 0.0
      %1198 = vmatpush1.msra.mxu0 0.0
      %1199 = vmatprep.subr.mxu0 0.0
      %1200 = vmatpush1.msra.mxu0 0.0
      %1201 = vmatprep.subr.mxu0 0.0
      %1202 = vmatpush1.msra.mxu0 0.0
      %1203 = vmatprep.subr.mxu0 0.0
      %1204 = vmatpush1.msra.mxu0 0.0
      %1205 = vmatprep.subr.mxu0 0.0
      %1206 = vmatpush1.msra.mxu0 0.0
      %1207 = vmatprep.subr.mxu0 0.0
      %1208 = vmatpush1.msra.mxu0 0.0
      %1209 = vmatprep.subr.mxu0 0.0
      %1210 = vmatpush1.msra.mxu0 0.0
      %1211 = vmatprep.subr.mxu0 0.0
      %1212 = vmatpush1.msra.mxu0 0.0
      %1213 = vmatprep.subr.mxu0 0.0
      %1214 = vmatpush1.msra.mxu0 0.0
      %1215 = vmatprep.subr.mxu0 0.0
      %1216 = vmatpush1.msra.mxu0 0.0
      %1217 = vmatprep.subr.mxu0 0.0
      %1218 = vmatpush1.msra.mxu0 0.0
      %1219 = vmatprep.subr.mxu0 0.0
      %1220 = vmatpush1.msra.mxu0 0.0
      %1221 = vmatprep.subr.mxu0 0.0
      %1222 = vmatpush1.msra.mxu0 0.0
      %1223 = vmatprep.subr.mxu0 0.0
      %1224 = vmatpush1.msra.mxu0 0.0
      %1225 = vmatprep.subr.mxu0 0.0
      %1226 = vmatpush1.msra.mxu0 0.0
      %1227 = vmatprep.subr.mxu0 0.0
      %1228 = vmatpush1.msra.mxu0 0.0
      %1229 = vmatprep.subr.mxu0 0.0
      %1230 = vmatpush1.msra.mxu0 0.0
      %1231 = vmatprep.subr.mxu0 0.0
      %1232 = vmatpush1.msra.mxu0 0.0
      %1233 = vmatprep.subr.mxu0 0.0
      %1234 = vmatpush1.msra.mxu0 0.0
      %1235 = vmatprep.subr.mxu0 0.0
      %1236 = vmatpush1.msra.mxu0 0.0
      %1237 = vmatprep.subr.mxu0 0.0
      %1238 = vmatpush1.msra.mxu0 0.0
      %1239 = vmatprep.subr.mxu0 0.0
      %1240 = vmatpush1.msra.mxu0 0.0
      %1241 = vmatprep.mubr.f32.mxu0 0.0
      %1242 = vmatmul.mubr.f32.gmra.mrb[0].mxu0 %v1172
      %v1243 = vpop.f32.mrb[0].mxu0
      %v1244 = vadd.f32 0.0, %v1243
      %v1245 = vpop.f32.mrb[0].mxu0
      %1246 = vmatprep.mubr.f32.mxu0 0.0
      %1247 = vmatmul.mubr.f32.gmra.mrb[0].mxu0 %v1175
      %v1248 = vpop.f32.mrb[0].mxu0
      %v1249 = vadd.f32 0.0, %v1248
      %v1250 = vpop.f32.mrb[0].mxu0
      %1251 = vdwg.mxu0
      %v1253 = vsel %vm972, %v936, 0
      %v1256 = vsel %vm972, %v937, 0
      %1258 = vmatprep.subr.mxu0 0.0
      %1259 = vmatpush1.msra.mxu0 1.0
      %1260 = vmatprep.subr.mxu0 0.0
      %1261 = vmatpush1.msra.mxu0 1.0
      %1262 = vmatprep.subr.mxu0 0.0
      %1263 = vmatpush1.msra.mxu0 0.0
      %1264 = vmatprep.subr.mxu0 0.0
      %1265 = vmatpush1.msra.mxu0 0.0
      %1266 = vmatprep.subr.mxu0 0.0
      %1267 = vmatpush1.msra.mxu0 0.0
      %1268 = vmatprep.subr.mxu0 0.0
      %1269 = vmatpush1.msra.mxu0 0.0
      %1270 = vmatprep.subr.mxu0 0.0
      %1271 = vmatpush1.msra.mxu0 0.0
      %1272 = vmatprep.subr.mxu0 0.0
      %1273 = vmatpush1.msra.mxu0 0.0
      %1274 = vmatprep.subr.mxu0 0.0
      %1275 = vmatpush1.msra.mxu0 0.0
      %1276 = vmatprep.subr.mxu0 0.0
      %1277 = vmatpush1.msra.mxu0 0.0
      %1278 = vmatprep.subr.mxu0 0.0
      %1279 = vmatpush1.msra.mxu0 0.0
      %1280 = vmatprep.subr.mxu0 0.0
      %1281 = vmatpush1.msra.mxu0 0.0
      %1282 = vmatprep.subr.mxu0 0.0
      %1283 = vmatpush1.msra.mxu0 0.0
      %1284 = vmatprep.subr.mxu0 0.0
      %1285 = vmatpush1.msra.mxu0 0.0
      %1286 = vmatprep.subr.mxu0 0.0
      %1287 = vmatpush1.msra.mxu0 0.0
      %1288 = vmatprep.subr.mxu0 0.0
      %1289 = vmatpush1.msra.mxu0 0.0
      %1290 = vmatprep.subr.mxu0 0.0
      %1291 = vmatpush1.msra.mxu0 0.0
      %1292 = vmatprep.subr.mxu0 0.0
      %1293 = vmatpush1.msra.mxu0 0.0
      %1294 = vmatprep.subr.mxu0 0.0
      %1295 = vmatpush1.msra.mxu0 0.0
      %1296 = vmatprep.subr.mxu0 0.0
      %1297 = vmatpush1.msra.mxu0 0.0
      %1298 = vmatprep.subr.mxu0 0.0
      %1299 = vmatpush1.msra.mxu0 0.0
      %1300 = vmatprep.subr.mxu0 0.0
      %1301 = vmatpush1.msra.mxu0 0.0
      %1302 = vmatprep.subr.mxu0 0.0
      %1303 = vmatpush1.msra.mxu0 0.0
      %1304 = vmatprep.subr.mxu0 0.0
      %1305 = vmatpush1.msra.mxu0 0.0
      %1306 = vmatprep.subr.mxu0 0.0
      %1307 = vmatpush1.msra.mxu0 0.0
      %1308 = vmatprep.subr.mxu0 0.0
      %1309 = vmatpush1.msra.mxu0 0.0
      %1310 = vmatprep.subr.mxu0 0.0
      %1311 = vmatpush1.msra.mxu0 0.0
      %1312 = vmatprep.subr.mxu0 0.0
      %1313 = vmatpush1.msra.mxu0 0.0
      %1314 = vmatprep.subr.mxu0 0.0
      %1315 = vmatpush1.msra.mxu0 0.0
      %1316 = vmatprep.subr.mxu0 0.0
      %1317 = vmatpush1.msra.mxu0 0.0
      %1318 = vmatprep.subr.mxu0 0.0
      %1319 = vmatpush1.msra.mxu0 0.0
      %1320 = vmatprep.subr.mxu0 0.0
      %1321 = vmatpush1.msra.mxu0 0.0
      %1322 = vmatprep.mubr.f32.mxu0 0.0
      %1323 = vmatmul.mubr.f32.gmra.mrb[0].mxu0 %v1253
      %v1324 = vpop.f32.mrb[0].mxu0
      %v1325 = vadd.f32 0.0, %v1324
      %v1326 = vpop.f32.mrb[0].mxu0
      %1327 = vmatprep.mubr.f32.mxu0 0.0
      %1328 = vmatmul.mubr.f32.gmra.mrb[0].mxu0 %v1256
      %v1329 = vpop.f32.mrb[0].mxu0
      %v1330 = vadd.f32 0.0, %v1329
      %v1331 = vpop.f32.mrb[0].mxu0
      %1332 = vdwg.mxu0
      %vm1333 = vcmp.gt.f32.partialorder %v1244, 0.0
      %vm1334 = vcmp.gt.f32.partialorder %v1249, 0.0
      %vm1335 = vcmp.gt.f32.partialorder %v1325, 0.0
      %vm1336 = vcmp.gt.f32.partialorder %v1330, 0.0
      %vm1337 = vmand %vm1333, %vm1335
      %vm1338 = vmand %vm1334, %vm1336
      %v1339 = vsel %vm1337, 1, 0
      %v1340 = vsel %vm1338, 1, 0
      %v1341 = vcvt.s32.f32 %v1339
      %v1342 = vcvt.s32.f32 %v1340
      %v1343 = vadd.f32 %v1070, %v1169
      %v1344 = vadd.f32 %v1071, %v1170
      %vm1345 = vcmp.gt.f32.partialorder %v1343, 20.0
      %vm1346 = vcmp.gt.f32.partialorder %v1344, 20.0
      %v1347 = vmin.f32 %v1343, 20.0
      %v1348 = vmin.f32 %v1344, 20.0
      %v1349 = vmul.f32 %v1347, 1.442695
      %v1350 = vpow.pop %v1349
      %v1351 = vmul.f32 %v1348, 1.442695
      %v1352 = vpow.pop %v1351
      %v1353 = vadd.f32 %v1350, 1.0
      %v1354 = vlog2.pop %v1353
      %v1355 = vmul.f32 %v1354, 0.6931472
      %v1356 = vmul.f32 -0.5, %v1350
      %v1357 = vadd.f32 %v1356, 1.0
      %v1358 = vmul.f32 %v1357, %v1350
      %v1359 = vand.u32 2147483647, %v1350
      %vm1360 = vcmp.lt.f32.partialorder %v1359, 0.0004427343
      %v1361 = vsel %vm1360, %v1358, %v1355
      %v1362 = vadd.f32 %v1352, 1.0
      %v1363 = vlog2.pop %v1362
      %v1364 = vmul.f32 %v1363, 0.6931472
      %v1365 = vmul.f32 -0.5, %v1352
      %v1366 = vadd.f32 %v1365, 1.0
      %v1367 = vmul.f32 %v1366, %v1352
      %v1368 = vand.u32 2147483647, %v1352
      %vm1369 = vcmp.lt.f32.partialorder %v1368, 0.0004427343
      %v1370 = vsel %vm1369, %v1367, %v1364
      %v1371 = vsel %vm1345, %v1343, %v1361
      %v1372 = vsel %vm1346, %v1344, %v1370
      %v1373 = vrcp.pop 16.0
      %v1374 = vmul.f32 %v1371, %v1373
      %v1375 = vmul.f32 %v1372, %v1373
      %v1376 = vsel %vm972, %v910, inf
      %1377 = vmin.xlane.f32.xlu0 %v1376
      %v1378 = vpop.xlane.xlu0 %1377
      %v1379 = vsel %vm972, %v911, inf
      %1380 = vmin.xlane.f32.xlu0 %v1379
      %v1381 = vpop.xlane.xlu0 %1380
      %vm1382 = vcmp.eq.f32.partialorder %v910, %v1378
      %vm1383 = vcmp.eq.f32.partialorder %v911, %v1381
      %v1384 = vsel %vm1382, %v879, 16
      %v1385 = vsel %vm1383, %v879, 16
      %v1386 = vsel %vm972, %v1384, 2147483647
      %v1387 = vand.u32 %v1386, 65535
      %v1388 = vshra.s32 %v1386, 16
      %v1389 = vcvt.s32.f32 %v1387
      %v1390 = vcvt.s32.f32 %v1388
      %1391 = vmin.xlane.f32.xlu0 %v1390
      %v1392 = vpop.xlane.xlu0 %1391
      %vm1393 = vcmp.eq.f32.partialorder %v1390, %v1392
      %v1394 = vsel %vm1393, %v1389, inf
      %1395 = vmin.xlane.f32.xlu0 %v1394
      %v1396 = vpop.xlane.xlu0 %1395
      %v1397 = vcvt.f32.s32 %v1396
      %v1398 = vcvt.f32.s32 %v1392
      %v1399 = vshll.u32 %v1398, 16
      %v1400 = vadd.s32 %v1399, %v1397
      %v1401 = vsel %vm972, %v1385, 2147483647
      %v1402 = vand.u32 %v1401, 65535
      %v1403 = vshra.s32 %v1401, 16
      %v1404 = vcvt.s32.f32 %v1402
      %v1405 = vcvt.s32.f32 %v1403
      %1406 = vmin.xlane.f32.xlu0 %v1405
      %v1407 = vpop.xlane.xlu0 %1406
      %vm1408 = vcmp.eq.f32.partialorder %v1405, %v1407
      %v1409 = vsel %vm1408, %v1404, inf
      %1410 = vmin.xlane.f32.xlu0 %v1409
      %v1411 = vpop.xlane.xlu0 %1410
      %v1412 = vcvt.f32.s32 %v1411
      %v1413 = vcvt.f32.s32 %v1407
      %v1414 = vshll.u32 %v1413, 16
      %v1415 = vadd.s32 %v1414, %v1412
      %vm1416 = vcmp.eq.s32.totalorder %v879, %v1400
      %vm1417 = vcmp.eq.s32.totalorder %v879, %v1415
      %v1418 = vsel %vm1416, 1, 0
      %v1419 = vsel %vm1417, 1, 0
      %v1420 = vcvt.s32.f32 %v1418
      %v1421 = vcvt.s32.f32 %v1419
      %v1422 = vmul.f32 %v930, %v1420
      %v1423 = vmul.f32 %v931, %v1421
      %v1424 = vsel %vm972, %v1422, 0.0
      %v1425 = vsel %vm972, %v1423, 0.0
      %v1426 = vadd.f32 %v1424, %v1425
      %1427 = vadd.xlane.f32.xlu0 %v1426
      %v1428 = vpop.xlane.xlu0 %1427
      %v1429 = vrot.slane %v1428, 4
      %v1430 = vadd.f32 %v1428, %v1429
      %v1431 = vrot.slane %v1430, 2
      %v1432 = vadd.f32 %v1430, %v1431
      %v1433 = vrot.slane %v1432, 1
      %v1434 = vadd.f32 %v1432, %v1433
      %s1435 = vtos %v1434
      %v1436 = vsel %vm1333, 1, 0
      %v1437 = vsel %vm1334, 1, 0
      %v1438 = vcvt.s32.f32 %v1436
      %v1439 = vcvt.s32.f32 %v1437
      %vm1440 = vcmask 7168
      %v1441 = vsel %vm1440, %v1438, 0.0
      %v1442 = vsel %vm1440, %v1439, 0.0
      %v1443 = vadd.f32 %v1441, %v1442
      %1444 = vadd.xlane.f32.xlu0 %v1443
      %v1445 = vpop.xlane.xlu0 %1444
      %v1446 = vrot.slane %v1445, 4
      %v1447 = vadd.f32 %v1445, %v1446
      %v1448 = vrot.slane %v1447, 2
      %v1449 = vadd.f32 %v1447, %v1448
      %v1450 = vrot.slane %v1449, 1
      %v1451 = vadd.f32 %v1449, %v1450
      %s1452 = vtos %v1451
      %s1453 = sld [smem:[#allocation3]]
      %v1454 = vmul.f32 %v1374, %v1341
      %v1455 = vmul.f32 %v1375, %v1342
      %v1456 = vsel %vm1440, %v1454, 0.0
      %v1457 = vsel %vm1440, %v1455, 0.0
      %v1458 = vadd.f32 %v1456, %v1457
      %1459 = vadd.xlane.f32.xlu0 %v1458
      %v1460 = vpop.xlane.xlu0 %1459
      %v1461 = vrot.slane %v1460, 4
      %v1462 = vadd.f32 %v1460, %v1461
      %v1463 = vrot.slane %v1462, 2
      %v1464 = vadd.f32 %v1462, %v1463
      %v1465 = vrot.slane %v1464, 1
      %v1466 = vadd.f32 %v1464, %v1465
      %s1467 = vtos %v1466
      %s1468 = sadd.f32 %s1453, %s1467
      %s1469 = scalar_lea.smem [#allocation3], 0
      %1470 = sst [smem:[%s1469]] %s1468
      %s1471 = sld [smem:[#allocation3 + $0x1]]
      %v1472 = vsel %vm1440, %v1341, 0.0
      %v1473 = vsel %vm1440, %v1342, 0.0
      %v1474 = vadd.f32 %v1472, %v1473
      %1475 = vadd.xlane.f32.xlu0 %v1474
      %v1476 = vpop.xlane.xlu0 %1475
      %v1477 = vrot.slane %v1476, 4
      %v1478 = vadd.f32 %v1476, %v1477
      %v1479 = vrot.slane %v1478, 2
      %v1480 = vadd.f32 %v1478, %v1479
      %v1481 = vrot.slane %v1480, 1
      %v1482 = vadd.f32 %v1480, %v1481
      %s1483 = vtos %v1482
      %s1484 = sadd.f32 %s1471, %s1483
      %s1485 = scalar_lea.smem [#allocation3], 1
      %1486 = sst [smem:[%s1485]] %s1484
      %s1487 = sld [smem:[#allocation3 + $0x2]]
      %s1488 = sadd.f32 %s1487, %s1435
      %s1489 = scalar_lea.smem [#allocation3], 2
      %1490 = sst [smem:[%s1489]] %s1488
      %s1491 = sld [smem:[#allocation3 + $0x3]]
      %s1492 = sadd.f32 %s1491, %s1452
      %s1493 = scalar_lea.smem [#allocation3], 3
      %1494 = sst [smem:[%s1493]] %s1492
      %v1495 = vmax.f32 %v975, %v978
      %v1496 = vrot.slane %v1495, 4
      %v1497 = vmax.f32 %v1495, %v1496
      %v1498 = vrot.slane %v1497, 2
      %v1499 = vmax.f32 %v1497, %v1498
      %v1500 = vrot.slane %v1499, 1
      %v1501 = vmax.f32 %v1499, %v1500
      %s1502 = vtos %v1501
      %v1503 = vstv %s1502
      %v1504 = vsub.f32 %v975, %v1503
      %v1505 = vsub.f32 %v978, %v1503
      %v1506 = vmul.f32 %v1504, 1.442695
      %v1507 = vpow.pop %v1506
      %v1508 = vmul.f32 %v1505, 1.442695
      %v1509 = vpow.pop %v1508
      %1510 = vxpose.xlu0.b32.start [1/16] %v1507, 128
      %1511 = vxpose.xlu0.b32.cont [2/16] %v1509, 128
      %1512 = vxpose.xlu0.b32.cont [3/16] 0.0, 128
      %1513 = vxpose.xlu0.b32.cont [4/16] 0.0, 128
      %1514 = vxpose.xlu0.b32.cont [5/16] 0.0, 128
      %1515 = vxpose.xlu0.b32.cont [6/16] 0.0, 128
      %1516 = vxpose.xlu0.b32.cont [7/16] 0.0, 128
      %1517 = vxpose.xlu0.b32.cont [8/16] 0.0, 128
      %1518 = vxpose.xlu0.b32.cont [9/16] 0.0, 128
      %1519 = vxpose.xlu0.b32.cont [10/16] 0.0, 128
      %1520 = vxpose.xlu0.b32.cont [11/16] 0.0, 128
      %1521 = vxpose.xlu0.b32.cont [12/16] 0.0, 128
      %1522 = vxpose.xlu0.b32.cont [13/16] 0.0, 128
      %1523 = vxpose.xlu0.b32.cont [14/16] 0.0, 128
      %1524 = vxpose.xlu0.b32.cont [15/16] 0.0, 128
      %1525 = vxpose.xlu0.b32.end [16/16] 0.0, 128
      %v1526 = vpop.trf.xlu0
      %v1527 = vpop.trf.xlu0
      %v1528 = vpop.trf.xlu0
      %v1529 = vpop.trf.xlu0
      %v1530 = vpop.trf.xlu0
      %v1531 = vpop.trf.xlu0
      %v1532 = vpop.trf.xlu0
      %v1533 = vpop.trf.xlu0
      %v1534 = vpop.trf.xlu0
      %v1535 = vpop.trf.xlu0
      %v1536 = vpop.trf.xlu0
      %v1537 = vpop.trf.xlu0
      %v1538 = vpop.trf.xlu0
      %v1539 = vpop.trf.xlu0
      %v1540 = vpop.trf.xlu0
      %v1541 = vpop.trf.xlu0
      %v1543 = vsel %vm972, %v1526, 0
      %1545 = vmatprep.subr.mxu0 0.0
      %1546 = vmatpush1.msra.mxu0 %v982
      %1547 = vmatprep.subr.mxu0 0.0
      %1548 = vmatpush1.msra.mxu0 %v984
      %1549 = vmatprep.subr.mxu0 0.0
      %1550 = vmatpush1.msra.mxu0 0.0
      %1551 = vmatprep.subr.mxu0 0.0
      %1552 = vmatpush1.msra.mxu0 0.0
      %1553 = vmatprep.subr.mxu0 0.0
      %1554 = vmatpush1.msra.mxu0 0.0
      %1555 = vmatprep.subr.mxu0 0.0
      %1556 = vmatpush1.msra.mxu0 0.0
      %1557 = vmatprep.subr.mxu0 0.0
      %1558 = vmatpush1.msra.mxu0 0.0
      %1559 = vmatprep.subr.mxu0 0.0
      %1560 = vmatpush1.msra.mxu0 0.0
      %1561 = vmatprep.subr.mxu0 0.0
      %1562 = vmatpush1.msra.mxu0 0.0
      %1563 = vmatprep.subr.mxu0 0.0
      %1564 = vmatpush1.msra.mxu0 0.0
      %1565 = vmatprep.subr.mxu0 0.0
      %1566 = vmatpush1.msra.mxu0 0.0
      %1567 = vmatprep.subr.mxu0 0.0
      %1568 = vmatpush1.msra.mxu0 0.0
      %1569 = vmatprep.subr.mxu0 0.0
      %1570 = vmatpush1.msra.mxu0 0.0
      %1571 = vmatprep.subr.mxu0 0.0
      %1572 = vmatpush1.msra.mxu0 0.0
      %1573 = vmatprep.subr.mxu0 0.0
      %1574 = vmatpush1.msra.mxu0 0.0
      %1575 = vmatprep.subr.mxu0 0.0
      %1576 = vmatpush1.msra.mxu0 0.0
      %1577 = vmatprep.subr.mxu0 0.0
      %1578 = vmatpush1.msra.mxu0 0.0
      %1579 = vmatprep.subr.mxu0 0.0
      %1580 = vmatpush1.msra.mxu0 0.0
      %1581 = vmatprep.subr.mxu0 0.0
      %1582 = vmatpush1.msra.mxu0 0.0
      %1583 = vmatprep.subr.mxu0 0.0
      %1584 = vmatpush1.msra.mxu0 0.0
      %1585 = vmatprep.subr.mxu0 0.0
      %1586 = vmatpush1.msra.mxu0 0.0
      %1587 = vmatprep.subr.mxu0 0.0
      %1588 = vmatpush1.msra.mxu0 0.0
      %1589 = vmatprep.subr.mxu0 0.0
      %1590 = vmatpush1.msra.mxu0 0.0
      %1591 = vmatprep.subr.mxu0 0.0
      %1592 = vmatpush1.msra.mxu0 0.0
      %1593 = vmatprep.subr.mxu0 0.0
      %1594 = vmatpush1.msra.mxu0 0.0
      %1595 = vmatprep.subr.mxu0 0.0
      %1596 = vmatpush1.msra.mxu0 0.0
      %1597 = vmatprep.subr.mxu0 0.0
      %1598 = vmatpush1.msra.mxu0 0.0
      %1599 = vmatprep.subr.mxu0 0.0
      %1600 = vmatpush1.msra.mxu0 0.0
      %1601 = vmatprep.subr.mxu0 0.0
      %1602 = vmatpush1.msra.mxu0 0.0
      %1603 = vmatprep.subr.mxu0 0.0
      %1604 = vmatpush1.msra.mxu0 0.0
      %1605 = vmatprep.subr.mxu0 0.0
      %1606 = vmatpush1.msra.mxu0 0.0
      %1607 = vmatprep.subr.mxu0 0.0
      %1608 = vmatpush1.msra.mxu0 0.0
      %1609 = vmatprep.mubr.f32.mxu0 0.0
      %1610 = vmatmul.mubr.f32.gmra.mrb[0].mxu0 %v1543
      %v1611 = vpop.f32.mrb[0].mxu0
      %v1612 = vadd.f32 0.0, %v1611
      %v1613 = vpop.f32.mrb[0].mxu0
      %1614 = vdwg.mxu0
      %v1615 = vmax.f32 %v973, %v976
      %v1616 = vrot.slane %v1615, 4
      %v1617 = vmax.f32 %v1615, %v1616
      %v1618 = vrot.slane %v1617, 2
      %v1619 = vmax.f32 %v1617, %v1618
      %v1620 = vrot.slane %v1619, 1
      %v1621 = vmax.f32 %v1619, %v1620
      %v1622 = vld [vmem:[#allocation2] sm:$0x1]
      %v1623 = vld [vmem:[#allocation2 + $0x1] sm:$0x1]
      %v1624 = vmax.f32 %v1622, %v1621
      %v1625 = vsub.f32 %v1622, %v1624
      %v1626 = vmul.f32 %v1625, 1.442695
      %v1627 = vpow.pop %v1626
      %v1628 = vmul.f32 %v1623, %v1627
      %v1629 = vsub.f32 %v1503, %v1624
      %v1630 = vmul.f32 %v1629, 1.442695
      %v1631 = vpow.pop %v1630
      %v1632 = vmul.f32 %v1612, %v1631
      %v1633 = vadd.f32 %v1628, %v1632
      %vm1634 = vcmask 122880
      %1635 = vst.msk [vmem:[#allocation2] sm:$0x1] %vm1634, %v1624
      %1636 = vst.msk [vmem:[#allocation2 + $0x1] sm:$0x1] %vm1634, %v1633
      %v1637 = vmax.f32 %v1074, %v1077
      %v1638 = vrot.slane %v1637, 4
      %v1639 = vmax.f32 %v1637, %v1638
      %v1640 = vrot.slane %v1639, 2
      %v1641 = vmax.f32 %v1639, %v1640
      %v1642 = vrot.slane %v1641, 1
      %v1643 = vmax.f32 %v1641, %v1642
      %s1644 = vtos %v1643
      %v1645 = vstv %s1644
      %v1646 = vsub.f32 %v1074, %v1645
      %v1647 = vsub.f32 %v1077, %v1645
      %v1648 = vmul.f32 %v1646, 1.442695
      %v1649 = vpow.pop %v1648
      %v1650 = vmul.f32 %v1647, 1.442695
      %v1651 = vpow.pop %v1650
      %1652 = vxpose.xlu0.b32.start [1/16] %v1649, 128
      %1653 = vxpose.xlu0.b32.cont [2/16] %v1651, 128
      %1654 = vxpose.xlu0.b32.cont [3/16] 0.0, 128
      %1655 = vxpose.xlu0.b32.cont [4/16] 0.0, 128
      %1656 = vxpose.xlu0.b32.cont [5/16] 0.0, 128
      %1657 = vxpose.xlu0.b32.cont [6/16] 0.0, 128
      %1658 = vxpose.xlu0.b32.cont [7/16] 0.0, 128
      %1659 = vxpose.xlu0.b32.cont [8/16] 0.0, 128
      %1660 = vxpose.xlu0.b32.cont [9/16] 0.0, 128
      %1661 = vxpose.xlu0.b32.cont [10/16] 0.0, 128
      %1662 = vxpose.xlu0.b32.cont [11/16] 0.0, 128
      %1663 = vxpose.xlu0.b32.cont [12/16] 0.0, 128
      %1664 = vxpose.xlu0.b32.cont [13/16] 0.0, 128
      %1665 = vxpose.xlu0.b32.cont [14/16] 0.0, 128
      %1666 = vxpose.xlu0.b32.cont [15/16] 0.0, 128
      %1667 = vxpose.xlu0.b32.end [16/16] 0.0, 128
      %v1668 = vpop.trf.xlu0
      %v1669 = vpop.trf.xlu0
      %v1670 = vpop.trf.xlu0
      %v1671 = vpop.trf.xlu0
      %v1672 = vpop.trf.xlu0
      %v1673 = vpop.trf.xlu0
      %v1674 = vpop.trf.xlu0
      %v1675 = vpop.trf.xlu0
      %v1676 = vpop.trf.xlu0
      %v1677 = vpop.trf.xlu0
      %v1678 = vpop.trf.xlu0
      %v1679 = vpop.trf.xlu0
      %v1680 = vpop.trf.xlu0
      %v1681 = vpop.trf.xlu0
      %v1682 = vpop.trf.xlu0
      %v1683 = vpop.trf.xlu0
      %v1685 = vsel %vm972, %v1668, 0
      %1687 = vmatprep.subr.mxu0 0.0
      %1688 = vmatpush1.msra.mxu0 %v1081
      %1689 = vmatprep.subr.mxu0 0.0
      %1690 = vmatpush1.msra.mxu0 %v1083
      %1691 = vmatprep.subr.mxu0 0.0
      %1692 = vmatpush1.msra.mxu0 0.0
      %1693 = vmatprep.subr.mxu0 0.0
      %1694 = vmatpush1.msra.mxu0 0.0
      %1695 = vmatprep.subr.mxu0 0.0
      %1696 = vmatpush1.msra.mxu0 0.0
      %1697 = vmatprep.subr.mxu0 0.0
      %1698 = vmatpush1.msra.mxu0 0.0
      %1699 = vmatprep.subr.mxu0 0.0
      %1700 = vmatpush1.msra.mxu0 0.0
      %1701 = vmatprep.subr.mxu0 0.0
      %1702 = vmatpush1.msra.mxu0 0.0
      %1703 = vmatprep.subr.mxu0 0.0
      %1704 = vmatpush1.msra.mxu0 0.0
      %1705 = vmatprep.subr.mxu0 0.0
      %1706 = vmatpush1.msra.mxu0 0.0
      %1707 = vmatprep.subr.mxu0 0.0
      %1708 = vmatpush1.msra.mxu0 0.0
      %1709 = vmatprep.subr.mxu0 0.0
      %1710 = vmatpush1.msra.mxu0 0.0
      %1711 = vmatprep.subr.mxu0 0.0
      %1712 = vmatpush1.msra.mxu0 0.0
      %1713 = vmatprep.subr.mxu0 0.0
      %1714 = vmatpush1.msra.mxu0 0.0
      %1715 = vmatprep.subr.mxu0 0.0
      %1716 = vmatpush1.msra.mxu0 0.0
      %1717 = vmatprep.subr.mxu0 0.0
      %1718 = vmatpush1.msra.mxu0 0.0
      %1719 = vmatprep.subr.mxu0 0.0
      %1720 = vmatpush1.msra.mxu0 0.0
      %1721 = vmatprep.subr.mxu0 0.0
      %1722 = vmatpush1.msra.mxu0 0.0
      %1723 = vmatprep.subr.mxu0 0.0
      %1724 = vmatpush1.msra.mxu0 0.0
      %1725 = vmatprep.subr.mxu0 0.0
      %1726 = vmatpush1.msra.mxu0 0.0
      %1727 = vmatprep.subr.mxu0 0.0
      %1728 = vmatpush1.msra.mxu0 0.0
      %1729 = vmatprep.subr.mxu0 0.0
      %1730 = vmatpush1.msra.mxu0 0.0
      %1731 = vmatprep.subr.mxu0 0.0
      %1732 = vmatpush1.msra.mxu0 0.0
      %1733 = vmatprep.subr.mxu0 0.0
      %1734 = vmatpush1.msra.mxu0 0.0
      %1735 = vmatprep.subr.mxu0 0.0
      %1736 = vmatpush1.msra.mxu0 0.0
      %1737 = vmatprep.subr.mxu0 0.0
      %1738 = vmatpush1.msra.mxu0 0.0
      %1739 = vmatprep.subr.mxu0 0.0
      %1740 = vmatpush1.msra.mxu0 0.0
      %1741 = vmatprep.subr.mxu0 0.0
      %1742 = vmatpush1.msra.mxu0 0.0
      %1743 = vmatprep.subr.mxu0 0.0
      %1744 = vmatpush1.msra.mxu0 0.0
      %1745 = vmatprep.subr.mxu0 0.0
      %1746 = vmatpush1.msra.mxu0 0.0
      %1747 = vmatprep.subr.mxu0 0.0
      %1748 = vmatpush1.msra.mxu0 0.0
      %1749 = vmatprep.subr.mxu0 0.0
      %1750 = vmatpush1.msra.mxu0 0.0
      %1751 = vmatprep.mubr.f32.mxu0 0.0
      %1752 = vmatmul.mubr.f32.gmra.mrb[0].mxu0 %v1685
      %v1753 = vpop.f32.mrb[0].mxu0
      %v1754 = vadd.f32 0.0, %v1753
      %v1755 = vpop.f32.mrb[0].mxu0
      %1756 = vdwg.mxu0
      %v1757 = vmax.f32 %v1072, %v1075
      %v1758 = vrot.slane %v1757, 4
      %v1759 = vmax.f32 %v1757, %v1758
      %v1760 = vrot.slane %v1759, 2
      %v1761 = vmax.f32 %v1759, %v1760
      %v1762 = vrot.slane %v1761, 1
      %v1763 = vmax.f32 %v1761, %v1762
      %v1764 = vld [vmem:[#allocation2 + $0x2] sm:$0x1]
      %v1765 = vld [vmem:[#allocation2 + $0x3] sm:$0x1]
      %v1766 = vmax.f32 %v1764, %v1763
      %v1767 = vsub.f32 %v1764, %v1766
      %v1768 = vmul.f32 %v1767, 1.442695
      %v1769 = vpow.pop %v1768
      %v1770 = vmul.f32 %v1765, %v1769
      %v1771 = vsub.f32 %v1645, %v1766
      %v1772 = vmul.f32 %v1771, 1.442695
      %v1773 = vpow.pop %v1772
      %v1774 = vmul.f32 %v1754, %v1773
      %v1775 = vadd.f32 %v1770, %v1774
      %1776 = vst.msk [vmem:[#allocation2 + $0x2] sm:$0x1] %vm1634, %v1766
      %1777 = vst.msk [vmem:[#allocation2 + $0x3] sm:$0x1] %vm1634, %v1775
      %v1778 = vld [vmem:[#allocation2 + $0x4] sm:$0x1]
      %v1779 = vsel %vm972, %v930, 0.0
      %v1780 = vsel %vm972, %v931, 0.0
      %v1781 = vadd.f32 %v1779, %v1780
      %v1782 = vrot.slane %v1781, 4
      %v1783 = vadd.f32 %v1781, %v1782
      %v1784 = vrot.slane %v1783, 2
      %v1785 = vadd.f32 %v1783, %v1784
      %v1786 = vrot.slane %v1785, 1
      %v1787 = vadd.f32 %v1785, %v1786
      %v1788 = vadd.f32 %v1778, %v1787
      %1789 = vst.msk [vmem:[#allocation2 + $0x4] sm:$0x1] %vm1634, %v1788
      %v1790 = vld [vmem:[#allocation2 + $0x5] sm:$0x1]
      %v1791 = vsel %vm972, %v936, 0.0
      %v1792 = vsel %vm972, %v937, 0.0
      %v1793 = vadd.f32 %v1791, %v1792
      %v1794 = vrot.slane %v1793, 4
      %v1795 = vadd.f32 %v1793, %v1794
      %v1796 = vrot.slane %v1795, 2
      %v1797 = vadd.f32 %v1795, %v1796
      %v1798 = vrot.slane %v1797, 1
      %v1799 = vadd.f32 %v1797, %v1798
      %v1800 = vadd.f32 %v1790, %v1799
      %1801 = vst.msk [vmem:[#allocation2 + $0x5] sm:$0x1] %vm1634, %v1800
      %p1802 = scmp.eq.s32.totalorder %s20, 1
      // Predicated region
      $region41: #{metric_loss_forward.2} parent=35 // pred_check
        %p1803 = pneg %p1802
      $region42: #{metric_loss_forward.2} parent=35 // pred_check_branch
        %1805 = sbr.rel (%p1803) target = $region44
      $region43: #{metric_loss_forward.2} parent=35 // pred_region
        %v1806 = vld [vmem:[#allocation2] sm:$0x1]
        %v1807 = vld [vmem:[#allocation2 + $0x1] sm:$0x1]
        %v1808 = vlog2.pop %v1807
        %v1809 = vmul.f32 %v1808, 0.6931472
        %v1810 = vadd.f32 %v1806, %v1809
        %v1811 = vld [vmem:[#allocation2 + $0x2] sm:$0x1]
        %v1812 = vld [vmem:[#allocation2 + $0x3] sm:$0x1]
        %v1813 = vlog2.pop %v1812
        %v1814 = vmul.f32 %v1813, 0.6931472
        %v1815 = vadd.f32 %v1811, %v1814
        %v1816 = vld [vmem:[#allocation2 + $0x4] sm:$0x1]
        %vm1817 = vcmp.gt.f32.partialorder %v1816, 0.0
        %v1818 = vld [vmem:[#allocation2 + $0x5] sm:$0x1]
        %vm1819 = vcmp.gt.f32.partialorder %v1818, 0.0
        %vm1820 = vmand %vm1817, %vm1819
        %v1821 = vsel %vm1820, 1, 0
        %v1822 = vcvt.s32.f32 %v1821
        %v1823 = vadd.f32 %v1810, %v1815
        %vm1824 = vcmp.gt.f32.partialorder %v1823, 20.0
        %v1825 = vmin.f32 %v1823, 20.0
        %v1826 = vmul.f32 %v1825, 1.442695
        %v1827 = vpow.pop %v1826
        %v1828 = vadd.f32 %v1827, 1.0
        %v1829 = vlog2.pop %v1828
        %v1830 = vmul.f32 %v1829, 0.6931472
        %v1831 = vmul.f32 -0.5, %v1827
        %v1832 = vadd.f32 %v1831, 1.0
        %v1833 = vmul.f32 %v1832, %v1827
        %v1834 = vand.u32 2147483647, %v1827
        %vm1835 = vcmp.lt.f32.partialorder %v1834, 0.0004427343
        %v1836 = vsel %vm1835, %v1833, %v1830
        %v1837 = vsel %vm1824, %v1823, %v1836
        %v1838 = vmul.f32 %v1837, %v1373
        %s1839 = sld [smem:[#allocation3]]
        %s1840 = sld [smem:[#allocation3 + $0x1]]
        %v1841 = vmul.f32 %v1838, %v1822
        %v1842 = vsel %vm1634, %v1841, 0.0
        %1843 = vadd.xlane.f32.xlu0 %v1842
        %v1844 = vpop.xlane.xlu0 %1843
        %v1845 = vrot.slane %v1844, 4
        %v1846 = vadd.f32 %v1844, %v1845
        %v1847 = vrot.slane %v1846, 2
        %v1848 = vadd.f32 %v1846, %v1847
        %v1849 = vrot.slane %v1848, 1
        %v1850 = vadd.f32 %v1848, %v1849
        %s1851 = vtos %v1850
        %v1852 = vsel %vm1634, %v1822, 0.0
        %1853 = vadd.xlane.f32.xlu0 %v1852
        %v1854 = vpop.xlane.xlu0 %1853
        %v1855 = vrot.slane %v1854, 4
        %v1856 = vadd.f32 %v1854, %v1855
        %v1857 = vrot.slane %v1856, 2
        %v1858 = vadd.f32 %v1856, %v1857
        %v1859 = vrot.slane %v1858, 1
        %v1860 = vadd.f32 %v1858, %v1859
        %s1861 = vtos %v1860
        %s1862 = sld [smem:[#allocation3 + $0x2]]
        %s1863 = sld [smem:[#allocation3 + $0x3]]
        %vm1864 = vcmp.eq.s32.totalorder %v879, 0
        %v1865 = vstv %s1839
        %v1866 = vsel %vm1864, %v1865, 0.0
        %vm1867 = vcmp.eq.s32.totalorder %v879, 1
        %v1868 = vstv %s1840
        %v1869 = vsel %vm1867, %v1868, %v1866
        %vm1870 = vcmp.eq.s32.totalorder %v879, 2
        %v1871 = vstv %s1851
        %v1872 = vsel %vm1870, %v1871, %v1869
        %vm1873 = vcmp.eq.s32.totalorder %v879, 3
        %v1874 = vstv %s1861
        %v1875 = vsel %vm1873, %v1874, %v1872
        %vm1876 = vcmp.eq.s32.totalorder %v879, 4
        %v1877 = vstv %s1862
        %v1878 = vsel %vm1876, %v1877, %v1875
        %vm1879 = vcmp.eq.s32.totalorder %v879, 5
        %v1880 = vstv %s1863
        %v1881 = vsel %vm1879, %v1880, %v1878
        %1882 = vst [vmem:[%s315] sm:$0xff] %v1881
      $region44: #{metric_loss_forward.2} parent=35 // pred_fallthru
        _
      %p1883 = scmp.lt.s32.totalorder %s19, 1
      %s1884 = scalar_select %p1883, %s19, 1
      %s1885 = smul.addr %s1884, 8
      %s1886 = scalar_lea.vmem %s4, %s1885
      // Predicated region
      $region45: #{metric_loss_forward.2} parent=35 // pred_check
        %p1887 = pneg %p155
      $region46: #{metric_loss_forward.2} parent=35 // pred_check_branch
        %1889 = sbr.rel (%p1887) target = $region48
      $region47: #{metric_loss_forward.2} parent=35 // pred_region
        _
      $region48: #{metric_loss_forward.2} parent=35 // pred_fallthru
        _
    $region36: #{metric_loss_forward.2} parent=5 // pred_fallthru
      _
    %p1890 = scmp.le.s32.totalorder 2, %s10
    // Predicated region
    $region49: #{metric_loss_forward.2} parent=5 // pred_check
      %p1891 = pneg %p1890
    $region50: #{metric_loss_forward.2} parent=5 // pred_check_branch
      %1893 = sbr.rel (%p1891) target = $region52
    $region51: #{metric_loss_forward.2} parent=5 // pred_region
      %s1894 = ssub.s32 %s10, 2
      // Predicated region
      $region53: #{metric_loss_forward.2} parent=51 // pred_check
        %p1895 = pneg %p161
      $region54: #{metric_loss_forward.2} parent=51 // pred_check_branch
        %1897 = sbr.rel (%p1895) target = $region56
      $region55: #{metric_loss_forward.2} parent=51 // pred_region
        %p1898 = scmp.lt.s32.totalorder %s21, 1
        %s1899 = scalar_select %p1898, %s21, 1
        %s1900 = smul.addr %s1899, 8
        %s1901 = scalar_lea.vmem %s4, %s1900
      $region56: #{metric_loss_forward.2} parent=51 // pred_fallthru
        _
    $region52: #{metric_loss_forward.2} parent=5 // pred_fallthru
      _
  $region6: #{metric_loss_forward.2} parent=0 // loop_footer
    %s14 = sadd.s32 1, %s10
  $region7: #{metric_loss_forward.2} parent=0 // loop_footer_branch
    %9 = sbr.rel target = $region3
  $region8: #{metric_loss_forward.2} parent=0 // loop_exit
    _

</llo_original>
